<compile_context>
chip_gen: v6e
topology: v6e:2x2x1
jax: 0.10.0
libtpu: 0.0.40
codegen_flags: <defaults>
</compile_context>

<pallas_src>
import functools
import math

import jax
import jax.numpy as jnp
from jax.experimental import pallas as pl
from jax.experimental.pallas import tpu as pltpu

_EPS = 1e-5          # PyTorch nn.LayerNorm default
_NEG_INF = -1e9


def _layer_norm(x, gamma, beta, eps):
    # x: (rows, D), gamma/beta: (1, D)
    mean = jnp.mean(x, axis=-1, keepdims=True)
    var = jnp.mean(jnp.square(x - mean), axis=-1, keepdims=True)
    inv = jax.lax.rsqrt(var + eps)
    return (x - mean) * inv * gamma + beta


def encoder_layer_kernel(x_ref, mask_ref,
                         wqkv_ref, bqkv_ref, wo_ref, bo_ref,
                         ln1_g_ref, ln1_b_ref,
                         w1_ref, b1_ref, w2_ref, b2_ref,
                         ln2_g_ref, ln2_b_ref,
                         out_ref,
                         qkv_ref, ctx_ref,
                         *, n_head, eps):
    f32 = jnp.float32
    bf16 = jnp.bfloat16

    x3 = x_ref[...]                                    # (Bt, S, D) f32
    Bt, S, D = x3.shape
    dk = D // n_head

    # ---- fused QKV projection: ONE (Bt*S, D) @ (D, 3D) MXU matmul.
    # 1/sqrt(dk) is pre-folded into the Q columns of wqkv/bqkv on the host.
    x2 = x3.reshape(Bt * S, D)
    qkv = jnp.dot(x2.astype(bf16), wqkv_ref[...],
                  preferred_element_type=f32) + bqkv_ref[...]
    qkv_ref[...] = qkv.reshape(Bt, S, 3 * D).astype(bf16)

    # Additive key-mask bias, computed once (not per head).
    bias = jnp.where(mask_ref[...] > 0.0, 0.0, _NEG_INF).astype(f32)  # (Bt,1,S)

    # ---- multi-head self-attention, batched over the batch tile per head.
    # Per-head Q/K/V are sliced from the bf16 VMEM scratch (bounded live
    # ranges); each head writes its context into its lane slice of ctx_ref so
    # the output projection is a single full-depth (K = D) matmul afterwards.
    # TODO(synk): for production S, tile over KV blocks with an online-softmax
    # (flash-style) inner loop instead of materializing (Bt, S, S) scores.
    for h in range(n_head):                            # static unroll, n_head small
        lo = h * dk
        qh = qkv_ref[:, :, lo:lo + dk]                 # (Bt, S, dk) bf16
        kh = qkv_ref[:, :, D + lo:D + lo + dk]
        vh = qkv_ref[:, :, 2 * D + lo:2 * D + lo + dk]
        s = jnp.einsum("bqd,bkd->bqk", qh, kh,
                       preferred_element_type=f32)     # (Bt, S, S), pre-scaled
        s = s + bias
        s = s - jnp.max(s, axis=-1, keepdims=True)
        p = jnp.exp(s)
        p = p * pl.reciprocal(jnp.sum(p, axis=-1, keepdims=True), approx=True)
        ctx = jnp.einsum("bqk,bkd->bqd", p.astype(bf16), vh,
                         preferred_element_type=f32)   # (Bt, S, dk)
        ctx_ref[:, :, lo:lo + dk] = ctx.astype(bf16)

    # ---- single output projection, full contraction depth K = D.
    ctx2 = ctx_ref[...].reshape(Bt * S, D)
    attn = jnp.dot(ctx2, wo_ref[...], preferred_element_type=f32) + bo_ref[...]
    # dropout -> identity (inference)
    r1 = _layer_norm(attn + x2, ln1_g_ref[...], ln1_b_ref[...], eps)

    # ---- position-wise feed-forward (bf16 operands, f32 accumulation).
    h1 = jnp.dot(r1.astype(bf16), w1_ref[...],
                 preferred_element_type=f32) + b1_ref[...]
    h1 = jnp.maximum(h1, 0.0)
    f = jnp.dot(h1.astype(bf16), w2_ref[...],
                preferred_element_type=f32) + b2_ref[...]
    # dropout -> identity (inference)
    r2 = _layer_norm(f + r1, ln2_g_ref[...], ln2_b_ref[...], eps)

    out_ref[...] = r2.reshape(Bt, S, D).astype(out_ref.dtype)


# --------------------------- host-side helpers ---------------------------
def _physical_vmem_bytes():
    try:
        return int(pltpu.get_tpu_info().vmem_capacity_bytes)
    except Exception:
        return 64 << 20       # smallest current generation (v7x per-TC VMEM)


def _estimate_vmem_bytes(bt, S, D, d_inner, n_head):
    """Rough per-grid-step VMEM footprint: resident weights (single-buffered),
    double-buffered activation/output/mask blocks, bf16 scratches, and the
    largest live f32 intermediates (QKV, per-head scores/probs, FFN hidden)."""
    del n_head
    f32, bf16 = 4, 2
    rows = bt * S
    w = (3 * D * D + D * D + 2 * D * d_inner) * bf16          # wqkv, wo, w1, w2
    w += (9 * D + d_inner) * f32 + (1 << 16)                  # biases/LN + slack
    io = 2 * (2 * rows * D * f32) + 2 * bt * 8 * max(S, 128) * f32
    sc = rows * 3 * D * bf16 + rows * D * bf16                # qkv + ctx scratch
    it = rows * 3 * D * f32 + 2 * bt * S * S * f32            # qkv f32, scores
    it += 3 * rows * D * f32 + rows * d_inner * f32           # attn/r1/f, h1
    return w + io + sc + it


def _pick_block_b(B, S, D, d_inner, n_head, budget_bytes):
    """Largest divisor of B fitting the VMEM budget; kept <= B//2 (when B >= 2)
    so the batch grid has >= 2 steps and v7x's second TensorCore gets work
    (near-free on single-TC v5e/v6e when the grid is only a couple of steps)."""
    max_bt = max(1, B // 2) if B >= 2 else B
    best = 1
    for cand in range(1, max_bt + 1):
        if B % cand:
            continue
        if _estimate_vmem_bytes(cand, S, D, d_inner, n_head) <= budget_bytes:
            best = cand
    return best


def _const_spec(shape, buffered):
    idx = lambda b, n=len(shape): (0,) * n
    if buffered:
        try:
            # Weights never change across grid steps: single VMEM buffer.
            return pl.BlockSpec(shape, idx, pipeline_mode=pl.Buffered(1))
        except TypeError:
            pass
    return pl.BlockSpec(shape, idx)


def _make_encoder_call(B, S, D, d_inner, n_head, block_b, eps,
                       vmem_limit, weights_buffered):
    data_spec = pl.BlockSpec((block_b, S, D), lambda b: (b, 0, 0))
    mask_spec = pl.BlockSpec((block_b, 1, S), lambda b: (b, 0, 0))
    in_specs = [
        data_spec, mask_spec,
        _const_spec((D, 3 * D), weights_buffered),     # wqkv (scale folded in)
        _const_spec((1, 3 * D), weights_buffered),     # bqkv
        _const_spec((D, D), weights_buffered),         # wo
        _const_spec((1, D), weights_buffered),         # bo
        _const_spec((1, D), weights_buffered),         # ln1 gamma
        _const_spec((1, D), weights_buffered),         # ln1 beta
        _const_spec((D, d_inner), weights_buffered),   # w1
        _const_spec((1, d_inner), weights_buffered),   # b1
        _const_spec((d_inner, D), weights_buffered),   # w2
        _const_spec((1, D), weights_buffered),         # b2
        _const_spec((1, D), weights_buffered),         # ln2 gamma
        _const_spec((1, D), weights_buffered),         # ln2 beta
    ]
    kernel = functools.partial(encoder_layer_kernel, n_head=n_head, eps=eps)
    return pl.pallas_call(
        kernel,
        out_shape=jax.ShapeDtypeStruct((B, S, D), jnp.float32),
        grid_spec=pltpu.PrefetchScalarGridSpec(
            num_scalar_prefetch=0,
            grid=(B // block_b,),
            in_specs=in_specs,
            out_specs=pl.BlockSpec((block_b, S, D), lambda b: (b, 0, 0)),
            scratch_shapes=[
                pltpu.VMEM((block_b, S, 3 * D), jnp.bfloat16),   # fused QKV
                pltpu.VMEM((block_b, S, D), jnp.bfloat16),       # head contexts
            ]),
        compiler_params=pltpu.CompilerParams(
            dimension_semantics=("parallel",),
            vmem_limit_bytes=vmem_limit),
    )


def encoder_layer(x, mask, p, n_head, *, eps=_EPS, block_b=None):
    B, S, D = x.shape
    d_inner = p["w1"].shape[1]
    dk = D // n_head
    scale = 1.0 / math.sqrt(dk)

    phys = _physical_vmem_bytes()
    if block_b is None:
        block_b = _pick_block_b(B, S, D, d_inner, n_head, phys // 3)
    assert B % block_b == 0
    est = _estimate_vmem_bytes(block_b, S, D, d_inner, n_head)
    vmem_limit = int(min(phys * 9 // 10, max(2 * est, 32 << 20)))

    bf16 = jnp.bfloat16
    f32 = jnp.float32
    # Fused QKV weights/biases; 1/sqrt(dk) folded into the Q columns so the
    # score matmul needs no elementwise scale.
    # NOTE: weights are applied as x @ W; a real PyTorch nn.Linear checkpoint
    # stores (out, in) and must be transposed on load before being fed here.
    wqkv = jnp.concatenate([p["wq"] * scale, p["wk"], p["wv"]],
                           axis=1).astype(bf16)                  # (D, 3D)
    bqkv = jnp.concatenate([p["bq"] * scale, p["bk"], p["bv"]],
                           axis=1).astype(f32)                   # (1, 3D)
    wo = p["wo"].astype(bf16)
    w1 = p["w1"].astype(bf16)
    w2 = p["w2"].astype(bf16)
    # TODO(synk): on v7x, W_O/W1/W2 could be stored fp8 (bf16 x fp8 MXU) to
    # halve weight footprint again; gated per chip, not done here.

    args = (x, mask, wqkv, bqkv, wo, p["bo"], p["ln1_g"], p["ln1_b"],
            w1, p["b1"], w2, p["b2"], p["ln2_g"], p["ln2_b"])

    try:
        call = _make_encoder_call(B, S, D, d_inner, n_head, block_b, eps,
                                  vmem_limit, weights_buffered=True)
        return jax.block_until_ready(call(*args))
    except Exception:
        # Fallback if single-buffered (pl.Buffered(1)) weight specs are not
        # supported by this JAX/Mosaic version: default double buffering.
        call = _make_encoder_call(B, S, D, d_inner, n_head, block_b, eps,
                                  vmem_limit, weights_buffered=False)
        return call(*args)


def transformer_encoder(enc_input, enc_mask, layer_params, n_head):
    # TODO(synk): nn.Dropout (top-level and per-layer) is stochastic in train
    # mode; implemented as identity (eval/inference semantics).
    # TODO(synk): for deep stacks / small per-layer compute, fuse layers with
    # cross-pallas_call weight prefetch (P10) and store inter-layer
    # activations in bf16 to cut HBM traffic; kept f32 here for parity.
    out = enc_input
    for p in layer_params:
        out = encoder_layer(out, enc_mask, p, n_head)
    return out


# ----------------------- pure-JAX reference (f32) -----------------------
def _layer_norm_ref(x, g, b, eps=_EPS):
    mean = jnp.mean(x, axis=-1, keepdims=True)
    var = jnp.mean(jnp.square(x - mean), axis=-1, keepdims=True)
    return (x - mean) * jax.lax.rsqrt(var + eps) * g + b


def encoder_layer_ref(x, mask, p, n_head, eps=_EPS):
    B, S, D = x.shape
    dk = D // n_head
    q = x @ p["wq"] + p["bq"]
    k = x @ p["wk"] + p["bk"]
    v = x @ p["wv"] + p["bv"]
    q = q.reshape(B, S, n_head, dk).transpose(0, 2, 1, 3)
    k = k.reshape(B, S, n_head, dk).transpose(0, 2, 1, 3)
    v = v.reshape(B, S, n_head, dk).transpose(0, 2, 1, 3)
    s = jnp.einsum("bhqd,bhkd->bhqk", q, k) / math.sqrt(dk)
    s = jnp.where(mask[:, None, :, :] > 0, s, _NEG_INF)
    pa = jax.nn.softmax(s, axis=-1)
    ctx = jnp.einsum("bhqk,bhkd->bhqd", pa, v)
    ctx = ctx.transpose(0, 2, 1, 3).reshape(B, S, D)
    attn = ctx @ p["wo"] + p["bo"]
    r1 = _layer_norm_ref(attn + x, p["ln1_g"], p["ln1_b"], eps)
    h1 = jax.nn.relu(r1 @ p["w1"] + p["b1"])
    f = h1 @ p["w2"] + p["b2"]
    return _layer_norm_ref(f + r1, p["ln2_g"], p["ln2_b"], eps)


def transformer_encoder_ref(x, mask, layer_params, n_head):
    out = x
    for p in layer_params:
        out = encoder_layer_ref(out, mask, p, n_head)
    return out


def init_layer_params(key, d_model, d_inner):
    ks = jax.random.split(key, 6)
    std = 0.02
    f32 = jnp.float32
    return {
        "wq": jax.random.normal(ks[0], (d_model, d_model), f32) * std,
        "bq": jnp.zeros((1, d_model), f32),
        "wk": jax.random.normal(ks[1], (d_model, d_model), f32) * std,
        "bk": jnp.zeros((1, d_model), f32),
        "wv": jax.random.normal(ks[2], (d_model, d_model), f32) * std,
        "bv": jnp.zeros((1, d_model), f32),
        "wo": jax.random.normal(ks[3], (d_model, d_model), f32) * std,
        "bo": jnp.zeros((1, d_model), f32),
        "ln1_g": jnp.ones((1, d_model), f32),
        "ln1_b": jnp.zeros((1, d_model), f32),
        "w1": jax.random.normal(ks[4], (d_model, d_inner), f32) * std,
        "b1": jnp.zeros((1, d_inner), f32),
        "w2": jax.random.normal(ks[5], (d_inner, d_model), f32) * std,
        "b2": jnp.zeros((1, d_model), f32),
        "ln2_g": jnp.ones((1, d_model), f32),
        "ln2_b": jnp.zeros((1, d_model), f32),
    }


if __name__ == "__main__":
    # Small shapes consistent with the module's forward:
    # enc_input (B, S, d_model), enc_mask (B, 1, S)
    n_layer, n_head, d_model, d_inner = 2, 4, 32, 64
    B, S = 2, 8

    key = jax.random.PRNGKey(0)
    k_in, k_params = jax.random.split(key)

    enc_input = jax.random.normal(k_in, (B, S, d_model), jnp.float32)
    enc_mask = jnp.ones((B, 1, S), jnp.float32)
    enc_mask = enc_mask.at[1, 0, -2:].set(0.0)   # mask last 2 keys of batch 1

    layer_keys = jax.random.split(k_params, n_layer)
    layer_params = [init_layer_params(k, d_model, d_inner) for k in layer_keys]

    out = transformer_encoder(enc_input, enc_mask, layer_params, n_head)
    out = jax.block_until_ready(out)
    assert out.shape == (B, S, d_model)

    # Correctness check vs. pure-JAX f32 reference (kernel matmuls are bf16).
    ref = transformer_encoder_ref(enc_input, enc_mask, layer_params, n_head)
    err = float(jnp.max(jnp.abs(out - ref)))
    assert err < 5e-2, f"mismatch vs reference: max abs err {err}"

    print("KERNEL_OK")
</pallas_src>

<mosaic_0001>
module attributes {stable_mosaic.version = 11 : i64} {
  func.func @encoder_layer_kernel(%arg0: i32, %arg1: memref<1x8x32xf32, #tpu.memory_space<vmem>>, %arg2: memref<1x1x8xf32, #tpu.memory_space<vmem>>, %arg3: memref<32x96xbf16, #tpu.memory_space<vmem>>, %arg4: memref<1x96xf32, #tpu.memory_space<vmem>>, %arg5: memref<32x32xbf16, #tpu.memory_space<vmem>>, %arg6: memref<1x32xf32, #tpu.memory_space<vmem>>, %arg7: memref<1x32xf32, #tpu.memory_space<vmem>>, %arg8: memref<1x32xf32, #tpu.memory_space<vmem>>, %arg9: memref<32x64xbf16, #tpu.memory_space<vmem>>, %arg10: memref<1x64xf32, #tpu.memory_space<vmem>>, %arg11: memref<64x32xbf16, #tpu.memory_space<vmem>>, %arg12: memref<1x32xf32, #tpu.memory_space<vmem>>, %arg13: memref<1x32xf32, #tpu.memory_space<vmem>>, %arg14: memref<1x32xf32, #tpu.memory_space<vmem>>, %arg15: memref<1x8x32xf32, #tpu.memory_space<vmem>>, %arg16: memref<1x8x96xbf16, #tpu.memory_space<vmem>>, %arg17: memref<1x8x32xbf16, #tpu.memory_space<vmem>>) attributes {dimension_semantics = [#tpu.dimension_semantics<parallel>], iteration_bounds = array<i64: 2>, scalar_prefetch = 0 : i64, scratch_operands = 2 : i64, tpu.core_type = #tpu.core_type<tc>, window_params = [{transform_indices = @transform_0, window_bounds = array<i64: 1, 8, 32>}, {transform_indices = @transform_1, window_bounds = array<i64: 1, 1, 8>}, {pipeline_mode = #tpu.pipeline_mode<synchronous>, transform_indices = @transform_2, window_bounds = array<i64: 32, 96>}, {pipeline_mode = #tpu.pipeline_mode<synchronous>, transform_indices = @transform_3, window_bounds = array<i64: 1, 96>}, {pipeline_mode = #tpu.pipeline_mode<synchronous>, transform_indices = @transform_4, window_bounds = array<i64: 32, 32>}, {pipeline_mode = #tpu.pipeline_mode<synchronous>, transform_indices = @transform_5, window_bounds = array<i64: 1, 32>}, {pipeline_mode = #tpu.pipeline_mode<synchronous>, transform_indices = @transform_6, window_bounds = array<i64: 1, 32>}, {pipeline_mode = #tpu.pipeline_mode<synchronous>, transform_indices = @transform_7, window_bounds = array<i64: 1, 32>}, {pipeline_mode = #tpu.pipeline_mode<synchronous>, transform_indices = @transform_8, window_bounds = array<i64: 32, 64>}, {pipeline_mode = #tpu.pipeline_mode<synchronous>, transform_indices = @transform_9, window_bounds = array<i64: 1, 64>}, {pipeline_mode = #tpu.pipeline_mode<synchronous>, transform_indices = @transform_10, window_bounds = array<i64: 64, 32>}, {pipeline_mode = #tpu.pipeline_mode<synchronous>, transform_indices = @transform_11, window_bounds = array<i64: 1, 32>}, {pipeline_mode = #tpu.pipeline_mode<synchronous>, transform_indices = @transform_12, window_bounds = array<i64: 1, 32>}, {pipeline_mode = #tpu.pipeline_mode<synchronous>, transform_indices = @transform_13, window_bounds = array<i64: 1, 32>}, {transform_indices = @transform_14, window_bounds = array<i64: 1, 8, 32>}]} {
    %c0 = arith.constant 0 : index
    %c0_0 = arith.constant 0 : index
    %c0_1 = arith.constant 0 : index
    %0 = vector.load %arg1[%c0, %c0_0, %c0_1] : memref<1x8x32xf32, #tpu.memory_space<vmem>>, vector<1x8x32xf32>
    %1 = vector.shape_cast %0 : vector<1x8x32xf32> to vector<8x32xf32>
    %2 = arith.truncf %1 : vector<8x32xf32> to vector<8x32xbf16>
    %c0_2 = arith.constant 0 : index
    %c0_3 = arith.constant 0 : index
    %3 = vector.load %arg3[%c0_2, %c0_3] : memref<32x96xbf16, #tpu.memory_space<vmem>>, vector<32x96xbf16>
    %cst = arith.constant dense<0.000000e+00> : vector<8x96xf32>
    %4 = tpu.matmul %2, %3, %cst {dimension_numbers = #tpu.dot_dimension_numbers<[1], [0], [0], [1], [0, 0, 1, 1], [], []>} : vector<8x32xbf16>, vector<32x96xbf16>, vector<8x96xf32> -> vector<8x96xf32>
    %c0_4 = arith.constant 0 : index
    %c0_5 = arith.constant 0 : index
    %5 = vector.load %arg4[%c0_4, %c0_5] : memref<1x96xf32, #tpu.memory_space<vmem>>, vector<1x96xf32>
    %6 = vector.broadcast %5 : vector<1x96xf32> to vector<8x96xf32>
    %7 = arith.addf %4, %6 : vector<8x96xf32>
    %8 = vector.shape_cast %7 : vector<8x96xf32> to vector<1x8x96xf32>
    %9 = arith.truncf %8 : vector<1x8x96xf32> to vector<1x8x96xbf16>
    %c0_6 = arith.constant 0 : index
    %c0_7 = arith.constant 0 : index
    %c0_8 = arith.constant 0 : index
    %10 = vector.load %arg16[%c0_6, %c0_7, %c0_8] : memref<1x8x96xbf16, #tpu.memory_space<vmem>>, vector<1x8x96xbf16>
    tpu.vector_store %arg16[%c0_6, %c0_7, %c0_8], %9 {strides = array<i32>} : memref<1x8x96xbf16, #tpu.memory_space<vmem>>, vector<1x8x96xbf16>,
    %c0_9 = arith.constant 0 : index
    %c0_10 = arith.constant 0 : index
    %c0_11 = arith.constant 0 : index
    %11 = vector.load %arg2[%c0_9, %c0_10, %c0_11] : memref<1x1x8xf32, #tpu.memory_space<vmem>>, vector<1x1x8xf32>
    %cst_12 = arith.constant 0.000000e+00 : f32
    %12 = vector.broadcast %cst_12 : f32 to vector<1x1x8xf32>
    %13 = arith.cmpf ogt, %11, %12 : vector<1x1x8xf32>
    %cst_13 = arith.constant 0.000000e+00 : f32
    %cst_14 = arith.constant -1.000000e+09 : f32
    %14 = vector.broadcast %cst_13 : f32 to vector<1x1x8xf32>
    %15 = vector.broadcast %cst_14 : f32 to vector<1x1x8xf32>
    %16 = arith.select %13, %14, %15 : vector<1x1x8xi1>, vector<1x1x8xf32>
    %c0_15 = arith.constant 0 : index
    %c0_16 = arith.constant 0 : index
    %c0_17 = arith.constant 0 : index
    %17 = vector.load %arg16[%c0_15, %c0_16, %c0_17] : memref<1x8x96xbf16, #tpu.memory_space<vmem>>, vector<1x8x8xbf16>
    %c0_18 = arith.constant 0 : index
    %c0_19 = arith.constant 0 : index
    %c32 = arith.constant 32 : index
    %18 = vector.load %arg16[%c0_18, %c0_19, %c32] : memref<1x8x96xbf16, #tpu.memory_space<vmem>>, vector<1x8x8xbf16>
    %c0_20 = arith.constant 0 : index
    %c0_21 = arith.constant 0 : index
    %c64 = arith.constant 64 : index
    %19 = vector.load %arg16[%c0_20, %c0_21, %c64] : memref<1x8x96xbf16, #tpu.memory_space<vmem>>, vector<1x8x8xbf16>
    "tpu.trace_start"() <{level = 10 : i32, message = "bqd,bkd->bqk"}> : () -> ()
    %cst_22 = arith.constant dense<0.000000e+00> : vector<1x8x8xf32>
    %20 = tpu.matmul %17, %18, %cst_22 {dimension_numbers = #tpu.dot_dimension_numbers<[2], [2], [1], [1], [0, 0, 0, 1, 1, 1], [0], [0]>} : vector<1x8x8xbf16>, vector<1x8x8xbf16>, vector<1x8x8xf32> -> vector<1x8x8xf32>
    "tpu.trace_stop"() : () -> ()
    %21 = vector.broadcast %16 : vector<1x1x8xf32> to vector<1x8x8xf32>
    %22 = arith.addf %20, %21 : vector<1x8x8xf32>
    %cst_23 = arith.constant dense<0xFF800000> : vector<1x8xf32>
    %23 = vector.multi_reduction <maximumf>, %22, %cst_23 [2] : vector<1x8x8xf32> to vector<1x8xf32>
    %24 = vector.shape_cast %23 : vector<1x8xf32> to vector<1x8x1xf32>
    %25 = vector.broadcast %24 : vector<1x8x1xf32> to vector<1x8x8xf32>
    %26 = arith.subf %22, %25 : vector<1x8x8xf32>
    %27 = math.exp %26 : vector<1x8x8xf32>
    %cst_24 = arith.constant dense<0.000000e+00> : vector<1x8xf32>
    %28 = vector.multi_reduction <add>, %27, %cst_24 [2] : vector<1x8x8xf32> to vector<1x8xf32>
    %29 = vector.shape_cast %28 : vector<1x8xf32> to vector<1x8x1xf32>
    %30 = tpu.reciprocal %29 {approx = true} : vector<1x8x1xf32> -> vector<1x8x1xf32>
    %31 = vector.broadcast %30 : vector<1x8x1xf32> to vector<1x8x8xf32>
    %32 = arith.mulf %27, %31 : vector<1x8x8xf32>
    %33 = arith.truncf %32 : vector<1x8x8xf32> to vector<1x8x8xbf16>
    "tpu.trace_start"() <{level = 10 : i32, message = "bqk,bkd->bqd"}> : () -> ()
    %cst_25 = arith.constant dense<0.000000e+00> : vector<1x8x8xf32>
    %34 = tpu.matmul %33, %19, %cst_25 {dimension_numbers = #tpu.dot_dimension_numbers<[2], [1], [1], [2], [0, 0, 0, 1, 1, 2], [0], [0]>} : vector<1x8x8xbf16>, vector<1x8x8xbf16>, vector<1x8x8xf32> -> vector<1x8x8xf32>
    "tpu.trace_stop"() : () -> ()
    %35 = arith.truncf %34 : vector<1x8x8xf32> to vector<1x8x8xbf16>
    %c0_26 = arith.constant 0 : index
    %c0_27 = arith.constant 0 : index
    %c0_28 = arith.constant 0 : index
    %36 = vector.load %arg17[%c0_26, %c0_27, %c0_28] : memref<1x8x32xbf16, #tpu.memory_space<vmem>>, vector<1x8x8xbf16>
    tpu.vector_store %arg17[%c0_26, %c0_27, %c0_28], %35 {strides = array<i32>} : memref<1x8x32xbf16, #tpu.memory_space<vmem>>, vector<1x8x8xbf16>,
    %c0_29 = arith.constant 0 : index
    %c0_30 = arith.constant 0 : index
    %c8 = arith.constant 8 : index
    %37 = vector.load %arg16[%c0_29, %c0_30, %c8] : memref<1x8x96xbf16, #tpu.memory_space<vmem>>, vector<1x8x8xbf16>
    %c0_31 = arith.constant 0 : index
    %c0_32 = arith.constant 0 : index
    %c40 = arith.constant 40 : index
    %38 = vector.load %arg16[%c0_31, %c0_32, %c40] : memref<1x8x96xbf16, #tpu.memory_space<vmem>>, vector<1x8x8xbf16>
    %c0_33 = arith.constant 0 : index
    %c0_34 = arith.constant 0 : index
    %c72 = arith.constant 72 : index
    %39 = vector.load %arg16[%c0_33, %c0_34, %c72] : memref<1x8x96xbf16, #tpu.memory_space<vmem>>, vector<1x8x8xbf16>
    "tpu.trace_start"() <{level = 10 : i32, message = "bqd,bkd->bqk"}> : () -> ()
    %cst_35 = arith.constant dense<0.000000e+00> : vector<1x8x8xf32>
    %40 = tpu.matmul %37, %38, %cst_35 {dimension_numbers = #tpu.dot_dimension_numbers<[2], [2], [1], [1], [0, 0, 0, 1, 1, 1], [0], [0]>} : vector<1x8x8xbf16>, vector<1x8x8xbf16>, vector<1x8x8xf32> -> vector<1x8x8xf32>
    "tpu.trace_stop"() : () -> ()
    %41 = vector.broadcast %16 : vector<1x1x8xf32> to vector<1x8x8xf32>
    %42 = arith.addf %40, %41 : vector<1x8x8xf32>
    %cst_36 = arith.constant dense<0xFF800000> : vector<1x8xf32>
    %43 = vector.multi_reduction <maximumf>, %42, %cst_36 [2] : vector<1x8x8xf32> to vector<1x8xf32>
    %44 = vector.shape_cast %43 : vector<1x8xf32> to vector<1x8x1xf32>
    %45 = vector.broadcast %44 : vector<1x8x1xf32> to vector<1x8x8xf32>
    %46 = arith.subf %42, %45 : vector<1x8x8xf32>
    %47 = math.exp %46 : vector<1x8x8xf32>
    %cst_37 = arith.constant dense<0.000000e+00> : vector<1x8xf32>
    %48 = vector.multi_reduction <add>, %47, %cst_37 [2] : vector<1x8x8xf32> to vector<1x8xf32>
    %49 = vector.shape_cast %48 : vector<1x8xf32> to vector<1x8x1xf32>
    %50 = tpu.reciprocal %49 {approx = true} : vector<1x8x1xf32> -> vector<1x8x1xf32>
    %51 = vector.broadcast %50 : vector<1x8x1xf32> to vector<1x8x8xf32>
    %52 = arith.mulf %47, %51 : vector<1x8x8xf32>
    %53 = arith.truncf %52 : vector<1x8x8xf32> to vector<1x8x8xbf16>
    "tpu.trace_start"() <{level = 10 : i32, message = "bqk,bkd->bqd"}> : () -> ()
    %cst_38 = arith.constant dense<0.000000e+00> : vector<1x8x8xf32>
    %54 = tpu.matmul %53, %39, %cst_38 {dimension_numbers = #tpu.dot_dimension_numbers<[2], [1], [1], [2], [0, 0, 0, 1, 1, 2], [0], [0]>} : vector<1x8x8xbf16>, vector<1x8x8xbf16>, vector<1x8x8xf32> -> vector<1x8x8xf32>
    "tpu.trace_stop"() : () -> ()
    %55 = arith.truncf %54 : vector<1x8x8xf32> to vector<1x8x8xbf16>
    %c0_39 = arith.constant 0 : index
    %c0_40 = arith.constant 0 : index
    %c8_41 = arith.constant 8 : index
    %56 = vector.load %arg17[%c0_39, %c0_40, %c8_41] : memref<1x8x32xbf16, #tpu.memory_space<vmem>>, vector<1x8x8xbf16>
    tpu.vector_store %arg17[%c0_39, %c0_40, %c8_41], %55 {strides = array<i32>} : memref<1x8x32xbf16, #tpu.memory_space<vmem>>, vector<1x8x8xbf16>,
    %c0_42 = arith.constant 0 : index
    %c0_43 = arith.constant 0 : index
    %c16 = arith.constant 16 : index
    %57 = vector.load %arg16[%c0_42, %c0_43, %c16] : memref<1x8x96xbf16, #tpu.memory_space<vmem>>, vector<1x8x8xbf16>
    %c0_44 = arith.constant 0 : index
    %c0_45 = arith.constant 0 : index
    %c48 = arith.constant 48 : index
    %58 = vector.load %arg16[%c0_44, %c0_45, %c48] : memref<1x8x96xbf16, #tpu.memory_space<vmem>>, vector<1x8x8xbf16>
    %c0_46 = arith.constant 0 : index
    %c0_47 = arith.constant 0 : index
    %c80 = arith.constant 80 : index
    %59 = vector.load %arg16[%c0_46, %c0_47, %c80] : memref<1x8x96xbf16, #tpu.memory_space<vmem>>, vector<1x8x8xbf16>
    "tpu.trace_start"() <{level = 10 : i32, message = "bqd,bkd->bqk"}> : () -> ()
    %cst_48 = arith.constant dense<0.000000e+00> : vector<1x8x8xf32>
    %60 = tpu.matmul %57, %58, %cst_48 {dimension_numbers = #tpu.dot_dimension_numbers<[2], [2], [1], [1], [0, 0, 0, 1, 1, 1], [0], [0]>} : vector<1x8x8xbf16>, vector<1x8x8xbf16>, vector<1x8x8xf32> -> vector<1x8x8xf32>
    "tpu.trace_stop"() : () -> ()
    %61 = vector.broadcast %16 : vector<1x1x8xf32> to vector<1x8x8xf32>
    %62 = arith.addf %60, %61 : vector<1x8x8xf32>
    %cst_49 = arith.constant dense<0xFF800000> : vector<1x8xf32>
    %63 = vector.multi_reduction <maximumf>, %62, %cst_49 [2] : vector<1x8x8xf32> to vector<1x8xf32>
    %64 = vector.shape_cast %63 : vector<1x8xf32> to vector<1x8x1xf32>
    %65 = vector.broadcast %64 : vector<1x8x1xf32> to vector<1x8x8xf32>
    %66 = arith.subf %62, %65 : vector<1x8x8xf32>
    %67 = math.exp %66 : vector<1x8x8xf32>
    %cst_50 = arith.constant dense<0.000000e+00> : vector<1x8xf32>
    %68 = vector.multi_reduction <add>, %67, %cst_50 [2] : vector<1x8x8xf32> to vector<1x8xf32>
    %69 = vector.shape_cast %68 : vector<1x8xf32> to vector<1x8x1xf32>
    %70 = tpu.reciprocal %69 {approx = true} : vector<1x8x1xf32> -> vector<1x8x1xf32>
    %71 = vector.broadcast %70 : vector<1x8x1xf32> to vector<1x8x8xf32>
    %72 = arith.mulf %67, %71 : vector<1x8x8xf32>
    %73 = arith.truncf %72 : vector<1x8x8xf32> to vector<1x8x8xbf16>
    "tpu.trace_start"() <{level = 10 : i32, message = "bqk,bkd->bqd"}> : () -> ()
    %cst_51 = arith.constant dense<0.000000e+00> : vector<1x8x8xf32>
    %74 = tpu.matmul %73, %59, %cst_51 {dimension_numbers = #tpu.dot_dimension_numbers<[2], [1], [1], [2], [0, 0, 0, 1, 1, 2], [0], [0]>} : vector<1x8x8xbf16>, vector<1x8x8xbf16>, vector<1x8x8xf32> -> vector<1x8x8xf32>
    "tpu.trace_stop"() : () -> ()
    %75 = arith.truncf %74 : vector<1x8x8xf32> to vector<1x8x8xbf16>
    %c0_52 = arith.constant 0 : index
    %c0_53 = arith.constant 0 : index
    %c16_54 = arith.constant 16 : index
    %76 = vector.load %arg17[%c0_52, %c0_53, %c16_54] : memref<1x8x32xbf16, #tpu.memory_space<vmem>>, vector<1x8x8xbf16>
    tpu.vector_store %arg17[%c0_52, %c0_53, %c16_54], %75 {strides = array<i32>} : memref<1x8x32xbf16, #tpu.memory_space<vmem>>, vector<1x8x8xbf16>,
    %c0_55 = arith.constant 0 : index
    %c0_56 = arith.constant 0 : index
    %c24 = arith.constant 24 : index
    %77 = vector.load %arg16[%c0_55, %c0_56, %c24] : memref<1x8x96xbf16, #tpu.memory_space<vmem>>, vector<1x8x8xbf16>
    %c0_57 = arith.constant 0 : index
    %c0_58 = arith.constant 0 : index
    %c56 = arith.constant 56 : index
    %78 = vector.load %arg16[%c0_57, %c0_58, %c56] : memref<1x8x96xbf16, #tpu.memory_space<vmem>>, vector<1x8x8xbf16>
    %c0_59 = arith.constant 0 : index
    %c0_60 = arith.constant 0 : index
    %c88 = arith.constant 88 : index
    %79 = vector.load %arg16[%c0_59, %c0_60, %c88] : memref<1x8x96xbf16, #tpu.memory_space<vmem>>, vector<1x8x8xbf16>
    "tpu.trace_start"() <{level = 10 : i32, message = "bqd,bkd->bqk"}> : () -> ()
    %cst_61 = arith.constant dense<0.000000e+00> : vector<1x8x8xf32>
    %80 = tpu.matmul %77, %78, %cst_61 {dimension_numbers = #tpu.dot_dimension_numbers<[2], [2], [1], [1], [0, 0, 0, 1, 1, 1], [0], [0]>} : vector<1x8x8xbf16>, vector<1x8x8xbf16>, vector<1x8x8xf32> -> vector<1x8x8xf32>
    "tpu.trace_stop"() : () -> ()
    %81 = vector.broadcast %16 : vector<1x1x8xf32> to vector<1x8x8xf32>
    %82 = arith.addf %80, %81 : vector<1x8x8xf32>
    %cst_62 = arith.constant dense<0xFF800000> : vector<1x8xf32>
    %83 = vector.multi_reduction <maximumf>, %82, %cst_62 [2] : vector<1x8x8xf32> to vector<1x8xf32>
    %84 = vector.shape_cast %83 : vector<1x8xf32> to vector<1x8x1xf32>
    %85 = vector.broadcast %84 : vector<1x8x1xf32> to vector<1x8x8xf32>
    %86 = arith.subf %82, %85 : vector<1x8x8xf32>
    %87 = math.exp %86 : vector<1x8x8xf32>
    %cst_63 = arith.constant dense<0.000000e+00> : vector<1x8xf32>
    %88 = vector.multi_reduction <add>, %87, %cst_63 [2] : vector<1x8x8xf32> to vector<1x8xf32>
    %89 = vector.shape_cast %88 : vector<1x8xf32> to vector<1x8x1xf32>
    %90 = tpu.reciprocal %89 {approx = true} : vector<1x8x1xf32> -> vector<1x8x1xf32>
    %91 = vector.broadcast %90 : vector<1x8x1xf32> to vector<1x8x8xf32>
    %92 = arith.mulf %87, %91 : vector<1x8x8xf32>
    %93 = arith.truncf %92 : vector<1x8x8xf32> to vector<1x8x8xbf16>
    "tpu.trace_start"() <{level = 10 : i32, message = "bqk,bkd->bqd"}> : () -> ()
    %cst_64 = arith.constant dense<0.000000e+00> : vector<1x8x8xf32>
    %94 = tpu.matmul %93, %79, %cst_64 {dimension_numbers = #tpu.dot_dimension_numbers<[2], [1], [1], [2], [0, 0, 0, 1, 1, 2], [0], [0]>} : vector<1x8x8xbf16>, vector<1x8x8xbf16>, vector<1x8x8xf32> -> vector<1x8x8xf32>
    "tpu.trace_stop"() : () -> ()
    %95 = arith.truncf %94 : vector<1x8x8xf32> to vector<1x8x8xbf16>
    %c0_65 = arith.constant 0 : index
    %c0_66 = arith.constant 0 : index
    %c24_67 = arith.constant 24 : index
    %96 = vector.load %arg17[%c0_65, %c0_66, %c24_67] : memref<1x8x32xbf16, #tpu.memory_space<vmem>>, vector<1x8x8xbf16>
    tpu.vector_store %arg17[%c0_65, %c0_66, %c24_67], %95 {strides = array<i32>} : memref<1x8x32xbf16, #tpu.memory_space<vmem>>, vector<1x8x8xbf16>,
    %c0_68 = arith.constant 0 : index
    %c0_69 = arith.constant 0 : index
    %c0_70 = arith.constant 0 : index
    %97 = vector.load %arg17[%c0_68, %c0_69, %c0_70] : memref<1x8x32xbf16, #tpu.memory_space<vmem>>, vector<1x8x32xbf16>
    %98 = vector.shape_cast %97 : vector<1x8x32xbf16> to vector<8x32xbf16>
    %c0_71 = arith.constant 0 : index
    %c0_72 = arith.constant 0 : index
    %99 = vector.load %arg5[%c0_71, %c0_72] : memref<32x32xbf16, #tpu.memory_space<vmem>>, vector<32x32xbf16>
    %cst_73 = arith.constant dense<0.000000e+00> : vector<8x32xf32>
    %100 = tpu.matmul %98, %99, %cst_73 {dimension_numbers = #tpu.dot_dimension_numbers<[1], [0], [0], [1], [0, 0, 1, 1], [], []>} : vector<8x32xbf16>, vector<32x32xbf16>, vector<8x32xf32> -> vector<8x32xf32>
    %c0_74 = arith.constant 0 : index
    %c0_75 = arith.constant 0 : index
    %101 = vector.load %arg6[%c0_74, %c0_75] : memref<1x32xf32, #tpu.memory_space<vmem>>, vector<1x32xf32>
    %102 = vector.broadcast %101 : vector<1x32xf32> to vector<8x32xf32>
    %103 = arith.addf %100, %102 : vector<8x32xf32>
    %104 = arith.addf %103, %1 : vector<8x32xf32>
    %c0_76 = arith.constant 0 : index
    %c0_77 = arith.constant 0 : index
    %105 = vector.load %arg7[%c0_76, %c0_77] : memref<1x32xf32, #tpu.memory_space<vmem>>, vector<1x32xf32>
    %c0_78 = arith.constant 0 : index
    %c0_79 = arith.constant 0 : index
    %106 = vector.load %arg8[%c0_78, %c0_79] : memref<1x32xf32, #tpu.memory_space<vmem>>, vector<1x32xf32>
    %cst_80 = arith.constant dense<0.000000e+00> : vector<8xf32>
    %107 = vector.multi_reduction <add>, %104, %cst_80 [1] : vector<8x32xf32> to vector<8xf32>
    %108 = vector.shape_cast %107 : vector<8xf32> to vector<8x1xf32>
    %cst_81 = arith.constant 3.200000e+01 : f32
    %109 = vector.broadcast %cst_81 : f32 to vector<8x1xf32>
    %110 = arith.divf %108, %109 : vector<8x1xf32>
    %111 = vector.broadcast %110 : vector<8x1xf32> to vector<8x32xf32>
    %112 = arith.subf %104, %111 : vector<8x32xf32>
    %113 = arith.mulf %112, %112 : vector<8x32xf32>
    %cst_82 = arith.constant dense<0.000000e+00> : vector<8xf32>
    %114 = vector.multi_reduction <add>, %113, %cst_82 [1] : vector<8x32xf32> to vector<8xf32>
    %115 = vector.shape_cast %114 : vector<8xf32> to vector<8x1xf32>
    %cst_83 = arith.constant 3.200000e+01 : f32
    %116 = vector.broadcast %cst_83 : f32 to vector<8x1xf32>
    %117 = arith.divf %115, %116 : vector<8x1xf32>
    %cst_84 = arith.constant 9.99999974E-6 : f32
    %118 = vector.broadcast %cst_84 : f32 to vector<8x1xf32>
    %119 = arith.addf %117, %118 : vector<8x1xf32>
    %120 = math.rsqrt %119 : vector<8x1xf32>
    %121 = vector.broadcast %110 : vector<8x1xf32> to vector<8x32xf32>
    %122 = arith.subf %104, %121 : vector<8x32xf32>
    %123 = vector.broadcast %120 : vector<8x1xf32> to vector<8x32xf32>
    %124 = arith.mulf %122, %123 : vector<8x32xf32>
    %125 = vector.broadcast %105 : vector<1x32xf32> to vector<8x32xf32>
    %126 = arith.mulf %124, %125 : vector<8x32xf32>
    %127 = vector.broadcast %106 : vector<1x32xf32> to vector<8x32xf32>
    %128 = arith.addf %126, %127 : vector<8x32xf32>
    %129 = arith.truncf %128 : vector<8x32xf32> to vector<8x32xbf16>
    %c0_85 = arith.constant 0 : index
    %c0_86 = arith.constant 0 : index
    %130 = vector.load %arg9[%c0_85, %c0_86] : memref<32x64xbf16, #tpu.memory_space<vmem>>, vector<32x64xbf16>
    %cst_87 = arith.constant dense<0.000000e+00> : vector<8x64xf32>
    %131 = tpu.matmul %129, %130, %cst_87 {dimension_numbers = #tpu.dot_dimension_numbers<[1], [0], [0], [1], [0, 0, 1, 1], [], []>} : vector<8x32xbf16>, vector<32x64xbf16>, vector<8x64xf32> -> vector<8x64xf32>
    %c0_88 = arith.constant 0 : index
    %c0_89 = arith.constant 0 : index
    %132 = vector.load %arg10[%c0_88, %c0_89] : memref<1x64xf32, #tpu.memory_space<vmem>>, vector<1x64xf32>
    %133 = vector.broadcast %132 : vector<1x64xf32> to vector<8x64xf32>
    %134 = arith.addf %131, %133 : vector<8x64xf32>
    %cst_90 = arith.constant 0.000000e+00 : f32
    %135 = vector.broadcast %cst_90 : f32 to vector<8x64xf32>
    %136 = arith.maximumf %134, %135 : vector<8x64xf32>
    %137 = arith.truncf %136 : vector<8x64xf32> to vector<8x64xbf16>
    %c0_91 = arith.constant 0 : index
    %c0_92 = arith.constant 0 : index
    %138 = vector.load %arg11[%c0_91, %c0_92] : memref<64x32xbf16, #tpu.memory_space<vmem>>, vector<64x32xbf16>
    %cst_93 = arith.constant dense<0.000000e+00> : vector<8x32xf32>
    %139 = tpu.matmul %137, %138, %cst_93 {dimension_numbers = #tpu.dot_dimension_numbers<[1], [0], [0], [1], [0, 0, 1, 1], [], []>} : vector<8x64xbf16>, vector<64x32xbf16>, vector<8x32xf32> -> vector<8x32xf32>
    %c0_94 = arith.constant 0 : index
    %c0_95 = arith.constant 0 : index
    %140 = vector.load %arg12[%c0_94, %c0_95] : memref<1x32xf32, #tpu.memory_space<vmem>>, vector<1x32xf32>
    %141 = vector.broadcast %140 : vector<1x32xf32> to vector<8x32xf32>
    %142 = arith.addf %139, %141 : vector<8x32xf32>
    %143 = arith.addf %142, %128 : vector<8x32xf32>
    %c0_96 = arith.constant 0 : index
    %c0_97 = arith.constant 0 : index
    %144 = vector.load %arg13[%c0_96, %c0_97] : memref<1x32xf32, #tpu.memory_space<vmem>>, vector<1x32xf32>
    %c0_98 = arith.constant 0 : index
    %c0_99 = arith.constant 0 : index
    %145 = vector.load %arg14[%c0_98, %c0_99] : memref<1x32xf32, #tpu.memory_space<vmem>>, vector<1x32xf32>
    %cst_100 = arith.constant dense<0.000000e+00> : vector<8xf32>
    %146 = vector.multi_reduction <add>, %143, %cst_100 [1] : vector<8x32xf32> to vector<8xf32>
    %147 = vector.shape_cast %146 : vector<8xf32> to vector<8x1xf32>
    %cst_101 = arith.constant 3.200000e+01 : f32
    %148 = vector.broadcast %cst_101 : f32 to vector<8x1xf32>
    %149 = arith.divf %147, %148 : vector<8x1xf32>
    %150 = vector.broadcast %149 : vector<8x1xf32> to vector<8x32xf32>
    %151 = arith.subf %143, %150 : vector<8x32xf32>
    %152 = arith.mulf %151, %151 : vector<8x32xf32>
    %cst_102 = arith.constant dense<0.000000e+00> : vector<8xf32>
    %153 = vector.multi_reduction <add>, %152, %cst_102 [1] : vector<8x32xf32> to vector<8xf32>
    %154 = vector.shape_cast %153 : vector<8xf32> to vector<8x1xf32>
    %cst_103 = arith.constant 3.200000e+01 : f32
    %155 = vector.broadcast %cst_103 : f32 to vector<8x1xf32>
    %156 = arith.divf %154, %155 : vector<8x1xf32>
    %cst_104 = arith.constant 9.99999974E-6 : f32
    %157 = vector.broadcast %cst_104 : f32 to vector<8x1xf32>
    %158 = arith.addf %156, %157 : vector<8x1xf32>
    %159 = math.rsqrt %158 : vector<8x1xf32>
    %160 = vector.broadcast %149 : vector<8x1xf32> to vector<8x32xf32>
    %161 = arith.subf %143, %160 : vector<8x32xf32>
    %162 = vector.broadcast %159 : vector<8x1xf32> to vector<8x32xf32>
    %163 = arith.mulf %161, %162 : vector<8x32xf32>
    %164 = vector.broadcast %144 : vector<1x32xf32> to vector<8x32xf32>
    %165 = arith.mulf %163, %164 : vector<8x32xf32>
    %166 = vector.broadcast %145 : vector<1x32xf32> to vector<8x32xf32>
    %167 = arith.addf %165, %166 : vector<8x32xf32>
    %168 = vector.shape_cast %167 : vector<8x32xf32> to vector<1x8x32xf32>
    %c0_105 = arith.constant 0 : index
    %c0_106 = arith.constant 0 : index
    %c0_107 = arith.constant 0 : index
    %169 = vector.load %arg15[%c0_105, %c0_106, %c0_107] : memref<1x8x32xf32, #tpu.memory_space<vmem>>, vector<1x8x32xf32>
    tpu.vector_store %arg15[%c0_105, %c0_106, %c0_107], %168 {strides = array<i32>} : memref<1x8x32xf32, #tpu.memory_space<vmem>>, vector<1x8x32xf32>,
    return
  }
  func.func @transform_0(%arg0: i32) -> (i32, i32, i32) {
    %c0_i32 = arith.constant 0 : i32
    %c0_i32_0 = arith.constant 0 : i32
    %c0_i32_1 = arith.constant 0 : i32
    return %arg0, %c0_i32, %c0_i32_0 : i32, i32, i32
  }
  func.func @transform_1(%arg0: i32) -> (i32, i32, i32) {
    %c0_i32 = arith.constant 0 : i32
    %c0_i32_0 = arith.constant 0 : i32
    %c0_i32_1 = arith.constant 0 : i32
    return %arg0, %c0_i32, %c0_i32_0 : i32, i32, i32
  }
  func.func @transform_2(%arg0: i32) -> (i32, i32) {
    %c0_i32 = arith.constant 0 : i32
    %c0_i32_0 = arith.constant 0 : i32
    %c0_i32_1 = arith.constant 0 : i32
    return %c0_i32, %c0_i32_0 : i32, i32
  }
  func.func @transform_3(%arg0: i32) -> (i32, i32) {
    %c0_i32 = arith.constant 0 : i32
    %c0_i32_0 = arith.constant 0 : i32
    %c0_i32_1 = arith.constant 0 : i32
    return %c0_i32, %c0_i32_0 : i32, i32
  }
  func.func @transform_4(%arg0: i32) -> (i32, i32) {
    %c0_i32 = arith.constant 0 : i32
    %c0_i32_0 = arith.constant 0 : i32
    %c0_i32_1 = arith.constant 0 : i32
    return %c0_i32, %c0_i32_0 : i32, i32
  }
  func.func @transform_5(%arg0: i32) -> (i32, i32) {
    %c0_i32 = arith.constant 0 : i32
    %c0_i32_0 = arith.constant 0 : i32
    %c0_i32_1 = arith.constant 0 : i32
    return %c0_i32, %c0_i32_0 : i32, i32
  }
  func.func @transform_6(%arg0: i32) -> (i32, i32) {
    %c0_i32 = arith.constant 0 : i32
    %c0_i32_0 = arith.constant 0 : i32
    %c0_i32_1 = arith.constant 0 : i32
    return %c0_i32, %c0_i32_0 : i32, i32
  }
  func.func @transform_7(%arg0: i32) -> (i32, i32) {
    %c0_i32 = arith.constant 0 : i32
    %c0_i32_0 = arith.constant 0 : i32
    %c0_i32_1 = arith.constant 0 : i32
    return %c0_i32, %c0_i32_0 : i32, i32
  }
  func.func @transform_8(%arg0: i32) -> (i32, i32) {
    %c0_i32 = arith.constant 0 : i32
    %c0_i32_0 = arith.constant 0 : i32
    %c0_i32_1 = arith.constant 0 : i32
    return %c0_i32, %c0_i32_0 : i32, i32
  }
  func.func @transform_9(%arg0: i32) -> (i32, i32) {
    %c0_i32 = arith.constant 0 : i32
    %c0_i32_0 = arith.constant 0 : i32
    %c0_i32_1 = arith.constant 0 : i32
    return %c0_i32, %c0_i32_0 : i32, i32
  }
  func.func @transform_10(%arg0: i32) -> (i32, i32) {
    %c0_i32 = arith.constant 0 : i32
    %c0_i32_0 = arith.constant 0 : i32
    %c0_i32_1 = arith.constant 0 : i32
    return %c0_i32, %c0_i32_0 : i32, i32
  }
  func.func @transform_11(%arg0: i32) -> (i32, i32) {
    %c0_i32 = arith.constant 0 : i32
    %c0_i32_0 = arith.constant 0 : i32
    %c0_i32_1 = arith.constant 0 : i32
    return %c0_i32, %c0_i32_0 : i32, i32
  }
  func.func @transform_12(%arg0: i32) -> (i32, i32) {
    %c0_i32 = arith.constant 0 : i32
    %c0_i32_0 = arith.constant 0 : i32
    %c0_i32_1 = arith.constant 0 : i32
    return %c0_i32, %c0_i32_0 : i32, i32
  }
  func.func @transform_13(%arg0: i32) -> (i32, i32) {
    %c0_i32 = arith.constant 0 : i32
    %c0_i32_0 = arith.constant 0 : i32
    %c0_i32_1 = arith.constant 0 : i32
    return %c0_i32, %c0_i32_0 : i32, i32
  }
  func.func @transform_14(%arg0: i32) -> (i32, i32, i32) {
    %c0_i32 = arith.constant 0 : i32
    %c0_i32_0 = arith.constant 0 : i32
    %c0_i32_1 = arith.constant 0 : i32
    return %arg0, %c0_i32, %c0_i32_0 : i32, i32, i32
  }
}

module attributes {stable_mosaic.version = 11 : i64} {
  func.func @encoder_layer_kernel(%arg0: i32, %arg1: memref<1x8x32xf32, #tpu.memory_space<vmem>>, %arg2: memref<1x1x8xf32, #tpu.memory_space<vmem>>, %arg3: memref<32x96xbf16, #tpu.memory_space<vmem>>, %arg4: memref<1x96xf32, #tpu.memory_space<vmem>>, %arg5: memref<32x32xbf16, #tpu.memory_space<vmem>>, %arg6: memref<1x32xf32, #tpu.memory_space<vmem>>, %arg7: memref<1x32xf32, #tpu.memory_space<vmem>>, %arg8: memref<1x32xf32, #tpu.memory_space<vmem>>, %arg9: memref<32x64xbf16, #tpu.memory_space<vmem>>, %arg10: memref<1x64xf32, #tpu.memory_space<vmem>>, %arg11: memref<64x32xbf16, #tpu.memory_space<vmem>>, %arg12: memref<1x32xf32, #tpu.memory_space<vmem>>, %arg13: memref<1x32xf32, #tpu.memory_space<vmem>>, %arg14: memref<1x32xf32, #tpu.memory_space<vmem>>, %arg15: memref<1x8x32xf32, #tpu.memory_space<vmem>>, %arg16: memref<1x8x96xbf16, #tpu.memory_space<vmem>>, %arg17: memref<1x8x32xbf16, #tpu.memory_space<vmem>>) attributes {dimension_semantics = [#tpu.dimension_semantics<parallel>], iteration_bounds = array<i64: 2>, scalar_prefetch = 0 : i64, scratch_operands = 2 : i64, tpu.core_type = #tpu.core_type<tc>, window_params = [{transform_indices = @transform_0, window_bounds = array<i64: 1, 8, 32>}, {transform_indices = @transform_1, window_bounds = array<i64: 1, 1, 8>}, {pipeline_mode = #tpu.pipeline_mode<synchronous>, transform_indices = @transform_2, window_bounds = array<i64: 32, 96>}, {pipeline_mode = #tpu.pipeline_mode<synchronous>, transform_indices = @transform_3, window_bounds = array<i64: 1, 96>}, {pipeline_mode = #tpu.pipeline_mode<synchronous>, transform_indices = @transform_4, window_bounds = array<i64: 32, 32>}, {pipeline_mode = #tpu.pipeline_mode<synchronous>, transform_indices = @transform_5, window_bounds = array<i64: 1, 32>}, {pipeline_mode = #tpu.pipeline_mode<synchronous>, transform_indices = @transform_6, window_bounds = array<i64: 1, 32>}, {pipeline_mode = #tpu.pipeline_mode<synchronous>, transform_indices = @transform_7, window_bounds = array<i64: 1, 32>}, {pipeline_mode = #tpu.pipeline_mode<synchronous>, transform_indices = @transform_8, window_bounds = array<i64: 32, 64>}, {pipeline_mode = #tpu.pipeline_mode<synchronous>, transform_indices = @transform_9, window_bounds = array<i64: 1, 64>}, {pipeline_mode = #tpu.pipeline_mode<synchronous>, transform_indices = @transform_10, window_bounds = array<i64: 64, 32>}, {pipeline_mode = #tpu.pipeline_mode<synchronous>, transform_indices = @transform_11, window_bounds = array<i64: 1, 32>}, {pipeline_mode = #tpu.pipeline_mode<synchronous>, transform_indices = @transform_12, window_bounds = array<i64: 1, 32>}, {pipeline_mode = #tpu.pipeline_mode<synchronous>, transform_indices = @transform_13, window_bounds = array<i64: 1, 32>}, {transform_indices = @transform_14, window_bounds = array<i64: 1, 8, 32>}]} {
    %c0 = arith.constant 0 : index
    %c0_0 = arith.constant 0 : index
    %c0_1 = arith.constant 0 : index
    %0 = vector.load %arg1[%c0, %c0_0, %c0_1] : memref<1x8x32xf32, #tpu.memory_space<vmem>>, vector<1x8x32xf32>
    %1 = vector.shape_cast %0 : vector<1x8x32xf32> to vector<8x32xf32>
    %2 = arith.truncf %1 : vector<8x32xf32> to vector<8x32xbf16>
    %c0_2 = arith.constant 0 : index
    %c0_3 = arith.constant 0 : index
    %3 = vector.load %arg3[%c0_2, %c0_3] : memref<32x96xbf16, #tpu.memory_space<vmem>>, vector<32x96xbf16>
    %cst = arith.constant dense<0.000000e+00> : vector<8x96xf32>
    %4 = tpu.matmul %2, %3, %cst {dimension_numbers = #tpu.dot_dimension_numbers<[1], [0], [0], [1], [0, 0, 1, 1], [], []>} : vector<8x32xbf16>, vector<32x96xbf16>, vector<8x96xf32> -> vector<8x96xf32>
    %c0_4 = arith.constant 0 : index
    %c0_5 = arith.constant 0 : index
    %5 = vector.load %arg4[%c0_4, %c0_5] : memref<1x96xf32, #tpu.memory_space<vmem>>, vector<1x96xf32>
    %6 = vector.broadcast %5 : vector<1x96xf32> to vector<8x96xf32>
    %7 = arith.addf %4, %6 : vector<8x96xf32>
    %8 = vector.shape_cast %7 : vector<8x96xf32> to vector<1x8x96xf32>
    %9 = arith.truncf %8 : vector<1x8x96xf32> to vector<1x8x96xbf16>
    %c0_6 = arith.constant 0 : index
    %c0_7 = arith.constant 0 : index
    %c0_8 = arith.constant 0 : index
    %10 = vector.load %arg16[%c0_6, %c0_7, %c0_8] : memref<1x8x96xbf16, #tpu.memory_space<vmem>>, vector<1x8x96xbf16>
    tpu.vector_store %arg16[%c0_6, %c0_7, %c0_8], %9 {strides = array<i32>} : memref<1x8x96xbf16, #tpu.memory_space<vmem>>, vector<1x8x96xbf16>,
    %c0_9 = arith.constant 0 : index
    %c0_10 = arith.constant 0 : index
    %c0_11 = arith.constant 0 : index
    %11 = vector.load %arg2[%c0_9, %c0_10, %c0_11] : memref<1x1x8xf32, #tpu.memory_space<vmem>>, vector<1x1x8xf32>
    %cst_12 = arith.constant 0.000000e+00 : f32
    %12 = vector.broadcast %cst_12 : f32 to vector<1x1x8xf32>
    %13 = arith.cmpf ogt, %11, %12 : vector<1x1x8xf32>
    %cst_13 = arith.constant 0.000000e+00 : f32
    %cst_14 = arith.constant -1.000000e+09 : f32
    %14 = vector.broadcast %cst_13 : f32 to vector<1x1x8xf32>
    %15 = vector.broadcast %cst_14 : f32 to vector<1x1x8xf32>
    %16 = arith.select %13, %14, %15 : vector<1x1x8xi1>, vector<1x1x8xf32>
    %c0_15 = arith.constant 0 : index
    %c0_16 = arith.constant 0 : index
    %c0_17 = arith.constant 0 : index
    %17 = vector.load %arg16[%c0_15, %c0_16, %c0_17] : memref<1x8x96xbf16, #tpu.memory_space<vmem>>, vector<1x8x8xbf16>
    %c0_18 = arith.constant 0 : index
    %c0_19 = arith.constant 0 : index
    %c32 = arith.constant 32 : index
    %18 = vector.load %arg16[%c0_18, %c0_19, %c32] : memref<1x8x96xbf16, #tpu.memory_space<vmem>>, vector<1x8x8xbf16>
    %c0_20 = arith.constant 0 : index
    %c0_21 = arith.constant 0 : index
    %c64 = arith.constant 64 : index
    %19 = vector.load %arg16[%c0_20, %c0_21, %c64] : memref<1x8x96xbf16, #tpu.memory_space<vmem>>, vector<1x8x8xbf16>
    "tpu.trace_start"() <{level = 10 : i32, message = "bqd,bkd->bqk"}> : () -> ()
    %cst_22 = arith.constant dense<0.000000e+00> : vector<1x8x8xf32>
    %20 = tpu.matmul %17, %18, %cst_22 {dimension_numbers = #tpu.dot_dimension_numbers<[2], [2], [1], [1], [0, 0, 0, 1, 1, 1], [0], [0]>} : vector<1x8x8xbf16>, vector<1x8x8xbf16>, vector<1x8x8xf32> -> vector<1x8x8xf32>
    "tpu.trace_stop"() : () -> ()
    %21 = vector.broadcast %16 : vector<1x1x8xf32> to vector<1x8x8xf32>
    %22 = arith.addf %20, %21 : vector<1x8x8xf32>
    %cst_23 = arith.constant dense<0xFF800000> : vector<1x8xf32>
    %23 = vector.multi_reduction <maximumf>, %22, %cst_23 [2] : vector<1x8x8xf32> to vector<1x8xf32>
    %24 = vector.shape_cast %23 : vector<1x8xf32> to vector<1x8x1xf32>
    %25 = vector.broadcast %24 : vector<1x8x1xf32> to vector<1x8x8xf32>
    %26 = arith.subf %22, %25 : vector<1x8x8xf32>
    %27 = math.exp %26 : vector<1x8x8xf32>
    %cst_24 = arith.constant dense<0.000000e+00> : vector<1x8xf32>
    %28 = vector.multi_reduction <add>, %27, %cst_24 [2] : vector<1x8x8xf32> to vector<1x8xf32>
    %29 = vector.shape_cast %28 : vector<1x8xf32> to vector<1x8x1xf32>
    %30 = tpu.reciprocal %29 {approx = true} : vector<1x8x1xf32> -> vector<1x8x1xf32>
    %31 = vector.broadcast %30 : vector<1x8x1xf32> to vector<1x8x8xf32>
    %32 = arith.mulf %27, %31 : vector<1x8x8xf32>
    %33 = arith.truncf %32 : vector<1x8x8xf32> to vector<1x8x8xbf16>
    "tpu.trace_start"() <{level = 10 : i32, message = "bqk,bkd->bqd"}> : () -> ()
    %cst_25 = arith.constant dense<0.000000e+00> : vector<1x8x8xf32>
    %34 = tpu.matmul %33, %19, %cst_25 {dimension_numbers = #tpu.dot_dimension_numbers<[2], [1], [1], [2], [0, 0, 0, 1, 1, 2], [0], [0]>} : vector<1x8x8xbf16>, vector<1x8x8xbf16>, vector<1x8x8xf32> -> vector<1x8x8xf32>
    "tpu.trace_stop"() : () -> ()
    %35 = arith.truncf %34 : vector<1x8x8xf32> to vector<1x8x8xbf16>
    %c0_26 = arith.constant 0 : index
    %c0_27 = arith.constant 0 : index
    %c0_28 = arith.constant 0 : index
    %36 = vector.load %arg17[%c0_26, %c0_27, %c0_28] : memref<1x8x32xbf16, #tpu.memory_space<vmem>>, vector<1x8x8xbf16>
    tpu.vector_store %arg17[%c0_26, %c0_27, %c0_28], %35 {strides = array<i32>} : memref<1x8x32xbf16, #tpu.memory_space<vmem>>, vector<1x8x8xbf16>,
    %c0_29 = arith.constant 0 : index
    %c0_30 = arith.constant 0 : index
    %c8 = arith.constant 8 : index
    %37 = vector.load %arg16[%c0_29, %c0_30, %c8] : memref<1x8x96xbf16, #tpu.memory_space<vmem>>, vector<1x8x8xbf16>
    %c0_31 = arith.constant 0 : index
    %c0_32 = arith.constant 0 : index
    %c40 = arith.constant 40 : index
    %38 = vector.load %arg16[%c0_31, %c0_32, %c40] : memref<1x8x96xbf16, #tpu.memory_space<vmem>>, vector<1x8x8xbf16>
    %c0_33 = arith.constant 0 : index
    %c0_34 = arith.constant 0 : index
    %c72 = arith.constant 72 : index
    %39 = vector.load %arg16[%c0_33, %c0_34, %c72] : memref<1x8x96xbf16, #tpu.memory_space<vmem>>, vector<1x8x8xbf16>
    "tpu.trace_start"() <{level = 10 : i32, message = "bqd,bkd->bqk"}> : () -> ()
    %cst_35 = arith.constant dense<0.000000e+00> : vector<1x8x8xf32>
    %40 = tpu.matmul %37, %38, %cst_35 {dimension_numbers = #tpu.dot_dimension_numbers<[2], [2], [1], [1], [0, 0, 0, 1, 1, 1], [0], [0]>} : vector<1x8x8xbf16>, vector<1x8x8xbf16>, vector<1x8x8xf32> -> vector<1x8x8xf32>
    "tpu.trace_stop"() : () -> ()
    %41 = vector.broadcast %16 : vector<1x1x8xf32> to vector<1x8x8xf32>
    %42 = arith.addf %40, %41 : vector<1x8x8xf32>
    %cst_36 = arith.constant dense<0xFF800000> : vector<1x8xf32>
    %43 = vector.multi_reduction <maximumf>, %42, %cst_36 [2] : vector<1x8x8xf32> to vector<1x8xf32>
    %44 = vector.shape_cast %43 : vector<1x8xf32> to vector<1x8x1xf32>
    %45 = vector.broadcast %44 : vector<1x8x1xf32> to vector<1x8x8xf32>
    %46 = arith.subf %42, %45 : vector<1x8x8xf32>
    %47 = math.exp %46 : vector<1x8x8xf32>
    %cst_37 = arith.constant dense<0.000000e+00> : vector<1x8xf32>
    %48 = vector.multi_reduction <add>, %47, %cst_37 [2] : vector<1x8x8xf32> to vector<1x8xf32>
    %49 = vector.shape_cast %48 : vector<1x8xf32> to vector<1x8x1xf32>
    %50 = tpu.reciprocal %49 {approx = true} : vector<1x8x1xf32> -> vector<1x8x1xf32>
    %51 = vector.broadcast %50 : vector<1x8x1xf32> to vector<1x8x8xf32>
    %52 = arith.mulf %47, %51 : vector<1x8x8xf32>
    %53 = arith.truncf %52 : vector<1x8x8xf32> to vector<1x8x8xbf16>
    "tpu.trace_start"() <{level = 10 : i32, message = "bqk,bkd->bqd"}> : () -> ()
    %cst_38 = arith.constant dense<0.000000e+00> : vector<1x8x8xf32>
    %54 = tpu.matmul %53, %39, %cst_38 {dimension_numbers = #tpu.dot_dimension_numbers<[2], [1], [1], [2], [0, 0, 0, 1, 1, 2], [0], [0]>} : vector<1x8x8xbf16>, vector<1x8x8xbf16>, vector<1x8x8xf32> -> vector<1x8x8xf32>
    "tpu.trace_stop"() : () -> ()
    %55 = arith.truncf %54 : vector<1x8x8xf32> to vector<1x8x8xbf16>
    %c0_39 = arith.constant 0 : index
    %c0_40 = arith.constant 0 : index
    %c8_41 = arith.constant 8 : index
    %56 = vector.load %arg17[%c0_39, %c0_40, %c8_41] : memref<1x8x32xbf16, #tpu.memory_space<vmem>>, vector<1x8x8xbf16>
    tpu.vector_store %arg17[%c0_39, %c0_40, %c8_41], %55 {strides = array<i32>} : memref<1x8x32xbf16, #tpu.memory_space<vmem>>, vector<1x8x8xbf16>,
    %c0_42 = arith.constant 0 : index
    %c0_43 = arith.constant 0 : index
    %c16 = arith.constant 16 : index
    %57 = vector.load %arg16[%c0_42, %c0_43, %c16] : memref<1x8x96xbf16, #tpu.memory_space<vmem>>, vector<1x8x8xbf16>
    %c0_44 = arith.constant 0 : index
    %c0_45 = arith.constant 0 : index
    %c48 = arith.constant 48 : index
    %58 = vector.load %arg16[%c0_44, %c0_45, %c48] : memref<1x8x96xbf16, #tpu.memory_space<vmem>>, vector<1x8x8xbf16>
    %c0_46 = arith.constant 0 : index
    %c0_47 = arith.constant 0 : index
    %c80 = arith.constant 80 : index
    %59 = vector.load %arg16[%c0_46, %c0_47, %c80] : memref<1x8x96xbf16, #tpu.memory_space<vmem>>, vector<1x8x8xbf16>
    "tpu.trace_start"() <{level = 10 : i32, message = "bqd,bkd->bqk"}> : () -> ()
    %cst_48 = arith.constant dense<0.000000e+00> : vector<1x8x8xf32>
    %60 = tpu.matmul %57, %58, %cst_48 {dimension_numbers = #tpu.dot_dimension_numbers<[2], [2], [1], [1], [0, 0, 0, 1, 1, 1], [0], [0]>} : vector<1x8x8xbf16>, vector<1x8x8xbf16>, vector<1x8x8xf32> -> vector<1x8x8xf32>
    "tpu.trace_stop"() : () -> ()
    %61 = vector.broadcast %16 : vector<1x1x8xf32> to vector<1x8x8xf32>
    %62 = arith.addf %60, %61 : vector<1x8x8xf32>
    %cst_49 = arith.constant dense<0xFF800000> : vector<1x8xf32>
    %63 = vector.multi_reduction <maximumf>, %62, %cst_49 [2] : vector<1x8x8xf32> to vector<1x8xf32>
    %64 = vector.shape_cast %63 : vector<1x8xf32> to vector<1x8x1xf32>
    %65 = vector.broadcast %64 : vector<1x8x1xf32> to vector<1x8x8xf32>
    %66 = arith.subf %62, %65 : vector<1x8x8xf32>
    %67 = math.exp %66 : vector<1x8x8xf32>
    %cst_50 = arith.constant dense<0.000000e+00> : vector<1x8xf32>
    %68 = vector.multi_reduction <add>, %67, %cst_50 [2] : vector<1x8x8xf32> to vector<1x8xf32>
    %69 = vector.shape_cast %68 : vector<1x8xf32> to vector<1x8x1xf32>
    %70 = tpu.reciprocal %69 {approx = true} : vector<1x8x1xf32> -> vector<1x8x1xf32>
    %71 = vector.broadcast %70 : vector<1x8x1xf32> to vector<1x8x8xf32>
    %72 = arith.mulf %67, %71 : vector<1x8x8xf32>
    %73 = arith.truncf %72 : vector<1x8x8xf32> to vector<1x8x8xbf16>
    "tpu.trace_start"() <{level = 10 : i32, message = "bqk,bkd->bqd"}> : () -> ()
    %cst_51 = arith.constant dense<0.000000e+00> : vector<1x8x8xf32>
    %74 = tpu.matmul %73, %59, %cst_51 {dimension_numbers = #tpu.dot_dimension_numbers<[2], [1], [1], [2], [0, 0, 0, 1, 1, 2], [0], [0]>} : vector<1x8x8xbf16>, vector<1x8x8xbf16>, vector<1x8x8xf32> -> vector<1x8x8xf32>
    "tpu.trace_stop"() : () -> ()
    %75 = arith.truncf %74 : vector<1x8x8xf32> to vector<1x8x8xbf16>
    %c0_52 = arith.constant 0 : index
    %c0_53 = arith.constant 0 : index
    %c16_54 = arith.constant 16 : index
    %76 = vector.load %arg17[%c0_52, %c0_53, %c16_54] : memref<1x8x32xbf16, #tpu.memory_space<vmem>>, vector<1x8x8xbf16>
    tpu.vector_store %arg17[%c0_52, %c0_53, %c16_54], %75 {strides = array<i32>} : memref<1x8x32xbf16, #tpu.memory_space<vmem>>, vector<1x8x8xbf16>,
    %c0_55 = arith.constant 0 : index
    %c0_56 = arith.constant 0 : index
    %c24 = arith.constant 24 : index
    %77 = vector.load %arg16[%c0_55, %c0_56, %c24] : memref<1x8x96xbf16, #tpu.memory_space<vmem>>, vector<1x8x8xbf16>
    %c0_57 = arith.constant 0 : index
    %c0_58 = arith.constant 0 : index
    %c56 = arith.constant 56 : index
    %78 = vector.load %arg16[%c0_57, %c0_58, %c56] : memref<1x8x96xbf16, #tpu.memory_space<vmem>>, vector<1x8x8xbf16>
    %c0_59 = arith.constant 0 : index
    %c0_60 = arith.constant 0 : index
    %c88 = arith.constant 88 : index
    %79 = vector.load %arg16[%c0_59, %c0_60, %c88] : memref<1x8x96xbf16, #tpu.memory_space<vmem>>, vector<1x8x8xbf16>
    "tpu.trace_start"() <{level = 10 : i32, message = "bqd,bkd->bqk"}> : () -> ()
    %cst_61 = arith.constant dense<0.000000e+00> : vector<1x8x8xf32>
    %80 = tpu.matmul %77, %78, %cst_61 {dimension_numbers = #tpu.dot_dimension_numbers<[2], [2], [1], [1], [0, 0, 0, 1, 1, 1], [0], [0]>} : vector<1x8x8xbf16>, vector<1x8x8xbf16>, vector<1x8x8xf32> -> vector<1x8x8xf32>
    "tpu.trace_stop"() : () -> ()
    %81 = vector.broadcast %16 : vector<1x1x8xf32> to vector<1x8x8xf32>
    %82 = arith.addf %80, %81 : vector<1x8x8xf32>
    %cst_62 = arith.constant dense<0xFF800000> : vector<1x8xf32>
    %83 = vector.multi_reduction <maximumf>, %82, %cst_62 [2] : vector<1x8x8xf32> to vector<1x8xf32>
    %84 = vector.shape_cast %83 : vector<1x8xf32> to vector<1x8x1xf32>
    %85 = vector.broadcast %84 : vector<1x8x1xf32> to vector<1x8x8xf32>
    %86 = arith.subf %82, %85 : vector<1x8x8xf32>
    %87 = math.exp %86 : vector<1x8x8xf32>
    %cst_63 = arith.constant dense<0.000000e+00> : vector<1x8xf32>
    %88 = vector.multi_reduction <add>, %87, %cst_63 [2] : vector<1x8x8xf32> to vector<1x8xf32>
    %89 = vector.shape_cast %88 : vector<1x8xf32> to vector<1x8x1xf32>
    %90 = tpu.reciprocal %89 {approx = true} : vector<1x8x1xf32> -> vector<1x8x1xf32>
    %91 = vector.broadcast %90 : vector<1x8x1xf32> to vector<1x8x8xf32>
    %92 = arith.mulf %87, %91 : vector<1x8x8xf32>
    %93 = arith.truncf %92 : vector<1x8x8xf32> to vector<1x8x8xbf16>
    "tpu.trace_start"() <{level = 10 : i32, message = "bqk,bkd->bqd"}> : () -> ()
    %cst_64 = arith.constant dense<0.000000e+00> : vector<1x8x8xf32>
    %94 = tpu.matmul %93, %79, %cst_64 {dimension_numbers = #tpu.dot_dimension_numbers<[2], [1], [1], [2], [0, 0, 0, 1, 1, 2], [0], [0]>} : vector<1x8x8xbf16>, vector<1x8x8xbf16>, vector<1x8x8xf32> -> vector<1x8x8xf32>
    "tpu.trace_stop"() : () -> ()
    %95 = arith.truncf %94 : vector<1x8x8xf32> to vector<1x8x8xbf16>
    %c0_65 = arith.constant 0 : index
    %c0_66 = arith.constant 0 : index
    %c24_67 = arith.constant 24 : index
    %96 = vector.load %arg17[%c0_65, %c0_66, %c24_67] : memref<1x8x32xbf16, #tpu.memory_space<vmem>>, vector<1x8x8xbf16>
    tpu.vector_store %arg17[%c0_65, %c0_66, %c24_67], %95 {strides = array<i32>} : memref<1x8x32xbf16, #tpu.memory_space<vmem>>, vector<1x8x8xbf16>,
    %c0_68 = arith.constant 0 : index
    %c0_69 = arith.constant 0 : index
    %c0_70 = arith.constant 0 : index
    %97 = vector.load %arg17[%c0_68, %c0_69, %c0_70] : memref<1x8x32xbf16, #tpu.memory_space<vmem>>, vector<1x8x32xbf16>
    %98 = vector.shape_cast %97 : vector<1x8x32xbf16> to vector<8x32xbf16>
    %c0_71 = arith.constant 0 : index
    %c0_72 = arith.constant 0 : index
    %99 = vector.load %arg5[%c0_71, %c0_72] : memref<32x32xbf16, #tpu.memory_space<vmem>>, vector<32x32xbf16>
    %cst_73 = arith.constant dense<0.000000e+00> : vector<8x32xf32>
    %100 = tpu.matmul %98, %99, %cst_73 {dimension_numbers = #tpu.dot_dimension_numbers<[1], [0], [0], [1], [0, 0, 1, 1], [], []>} : vector<8x32xbf16>, vector<32x32xbf16>, vector<8x32xf32> -> vector<8x32xf32>
    %c0_74 = arith.constant 0 : index
    %c0_75 = arith.constant 0 : index
    %101 = vector.load %arg6[%c0_74, %c0_75] : memref<1x32xf32, #tpu.memory_space<vmem>>, vector<1x32xf32>
    %102 = vector.broadcast %101 : vector<1x32xf32> to vector<8x32xf32>
    %103 = arith.addf %100, %102 : vector<8x32xf32>
    %104 = arith.addf %103, %1 : vector<8x32xf32>
    %c0_76 = arith.constant 0 : index
    %c0_77 = arith.constant 0 : index
    %105 = vector.load %arg7[%c0_76, %c0_77] : memref<1x32xf32, #tpu.memory_space<vmem>>, vector<1x32xf32>
    %c0_78 = arith.constant 0 : index
    %c0_79 = arith.constant 0 : index
    %106 = vector.load %arg8[%c0_78, %c0_79] : memref<1x32xf32, #tpu.memory_space<vmem>>, vector<1x32xf32>
    %cst_80 = arith.constant dense<0.000000e+00> : vector<8xf32>
    %107 = vector.multi_reduction <add>, %104, %cst_80 [1] : vector<8x32xf32> to vector<8xf32>
    %108 = vector.shape_cast %107 : vector<8xf32> to vector<8x1xf32>
    %cst_81 = arith.constant 3.200000e+01 : f32
    %109 = vector.broadcast %cst_81 : f32 to vector<8x1xf32>
    %110 = arith.divf %108, %109 : vector<8x1xf32>
    %111 = vector.broadcast %110 : vector<8x1xf32> to vector<8x32xf32>
    %112 = arith.subf %104, %111 : vector<8x32xf32>
    %113 = arith.mulf %112, %112 : vector<8x32xf32>
    %cst_82 = arith.constant dense<0.000000e+00> : vector<8xf32>
    %114 = vector.multi_reduction <add>, %113, %cst_82 [1] : vector<8x32xf32> to vector<8xf32>
    %115 = vector.shape_cast %114 : vector<8xf32> to vector<8x1xf32>
    %cst_83 = arith.constant 3.200000e+01 : f32
    %116 = vector.broadcast %cst_83 : f32 to vector<8x1xf32>
    %117 = arith.divf %115, %116 : vector<8x1xf32>
    %cst_84 = arith.constant 9.99999974E-6 : f32
    %118 = vector.broadcast %cst_84 : f32 to vector<8x1xf32>
    %119 = arith.addf %117, %118 : vector<8x1xf32>
    %120 = math.rsqrt %119 : vector<8x1xf32>
    %121 = vector.broadcast %110 : vector<8x1xf32> to vector<8x32xf32>
    %122 = arith.subf %104, %121 : vector<8x32xf32>
    %123 = vector.broadcast %120 : vector<8x1xf32> to vector<8x32xf32>
    %124 = arith.mulf %122, %123 : vector<8x32xf32>
    %125 = vector.broadcast %105 : vector<1x32xf32> to vector<8x32xf32>
    %126 = arith.mulf %124, %125 : vector<8x32xf32>
    %127 = vector.broadcast %106 : vector<1x32xf32> to vector<8x32xf32>
    %128 = arith.addf %126, %127 : vector<8x32xf32>
    %129 = arith.truncf %128 : vector<8x32xf32> to vector<8x32xbf16>
    %c0_85 = arith.constant 0 : index
    %c0_86 = arith.constant 0 : index
    %130 = vector.load %arg9[%c0_85, %c0_86] : memref<32x64xbf16, #tpu.memory_space<vmem>>, vector<32x64xbf16>
    %cst_87 = arith.constant dense<0.000000e+00> : vector<8x64xf32>
    %131 = tpu.matmul %129, %130, %cst_87 {dimension_numbers = #tpu.dot_dimension_numbers<[1], [0], [0], [1], [0, 0, 1, 1], [], []>} : vector<8x32xbf16>, vector<32x64xbf16>, vector<8x64xf32> -> vector<8x64xf32>
    %c0_88 = arith.constant 0 : index
    %c0_89 = arith.constant 0 : index
    %132 = vector.load %arg10[%c0_88, %c0_89] : memref<1x64xf32, #tpu.memory_space<vmem>>, vector<1x64xf32>
    %133 = vector.broadcast %132 : vector<1x64xf32> to vector<8x64xf32>
    %134 = arith.addf %131, %133 : vector<8x64xf32>
    %cst_90 = arith.constant 0.000000e+00 : f32
    %135 = vector.broadcast %cst_90 : f32 to vector<8x64xf32>
    %136 = arith.maximumf %134, %135 : vector<8x64xf32>
    %137 = arith.truncf %136 : vector<8x64xf32> to vector<8x64xbf16>
    %c0_91 = arith.constant 0 : index
    %c0_92 = arith.constant 0 : index
    %138 = vector.load %arg11[%c0_91, %c0_92] : memref<64x32xbf16, #tpu.memory_space<vmem>>, vector<64x32xbf16>
    %cst_93 = arith.constant dense<0.000000e+00> : vector<8x32xf32>
    %139 = tpu.matmul %137, %138, %cst_93 {dimension_numbers = #tpu.dot_dimension_numbers<[1], [0], [0], [1], [0, 0, 1, 1], [], []>} : vector<8x64xbf16>, vector<64x32xbf16>, vector<8x32xf32> -> vector<8x32xf32>
    %c0_94 = arith.constant 0 : index
    %c0_95 = arith.constant 0 : index
    %140 = vector.load %arg12[%c0_94, %c0_95] : memref<1x32xf32, #tpu.memory_space<vmem>>, vector<1x32xf32>
    %141 = vector.broadcast %140 : vector<1x32xf32> to vector<8x32xf32>
    %142 = arith.addf %139, %141 : vector<8x32xf32>
    %143 = arith.addf %142, %128 : vector<8x32xf32>
    %c0_96 = arith.constant 0 : index
    %c0_97 = arith.constant 0 : index
    %144 = vector.load %arg13[%c0_96, %c0_97] : memref<1x32xf32, #tpu.memory_space<vmem>>, vector<1x32xf32>
    %c0_98 = arith.constant 0 : index
    %c0_99 = arith.constant 0 : index
    %145 = vector.load %arg14[%c0_98, %c0_99] : memref<1x32xf32, #tpu.memory_space<vmem>>, vector<1x32xf32>
    %cst_100 = arith.constant dense<0.000000e+00> : vector<8xf32>
    %146 = vector.multi_reduction <add>, %143, %cst_100 [1] : vector<8x32xf32> to vector<8xf32>
    %147 = vector.shape_cast %146 : vector<8xf32> to vector<8x1xf32>
    %cst_101 = arith.constant 3.200000e+01 : f32
    %148 = vector.broadcast %cst_101 : f32 to vector<8x1xf32>
    %149 = arith.divf %147, %148 : vector<8x1xf32>
    %150 = vector.broadcast %149 : vector<8x1xf32> to vector<8x32xf32>
    %151 = arith.subf %143, %150 : vector<8x32xf32>
    %152 = arith.mulf %151, %151 : vector<8x32xf32>
    %cst_102 = arith.constant dense<0.000000e+00> : vector<8xf32>
    %153 = vector.multi_reduction <add>, %152, %cst_102 [1] : vector<8x32xf32> to vector<8xf32>
    %154 = vector.shape_cast %153 : vector<8xf32> to vector<8x1xf32>
    %cst_103 = arith.constant 3.200000e+01 : f32
    %155 = vector.broadcast %cst_103 : f32 to vector<8x1xf32>
    %156 = arith.divf %154, %155 : vector<8x1xf32>
    %cst_104 = arith.constant 9.99999974E-6 : f32
    %157 = vector.broadcast %cst_104 : f32 to vector<8x1xf32>
    %158 = arith.addf %156, %157 : vector<8x1xf32>
    %159 = math.rsqrt %158 : vector<8x1xf32>
    %160 = vector.broadcast %149 : vector<8x1xf32> to vector<8x32xf32>
    %161 = arith.subf %143, %160 : vector<8x32xf32>
    %162 = vector.broadcast %159 : vector<8x1xf32> to vector<8x32xf32>
    %163 = arith.mulf %161, %162 : vector<8x32xf32>
    %164 = vector.broadcast %144 : vector<1x32xf32> to vector<8x32xf32>
    %165 = arith.mulf %163, %164 : vector<8x32xf32>
    %166 = vector.broadcast %145 : vector<1x32xf32> to vector<8x32xf32>
    %167 = arith.addf %165, %166 : vector<8x32xf32>
    %168 = vector.shape_cast %167 : vector<8x32xf32> to vector<1x8x32xf32>
    %c0_105 = arith.constant 0 : index
    %c0_106 = arith.constant 0 : index
    %c0_107 = arith.constant 0 : index
    %169 = vector.load %arg15[%c0_105, %c0_106, %c0_107] : memref<1x8x32xf32, #tpu.memory_space<vmem>>, vector<1x8x32xf32>
    tpu.vector_store %arg15[%c0_105, %c0_106, %c0_107], %168 {strides = array<i32>} : memref<1x8x32xf32, #tpu.memory_space<vmem>>, vector<1x8x32xf32>,
    return
  }
  func.func @transform_0(%arg0: i32) -> (i32, i32, i32) {
    %c0_i32 = arith.constant 0 : i32
    %c0_i32_0 = arith.constant 0 : i32
    %c0_i32_1 = arith.constant 0 : i32
    return %arg0, %c0_i32, %c0_i32_0 : i32, i32, i32
  }
  func.func @transform_1(%arg0: i32) -> (i32, i32, i32) {
    %c0_i32 = arith.constant 0 : i32
    %c0_i32_0 = arith.constant 0 : i32
    %c0_i32_1 = arith.constant 0 : i32
    return %arg0, %c0_i32, %c0_i32_0 : i32, i32, i32
  }
  func.func @transform_2(%arg0: i32) -> (i32, i32) {
    %c0_i32 = arith.constant 0 : i32
    %c0_i32_0 = arith.constant 0 : i32
    %c0_i32_1 = arith.constant 0 : i32
    return %c0_i32, %c0_i32_0 : i32, i32
  }
  func.func @transform_3(%arg0: i32) -> (i32, i32) {
    %c0_i32 = arith.constant 0 : i32
    %c0_i32_0 = arith.constant 0 : i32
    %c0_i32_1 = arith.constant 0 : i32
    return %c0_i32, %c0_i32_0 : i32, i32
  }
  func.func @transform_4(%arg0: i32) -> (i32, i32) {
    %c0_i32 = arith.constant 0 : i32
    %c0_i32_0 = arith.constant 0 : i32
    %c0_i32_1 = arith.constant 0 : i32
    return %c0_i32, %c0_i32_0 : i32, i32
  }
  func.func @transform_5(%arg0: i32) -> (i32, i32) {
    %c0_i32 = arith.constant 0 : i32
    %c0_i32_0 = arith.constant 0 : i32
    %c0_i32_1 = arith.constant 0 : i32
    return %c0_i32, %c0_i32_0 : i32, i32
  }
  func.func @transform_6(%arg0: i32) -> (i32, i32) {
    %c0_i32 = arith.constant 0 : i32
    %c0_i32_0 = arith.constant 0 : i32
    %c0_i32_1 = arith.constant 0 : i32
    return %c0_i32, %c0_i32_0 : i32, i32
  }
  func.func @transform_7(%arg0: i32) -> (i32, i32) {
    %c0_i32 = arith.constant 0 : i32
    %c0_i32_0 = arith.constant 0 : i32
    %c0_i32_1 = arith.constant 0 : i32
    return %c0_i32, %c0_i32_0 : i32, i32
  }
  func.func @transform_8(%arg0: i32) -> (i32, i32) {
    %c0_i32 = arith.constant 0 : i32
    %c0_i32_0 = arith.constant 0 : i32
    %c0_i32_1 = arith.constant 0 : i32
    return %c0_i32, %c0_i32_0 : i32, i32
  }
  func.func @transform_9(%arg0: i32) -> (i32, i32) {
    %c0_i32 = arith.constant 0 : i32
    %c0_i32_0 = arith.constant 0 : i32
    %c0_i32_1 = arith.constant 0 : i32
    return %c0_i32, %c0_i32_0 : i32, i32
  }
  func.func @transform_10(%arg0: i32) -> (i32, i32) {
    %c0_i32 = arith.constant 0 : i32
    %c0_i32_0 = arith.constant 0 : i32
    %c0_i32_1 = arith.constant 0 : i32
    return %c0_i32, %c0_i32_0 : i32, i32
  }
  func.func @transform_11(%arg0: i32) -> (i32, i32) {
    %c0_i32 = arith.constant 0 : i32
    %c0_i32_0 = arith.constant 0 : i32
    %c0_i32_1 = arith.constant 0 : i32
    return %c0_i32, %c0_i32_0 : i32, i32
  }
  func.func @transform_12(%arg0: i32) -> (i32, i32) {
    %c0_i32 = arith.constant 0 : i32
    %c0_i32_0 = arith.constant 0 : i32
    %c0_i32_1 = arith.constant 0 : i32
    return %c0_i32, %c0_i32_0 : i32, i32
  }
  func.func @transform_13(%arg0: i32) -> (i32, i32) {
    %c0_i32 = arith.constant 0 : i32
    %c0_i32_0 = arith.constant 0 : i32
    %c0_i32_1 = arith.constant 0 : i32
    return %c0_i32, %c0_i32_0 : i32, i32
  }
  func.func @transform_14(%arg0: i32) -> (i32, i32, i32) {
    %c0_i32 = arith.constant 0 : i32
    %c0_i32_0 = arith.constant 0 : i32
    %c0_i32_1 = arith.constant 0 : i32
    return %arg0, %c0_i32, %c0_i32_0 : i32, i32, i32
  }
}

</mosaic_0001>

<llo_original>
// kernel: tpu_custom_call.1
$region0: #{tpu_custom_call.1}
  #allocation0 [shape = 'u32[]', space=smem, size = 0x4, offset = 0x4, fixed_abs, tag = 'smem constant byte address 0x4 - core index']
  #allocation1 [shape = 'u32[144,128]{1,0:T(1,128)}', space=vmem, size = 0x12000, scoped, tag = 'internal scratch']
  #allocation2 [shape = 'bf16[1,8,96]{2,1,0:T(8,128)(2,1)}', space=vmem, size = 0x800, scoped, tag = 'scratch operand']
  #allocation3 [shape = 'bf16[1,8,32]{2,1,0:T(8,128)(2,1)}', space=vmem, size = 0x800, scoped, tag = 'scratch operand']
  %s0 = inlined_call_operand.vmem [shape: f32[2,8,32], index: 0, kind: input, shape index: {}]
  %s1 = inlined_call_operand.hbm [shape: f32[2,1,8], index: 1, kind: input, shape index: {}]
  %s2 = inlined_call_operand.vmem [shape: bf16[32,96], index: 2, kind: input, shape index: {}]
  %s3 = inlined_call_operand.vmem [shape: f32[1,96], index: 3, kind: input, shape index: {}]
  %s4 = inlined_call_operand.vmem [shape: bf16[32,32], index: 4, kind: input, shape index: {}]
  %s5 = inlined_call_operand.vmem [shape: f32[1,32], index: 5, kind: input, shape index: {}]
  %s6 = inlined_call_operand.hbm [shape: f32[1,32], index: 6, kind: input, shape index: {}]
  %s7 = inlined_call_operand.hbm [shape: f32[1,32], index: 7, kind: input, shape index: {}]
  %s8 = inlined_call_operand.hbm [shape: bf16[32,64], index: 8, kind: input, shape index: {}]
  %s9 = inlined_call_operand.hbm [shape: f32[1,64], index: 9, kind: input, shape index: {}]
  %s10 = inlined_call_operand.vmem [shape: bf16[64,32], index: 10, kind: input, shape index: {}]
  %s11 = inlined_call_operand.vmem [shape: f32[1,32], index: 11, kind: input, shape index: {}]
  %s12 = inlined_call_operand.vmem [shape: f32[1,32], index: 12, kind: input, shape index: {}]
  %s13 = inlined_call_operand.vmem [shape: f32[1,32], index: 13, kind: input, shape index: {}]
  %s14 = inlined_call_operand.hbm [shape: f32[2,8,32], index: 14, kind: output, shape index: {}]
  %s15 = sld [smem:[#allocation0]]
  $region109: #{tpu_custom_call.1} parent=0
    _
  %s17 = ssub.s32 1, %s15
  %s18 = scalar_select 0, %s17, %s15
  $region1: #{tpu_custom_call.1} parent=0
    #allocation4 [shape = 'u8[1024]{0}', space=vmem, size = 0x400, scoped, tag = 'input window, operand 1']
    #allocation5 [shape = 's32[2]{0}', space=sflag, size = 0x8, scoped, tag = 'scoped memory for tpu_custom_call.1']
    #allocation6 [shape = 's32[2]{0}', space=sflag, size = 0x8, scoped, tag = 'scoped memory for tpu_custom_call.1']
    #allocation7 [shape = 'u8[512]{0}', space=vmem, size = 0x400, scoped, tag = 'input window, operand 6, single buffered']
    #allocation8 [shape = 's32[1]{0}', space=sflag, size = 0x4, scoped, tag = 'scoped memory for tpu_custom_call.1']
    #allocation9 [shape = 'u8[512]{0}', space=vmem, size = 0x400, scoped, tag = 'input window, operand 7, single buffered']
    #allocation10 [shape = 'u8[8192]{0}', space=vmem, size = 0x2000, scoped, tag = 'input window, operand 8, single buffered']
    #allocation11 [shape = 's32[1]{0}', space=sflag, size = 0x4, scoped, tag = 'scoped memory for tpu_custom_call.1']
    #allocation12 [shape = 'u8[512]{0}', space=vmem, size = 0x400, scoped, tag = 'input window, operand 9, single buffered']
    #allocation13 [shape = 'u8[8192]{0}', space=vmem, size = 0x2000, scoped, tag = 'output window, operand 0']
    %19 = vsyncpa [#allocation5], 0
    %s20 = scalar_lea.sflag [#allocation5], 1
    %21 = vsyncpa %s20, 0
    %22 = vsyncpa [#allocation8], 0
    %23 = vsyncpa [#allocation11], 0
    %24 = vsyncpa [#allocation6], 0
    %s25 = scalar_lea.sflag [#allocation6], 1
    %26 = vsyncpa %s25, 0
    loop: start=0, step=1, limit=4
    $region2: #{tpu_custom_call.1} parent=1 // loop_pre_header
      _
    $region3: #{tpu_custom_call.1} parent=1 // loop_header
      %s28 = sphi 0, %s32
      %p29 = scmp.ge.s32.totalorder %s28, 4
      %s38 = sphi 0, %s40
      %s41 = sphi 0, %s38
      %s42 = sphi 0, %s41
      %s58 = sphi 0, %s42
      %s64 = sphi 0, %s66
      %s67 = sphi 0, %s64
      %s68 = sphi 0, %s67
      %s84 = sphi 0, %s68
      %s88 = sphi 0, %s88
      %s90 = sphi 0, %s88
      %s91 = sphi 0, %s90
      %s105 = sphi 0, %s91
      %s109 = sphi 0, %s109
      %s111 = sphi 0, %s109
      %s112 = sphi 0, %s111
      %s126 = sphi 0, %s112
      %s130 = sphi 0, %s130
      %s132 = sphi 0, %s130
      %s133 = sphi 0, %s132
      %s147 = sphi 0, %s133
      %s151 = sphi 0, %s151
      %s153 = sphi 0, %s151
      %s154 = sphi 0, %s153
      %s168 = sphi 0, %s154
      %s172 = sphi 0, %s172
      %s174 = sphi 0, %s172
      %s175 = sphi 0, %s174
      %s189 = sphi 0, %s175
      %s193 = sphi 0, %s193
      %s195 = sphi 0, %s193
      %s196 = sphi 0, %s195
      %s210 = sphi 0, %s196
      %s214 = sphi 0, %s214
      %s216 = sphi 0, %s214
      %s217 = sphi 0, %s216
      %s231 = sphi 0, %s217
      %s235 = sphi 0, %s235
      %s237 = sphi 0, %s235
      %s238 = sphi 0, %s237
      %s252 = sphi 0, %s238
      %s256 = sphi 0, %s256
      %s258 = sphi 0, %s256
      %s259 = sphi 0, %s258
      %s273 = sphi 0, %s259
      %s277 = sphi 0, %s277
      %s279 = sphi 0, %s277
      %s280 = sphi 0, %s279
      %s294 = sphi 0, %s280
      %s298 = sphi 0, %s298
      %s300 = sphi 0, %s298
      %s301 = sphi 0, %s300
      %s315 = sphi 0, %s301
      %s319 = sphi 0, %s319
      %s321 = sphi 0, %s319
      %s322 = sphi 0, %s321
      %s336 = sphi 0, %s322
      %s342 = sphi 0, %s344
      %s345 = sphi 0, %s342
      %s346 = sphi 0, %s345
      %s362 = sphi 0, %s346
    $region4: #{tpu_custom_call.1} parent=1 // loop_header_branch
      %31 = sbr.rel (%p29) target = $region8
    $region5: #{tpu_custom_call.1} parent=1 // loop_body
      %s33 = ssub.s32 %s28, 1
      %s34 = ssub.s32 %s28, 2
      %s35 = sadd.s32 %s28, 1
      %s36 = ssub.s32 %s28, %s35
      %p37 = scmp.eq.s32.totalorder %s36, 0
      %s39 = sadd.s32 %s38, 1
      %s40 = scalar_select %p37, %s38, %s39
      %p43 = pneg %p37
      %p44 = scmp.eq.s32.totalorder %s28, 1
      %p45 = por %p43, %p44
      %p46 = scmp.ne.s32.totalorder %s38, %s41
      %p47 = scmp.eq.s32.totalorder %s28, 0
      %p48 = por %p46, %p47
      %p49 = scmp.ne.s32.totalorder %s38, %s41
      %p50 = scmp.eq.s32.totalorder %s33, 1
      %p51 = por %p49, %p50
      %p52 = scmp.ne.s32.totalorder %s41, %s42
      %p53 = scmp.eq.s32.totalorder %s33, 0
      %p54 = por %p52, %p53
      %p55 = scmp.ne.s32.totalorder %s41, %s42
      %p56 = scmp.eq.s32.totalorder %s34, 1
      %p57 = por %p55, %p56
      %p59 = scmp.ne.s32.totalorder %s42, %s58
      %p60 = scmp.eq.s32.totalorder %s34, 0
      %p61 = por %p59, %p60
      %s62 = ssub.s32 %s28, %s35
      %p63 = scmp.eq.s32.totalorder %s62, 0
      %s65 = sadd.s32 %s64, 1
      %s66 = scalar_select %p63, %s64, %s65
      %p69 = pneg %p63
      %p70 = scmp.eq.s32.totalorder %s28, 1
      %p71 = por %p69, %p70
      %p72 = scmp.ne.s32.totalorder %s64, %s67
      %p73 = scmp.eq.s32.totalorder %s28, 0
      %p74 = por %p72, %p73
      %p75 = scmp.ne.s32.totalorder %s64, %s67
      %p76 = scmp.eq.s32.totalorder %s33, 1
      %p77 = por %p75, %p76
      %p78 = scmp.ne.s32.totalorder %s67, %s68
      %p79 = scmp.eq.s32.totalorder %s33, 0
      %p80 = por %p78, %p79
      %p81 = scmp.ne.s32.totalorder %s67, %s68
      %p82 = scmp.eq.s32.totalorder %s34, 1
      %p83 = por %p81, %p82
      %p85 = scmp.ne.s32.totalorder %s68, %s84
      %p86 = scmp.eq.s32.totalorder %s34, 0
      %p87 = por %p85, %p86
      %s89 = sadd.s32 %s88, 1
      %p92 = scmp.eq.s32.totalorder %s28, 1
      %p93 = scmp.ne.s32.totalorder %s88, %s90
      %p94 = scmp.eq.s32.totalorder %s28, 0
      %p95 = por %p93, %p94
      %p96 = scmp.ne.s32.totalorder %s88, %s90
      %p97 = scmp.eq.s32.totalorder %s33, 1
      %p98 = por %p96, %p97
      %p99 = scmp.ne.s32.totalorder %s90, %s91
      %p100 = scmp.eq.s32.totalorder %s33, 0
      %p101 = por %p99, %p100
      %p102 = scmp.ne.s32.totalorder %s90, %s91
      %p103 = scmp.eq.s32.totalorder %s34, 1
      %p104 = por %p102, %p103
      %p106 = scmp.ne.s32.totalorder %s91, %s105
      %p107 = scmp.eq.s32.totalorder %s34, 0
      %p108 = por %p106, %p107
      %s110 = sadd.s32 %s109, 1
      %p113 = scmp.eq.s32.totalorder %s28, 1
      %p114 = scmp.ne.s32.totalorder %s109, %s111
      %p115 = scmp.eq.s32.totalorder %s28, 0
      %p116 = por %p114, %p115
      %p117 = scmp.ne.s32.totalorder %s109, %s111
      %p118 = scmp.eq.s32.totalorder %s33, 1
      %p119 = por %p117, %p118
      %p120 = scmp.ne.s32.totalorder %s111, %s112
      %p121 = scmp.eq.s32.totalorder %s33, 0
      %p122 = por %p120, %p121
      %p123 = scmp.ne.s32.totalorder %s111, %s112
      %p124 = scmp.eq.s32.totalorder %s34, 1
      %p125 = por %p123, %p124
      %p127 = scmp.ne.s32.totalorder %s112, %s126
      %p128 = scmp.eq.s32.totalorder %s34, 0
      %p129 = por %p127, %p128
      %s131 = sadd.s32 %s130, 1
      %p134 = scmp.eq.s32.totalorder %s28, 1
      %p135 = scmp.ne.s32.totalorder %s130, %s132
      %p136 = scmp.eq.s32.totalorder %s28, 0
      %p137 = por %p135, %p136
      %p138 = scmp.ne.s32.totalorder %s130, %s132
      %p139 = scmp.eq.s32.totalorder %s33, 1
      %p140 = por %p138, %p139
      %p141 = scmp.ne.s32.totalorder %s132, %s133
      %p142 = scmp.eq.s32.totalorder %s33, 0
      %p143 = por %p141, %p142
      %p144 = scmp.ne.s32.totalorder %s132, %s133
      %p145 = scmp.eq.s32.totalorder %s34, 1
      %p146 = por %p144, %p145
      %p148 = scmp.ne.s32.totalorder %s133, %s147
      %p149 = scmp.eq.s32.totalorder %s34, 0
      %p150 = por %p148, %p149
      %s152 = sadd.s32 %s151, 1
      %p155 = scmp.eq.s32.totalorder %s28, 1
      %p156 = scmp.ne.s32.totalorder %s151, %s153
      %p157 = scmp.eq.s32.totalorder %s28, 0
      %p158 = por %p156, %p157
      %p159 = scmp.ne.s32.totalorder %s151, %s153
      %p160 = scmp.eq.s32.totalorder %s33, 1
      %p161 = por %p159, %p160
      %p162 = scmp.ne.s32.totalorder %s153, %s154
      %p163 = scmp.eq.s32.totalorder %s33, 0
      %p164 = por %p162, %p163
      %p165 = scmp.ne.s32.totalorder %s153, %s154
      %p166 = scmp.eq.s32.totalorder %s34, 1
      %p167 = por %p165, %p166
      %p169 = scmp.ne.s32.totalorder %s154, %s168
      %p170 = scmp.eq.s32.totalorder %s34, 0
      %p171 = por %p169, %p170
      %s173 = sadd.s32 %s172, 1
      %p176 = scmp.eq.s32.totalorder %s28, 1
      %p177 = scmp.ne.s32.totalorder %s172, %s174
      %p178 = scmp.eq.s32.totalorder %s28, 0
      %p179 = por %p177, %p178
      %p180 = scmp.ne.s32.totalorder %s172, %s174
      %p181 = scmp.eq.s32.totalorder %s33, 1
      %p182 = por %p180, %p181
      %p183 = scmp.ne.s32.totalorder %s174, %s175
      %p184 = scmp.eq.s32.totalorder %s33, 0
      %p185 = por %p183, %p184
      %p186 = scmp.ne.s32.totalorder %s174, %s175
      %p187 = scmp.eq.s32.totalorder %s34, 1
      %p188 = por %p186, %p187
      %p190 = scmp.ne.s32.totalorder %s175, %s189
      %p191 = scmp.eq.s32.totalorder %s34, 0
      %p192 = por %p190, %p191
      %s194 = sadd.s32 %s193, 1
      %p197 = scmp.eq.s32.totalorder %s28, 1
      %p198 = scmp.ne.s32.totalorder %s193, %s195
      %p199 = scmp.eq.s32.totalorder %s28, 0
      %p200 = por %p198, %p199
      %p201 = scmp.ne.s32.totalorder %s193, %s195
      %p202 = scmp.eq.s32.totalorder %s33, 1
      %p203 = por %p201, %p202
      %p204 = scmp.ne.s32.totalorder %s195, %s196
      %p205 = scmp.eq.s32.totalorder %s33, 0
      %p206 = por %p204, %p205
      %p207 = scmp.ne.s32.totalorder %s195, %s196
      %p208 = scmp.eq.s32.totalorder %s34, 1
      %p209 = por %p207, %p208
      %p211 = scmp.ne.s32.totalorder %s196, %s210
      %p212 = scmp.eq.s32.totalorder %s34, 0
      %p213 = por %p211, %p212
      %s215 = sadd.s32 %s214, 1
      %p218 = scmp.eq.s32.totalorder %s28, 1
      %p219 = scmp.ne.s32.totalorder %s214, %s216
      %p220 = scmp.eq.s32.totalorder %s28, 0
      %p221 = por %p219, %p220
      %p222 = scmp.ne.s32.totalorder %s214, %s216
      %p223 = scmp.eq.s32.totalorder %s33, 1
      %p224 = por %p222, %p223
      %p225 = scmp.ne.s32.totalorder %s216, %s217
      %p226 = scmp.eq.s32.totalorder %s33, 0
      %p227 = por %p225, %p226
      %p228 = scmp.ne.s32.totalorder %s216, %s217
      %p229 = scmp.eq.s32.totalorder %s34, 1
      %p230 = por %p228, %p229
      %p232 = scmp.ne.s32.totalorder %s217, %s231
      %p233 = scmp.eq.s32.totalorder %s34, 0
      %p234 = por %p232, %p233
      %s236 = sadd.s32 %s235, 1
      %p239 = scmp.eq.s32.totalorder %s28, 1
      %p240 = scmp.ne.s32.totalorder %s235, %s237
      %p241 = scmp.eq.s32.totalorder %s28, 0
      %p242 = por %p240, %p241
      %p243 = scmp.ne.s32.totalorder %s235, %s237
      %p244 = scmp.eq.s32.totalorder %s33, 1
      %p245 = por %p243, %p244
      %p246 = scmp.ne.s32.totalorder %s237, %s238
      %p247 = scmp.eq.s32.totalorder %s33, 0
      %p248 = por %p246, %p247
      %p249 = scmp.ne.s32.totalorder %s237, %s238
      %p250 = scmp.eq.s32.totalorder %s34, 1
      %p251 = por %p249, %p250
      %p253 = scmp.ne.s32.totalorder %s238, %s252
      %p254 = scmp.eq.s32.totalorder %s34, 0
      %p255 = por %p253, %p254
      %s257 = sadd.s32 %s256, 1
      %p260 = scmp.eq.s32.totalorder %s28, 1
      %p261 = scmp.ne.s32.totalorder %s256, %s258
      %p262 = scmp.eq.s32.totalorder %s28, 0
      %p263 = por %p261, %p262
      %p264 = scmp.ne.s32.totalorder %s256, %s258
      %p265 = scmp.eq.s32.totalorder %s33, 1
      %p266 = por %p264, %p265
      %p267 = scmp.ne.s32.totalorder %s258, %s259
      %p268 = scmp.eq.s32.totalorder %s33, 0
      %p269 = por %p267, %p268
      %p270 = scmp.ne.s32.totalorder %s258, %s259
      %p271 = scmp.eq.s32.totalorder %s34, 1
      %p272 = por %p270, %p271
      %p274 = scmp.ne.s32.totalorder %s259, %s273
      %p275 = scmp.eq.s32.totalorder %s34, 0
      %p276 = por %p274, %p275
      %s278 = sadd.s32 %s277, 1
      %p281 = scmp.eq.s32.totalorder %s28, 1
      %p282 = scmp.ne.s32.totalorder %s277, %s279
      %p283 = scmp.eq.s32.totalorder %s28, 0
      %p284 = por %p282, %p283
      %p285 = scmp.ne.s32.totalorder %s277, %s279
      %p286 = scmp.eq.s32.totalorder %s33, 1
      %p287 = por %p285, %p286
      %p288 = scmp.ne.s32.totalorder %s279, %s280
      %p289 = scmp.eq.s32.totalorder %s33, 0
      %p290 = por %p288, %p289
      %p291 = scmp.ne.s32.totalorder %s279, %s280
      %p292 = scmp.eq.s32.totalorder %s34, 1
      %p293 = por %p291, %p292
      %p295 = scmp.ne.s32.totalorder %s280, %s294
      %p296 = scmp.eq.s32.totalorder %s34, 0
      %p297 = por %p295, %p296
      %s299 = sadd.s32 %s298, 1
      %p302 = scmp.eq.s32.totalorder %s28, 1
      %p303 = scmp.ne.s32.totalorder %s298, %s300
      %p304 = scmp.eq.s32.totalorder %s28, 0
      %p305 = por %p303, %p304
      %p306 = scmp.ne.s32.totalorder %s298, %s300
      %p307 = scmp.eq.s32.totalorder %s33, 1
      %p308 = por %p306, %p307
      %p309 = scmp.ne.s32.totalorder %s300, %s301
      %p310 = scmp.eq.s32.totalorder %s33, 0
      %p311 = por %p309, %p310
      %p312 = scmp.ne.s32.totalorder %s300, %s301
      %p313 = scmp.eq.s32.totalorder %s34, 1
      %p314 = por %p312, %p313
      %p316 = scmp.ne.s32.totalorder %s301, %s315
      %p317 = scmp.eq.s32.totalorder %s34, 0
      %p318 = por %p316, %p317
      %s320 = sadd.s32 %s319, 1
      %p323 = scmp.eq.s32.totalorder %s28, 1
      %p324 = scmp.ne.s32.totalorder %s319, %s321
      %p325 = scmp.eq.s32.totalorder %s28, 0
      %p326 = por %p324, %p325
      %p327 = scmp.ne.s32.totalorder %s319, %s321
      %p328 = scmp.eq.s32.totalorder %s33, 1
      %p329 = por %p327, %p328
      %p330 = scmp.ne.s32.totalorder %s321, %s322
      %p331 = scmp.eq.s32.totalorder %s33, 0
      %p332 = por %p330, %p331
      %p333 = scmp.ne.s32.totalorder %s321, %s322
      %p334 = scmp.eq.s32.totalorder %s34, 1
      %p335 = por %p333, %p334
      %p337 = scmp.ne.s32.totalorder %s322, %s336
      %p338 = scmp.eq.s32.totalorder %s34, 0
      %p339 = por %p337, %p338
      %s340 = ssub.s32 %s28, %s35
      %p341 = scmp.eq.s32.totalorder %s340, 0
      %s343 = sadd.s32 %s342, 1
      %s344 = scalar_select %p341, %s342, %s343
      %p347 = pneg %p341
      %p348 = scmp.eq.s32.totalorder %s28, 1
      %p349 = por %p347, %p348
      %p350 = scmp.ne.s32.totalorder %s342, %s345
      %p351 = scmp.eq.s32.totalorder %s28, 0
      %p352 = por %p350, %p351
      %p353 = scmp.ne.s32.totalorder %s342, %s345
      %p354 = scmp.eq.s32.totalorder %s33, 1
      %p355 = por %p353, %p354
      %p356 = scmp.ne.s32.totalorder %s345, %s346
      %p357 = scmp.eq.s32.totalorder %s33, 0
      %p358 = por %p356, %p357
      %p359 = scmp.ne.s32.totalorder %s345, %s346
      %p360 = scmp.eq.s32.totalorder %s34, 1
      %p361 = por %p359, %p360
      %p363 = scmp.ne.s32.totalorder %s346, %s362
      %p364 = scmp.eq.s32.totalorder %s34, 0
      %p365 = por %p363, %p364
      %p366 = scmp.le.s32.totalorder 1, %s28
      %p367 = scmp.lt.s32.totalorder %s28, 3
      %p368 = pnand %p366, %p367
      %p369 = pneg %p368
      // Predicated region
      $region9: #{tpu_custom_call.1} parent=5 // pred_check
        _
      $region10: #{tpu_custom_call.1} parent=5 // pred_check_branch
        %371 = sbr.rel (%p368) target = $region12
      $region11: #{tpu_custom_call.1} parent=5 // pred_region
        %s372 = ssub.s32 %s28, 1
        // Predicated region
        $region13: #{tpu_custom_call.1} parent=11 // pred_check
          %p373 = pneg %p101
        $region14: #{tpu_custom_call.1} parent=11 // pred_check_branch
          %375 = sbr.rel (%p373) target = $region16
        $region15: #{tpu_custom_call.1} parent=11 // pred_region
          _
        $region16: #{tpu_custom_call.1} parent=11 // pred_fallthru
          _
        // Predicated region
        $region17: #{tpu_custom_call.1} parent=11 // pred_check
          %p376 = pneg %p122
        $region18: #{tpu_custom_call.1} parent=11 // pred_check_branch
          %378 = sbr.rel (%p376) target = $region20
        $region19: #{tpu_custom_call.1} parent=11 // pred_region
          _
        $region20: #{tpu_custom_call.1} parent=11 // pred_fallthru
          _
        // Predicated region
        $region21: #{tpu_custom_call.1} parent=11 // pred_check
          %p379 = pneg %p143
        $region22: #{tpu_custom_call.1} parent=11 // pred_check_branch
          %381 = sbr.rel (%p379) target = $region24
        $region23: #{tpu_custom_call.1} parent=11 // pred_region
          _
        $region24: #{tpu_custom_call.1} parent=11 // pred_fallthru
          _
        // Predicated region
        $region25: #{tpu_custom_call.1} parent=11 // pred_check
          %p382 = pneg %p164
        $region26: #{tpu_custom_call.1} parent=11 // pred_check_branch
          %384 = sbr.rel (%p382) target = $region28
        $region27: #{tpu_custom_call.1} parent=11 // pred_region
          _
        $region28: #{tpu_custom_call.1} parent=11 // pred_fallthru
          _
        // Predicated region
        $region29: #{tpu_custom_call.1} parent=11 // pred_check
          %p385 = pneg %p185
        $region30: #{tpu_custom_call.1} parent=11 // pred_check_branch
          %387 = sbr.rel (%p385) target = $region32
        $region31: #{tpu_custom_call.1} parent=11 // pred_region
          %s389 = ssub.s32 16, 16
          %390 = vsyncadd [#allocation8], %s389
          %s392 = sshll.u32 [#allocation7], 4
          %s393 = int_to_ptr.vmem [resolvable:$true] %s392
          %395 = dma.hbm_to_vmem [thread:$0]  %s6, 16, %s393, [#allocation8]
        $region32: #{tpu_custom_call.1} parent=11 // pred_fallthru
          _
        // Predicated region
        $region33: #{tpu_custom_call.1} parent=11 // pred_check
          %p396 = pneg %p206
        $region34: #{tpu_custom_call.1} parent=11 // pred_check_branch
          %398 = sbr.rel (%p396) target = $region36
        $region35: #{tpu_custom_call.1} parent=11 // pred_region
          %s400 = ssub.s32 16, 16
          %401 = vsyncadd [#allocation8], %s400
          %s403 = sshll.u32 [#allocation9], 4
          %s404 = int_to_ptr.vmem [resolvable:$true] %s403
          %406 = dma.hbm_to_vmem [thread:$0]  %s7, 16, %s404, [#allocation8]
        $region36: #{tpu_custom_call.1} parent=11 // pred_fallthru
          _
        // Predicated region
        $region37: #{tpu_custom_call.1} parent=11 // pred_check
          %p407 = pneg %p227
        $region38: #{tpu_custom_call.1} parent=11 // pred_check_branch
          %409 = sbr.rel (%p407) target = $region40
        $region39: #{tpu_custom_call.1} parent=11 // pred_region
          %s411 = ssub.s32 256, 256
          %412 = vsyncadd [#allocation11], %s411
          %s413 = sshll.u32 [#allocation10], 4
          %s414 = int_to_ptr.vmem [resolvable:$true] %s413
          %419 = dma.hbm_to_vmem [thread:$0]  %s8, 256, %s414, [#allocation11], 64, 64, 4
        $region40: #{tpu_custom_call.1} parent=11 // pred_fallthru
          _
        // Predicated region
        $region41: #{tpu_custom_call.1} parent=11 // pred_check
          %p420 = pneg %p248
        $region42: #{tpu_custom_call.1} parent=11 // pred_check_branch
          %422 = sbr.rel (%p420) target = $region44
        $region43: #{tpu_custom_call.1} parent=11 // pred_region
          %s424 = ssub.s32 16, 16
          %425 = vsyncadd [#allocation11], %s424
          %s427 = sshll.u32 [#allocation12], 4
          %s428 = int_to_ptr.vmem [resolvable:$true] %s427
          %430 = dma.hbm_to_vmem [thread:$0]  %s9, 16, %s428, [#allocation11]
        $region44: #{tpu_custom_call.1} parent=11 // pred_fallthru
          _
        // Predicated region
        $region45: #{tpu_custom_call.1} parent=11 // pred_check
          %p431 = pneg %p269
        $region46: #{tpu_custom_call.1} parent=11 // pred_check_branch
          %433 = sbr.rel (%p431) target = $region48
        $region47: #{tpu_custom_call.1} parent=11 // pred_region
          _
        $region48: #{tpu_custom_call.1} parent=11 // pred_fallthru
          _
        // Predicated region
        $region49: #{tpu_custom_call.1} parent=11 // pred_check
          %p434 = pneg %p290
        $region50: #{tpu_custom_call.1} parent=11 // pred_check_branch
          %436 = sbr.rel (%p434) target = $region52
        $region51: #{tpu_custom_call.1} parent=11 // pred_region
          _
        $region52: #{tpu_custom_call.1} parent=11 // pred_fallthru
          _
        // Predicated region
        $region53: #{tpu_custom_call.1} parent=11 // pred_check
          %p437 = pneg %p311
        $region54: #{tpu_custom_call.1} parent=11 // pred_check_branch
          %439 = sbr.rel (%p437) target = $region56
        $region55: #{tpu_custom_call.1} parent=11 // pred_region
          _
        $region56: #{tpu_custom_call.1} parent=11 // pred_fallthru
          _
        // Predicated region
        $region57: #{tpu_custom_call.1} parent=11 // pred_check
          %p440 = pneg %p332
        $region58: #{tpu_custom_call.1} parent=11 // pred_check_branch
          %442 = sbr.rel (%p440) target = $region60
        $region59: #{tpu_custom_call.1} parent=11 // pred_region
          _
        $region60: #{tpu_custom_call.1} parent=11 // pred_fallthru
          _
      $region12: #{tpu_custom_call.1} parent=5 // pred_fallthru
        _
      %p443 = scmp.lt.s32.totalorder %s28, 2
      // Predicated region
      $region61: #{tpu_custom_call.1} parent=5 // pred_check
        %p444 = pneg %p443
      $region62: #{tpu_custom_call.1} parent=5 // pred_check_branch
        %446 = sbr.rel (%p444) target = $region64
      $region63: #{tpu_custom_call.1} parent=5 // pred_region
        // Predicated region
        $region65: #{tpu_custom_call.1} parent=63 // pred_check
          %p447 = pneg %p48
        $region66: #{tpu_custom_call.1} parent=63 // pred_check_branch
          %449 = sbr.rel (%p447) target = $region68
        $region67: #{tpu_custom_call.1} parent=63 // pred_region
          %p450 = scmp.lt.s32.totalorder %s28, 1
          %s451 = scalar_select %p450, %s28, 1
          %s452 = smul.addr %s451, 8
          %s453 = scalar_lea.vmem %s0, %s452
        $region68: #{tpu_custom_call.1} parent=63 // pred_fallthru
          _
        // Predicated region
        $region69: #{tpu_custom_call.1} parent=63 // pred_check
          %p454 = pneg %p74
        $region70: #{tpu_custom_call.1} parent=63 // pred_check_branch
          %456 = sbr.rel (%p454) target = $region72
        $region71: #{tpu_custom_call.1} parent=63 // pred_region
          %s457 = sand.u32 %s64, 1
          %s458 = scalar_lea.sflag [#allocation5], %s457
          %s459 = sand.u32 %s64, 1
          %s460 = scalar_lea.vmem [#allocation4], %s459
          %s462 = ssub.s32 16, 16
          %463 = vsyncadd %s458, %s462
          %s464 = smul.addr %s28, 16
          %s465 = scalar_lea.hbm %s1, %s464
          %s467 = sshll.u32 %s460, 4
          %s468 = int_to_ptr.vmem [resolvable:$true] %s467
          %470 = dma.hbm_to_vmem [thread:$0]  %s465, 16, %s468, %s458
        $region72: #{tpu_custom_call.1} parent=63 // pred_fallthru
          _
      $region64: #{tpu_custom_call.1} parent=5 // pred_fallthru
        _
      %p471 = scmp.le.s32.totalorder 1, %s28
      %p472 = scmp.lt.s32.totalorder %s28, 3
      %p473 = pnand %p471, %p472
      %p474 = pneg %p473
      // Predicated region
      $region73: #{tpu_custom_call.1} parent=5 // pred_check
        _
      $region74: #{tpu_custom_call.1} parent=5 // pred_check_branch
        %476 = sbr.rel (%p473) target = $region76
      $region75: #{tpu_custom_call.1} parent=5 // pred_region
        %s477 = ssub.s32 %s28, 1
        %s478 = sand.u32 %s67, 1
        %s479 = scalar_lea.sflag [#allocation5], %s478
        %s480 = sand.u32 %s67, 1
        %s481 = scalar_lea.vmem [#allocation4], %s480
        // Predicated region
        $region77: #{tpu_custom_call.1} parent=75 // pred_check
          %p482 = pneg %p80
        $region78: #{tpu_custom_call.1} parent=75 // pred_check_branch
          %484 = sbr.rel (%p482) target = $region80
        $region79: #{tpu_custom_call.1} parent=75 // pred_region
          %485 = dma.done %s479, 16
        $region80: #{tpu_custom_call.1} parent=75 // pred_fallthru
          _
        // Predicated region
        $region81: #{tpu_custom_call.1} parent=75 // pred_check
          %p486 = pneg %p185
        $region82: #{tpu_custom_call.1} parent=75 // pred_check_branch
          %488 = sbr.rel (%p486) target = $region84
        $region83: #{tpu_custom_call.1} parent=75 // pred_region
          %489 = dma.done [#allocation8], 16
        $region84: #{tpu_custom_call.1} parent=75 // pred_fallthru
          _
        // Predicated region
        $region85: #{tpu_custom_call.1} parent=75 // pred_check
          %p490 = pneg %p206
        $region86: #{tpu_custom_call.1} parent=75 // pred_check_branch
          %492 = sbr.rel (%p490) target = $region88
        $region87: #{tpu_custom_call.1} parent=75 // pred_region
          %493 = dma.done [#allocation8], 16
        $region88: #{tpu_custom_call.1} parent=75 // pred_fallthru
          _
        // Predicated region
        $region89: #{tpu_custom_call.1} parent=75 // pred_check
          %p494 = pneg %p227
        $region90: #{tpu_custom_call.1} parent=75 // pred_check_branch
          %496 = sbr.rel (%p494) target = $region92
        $region91: #{tpu_custom_call.1} parent=75 // pred_region
          %497 = dma.done [#allocation11], 256
        $region92: #{tpu_custom_call.1} parent=75 // pred_fallthru
          _
        // Predicated region
        $region93: #{tpu_custom_call.1} parent=75 // pred_check
          %p498 = pneg %p248
        $region94: #{tpu_custom_call.1} parent=75 // pred_check_branch
          %500 = sbr.rel (%p498) target = $region96
        $region95: #{tpu_custom_call.1} parent=75 // pred_region
          %501 = dma.done [#allocation11], 16
        $region96: #{tpu_custom_call.1} parent=75 // pred_fallthru
          _
        %p502 = scmp.lt.s32.totalorder %s33, 1
        %s503 = scalar_select %p502, %s33, 1
        %s504 = smul.addr %s503, 8
        %s505 = scalar_lea.vmem %s0, %s504
        %p506 = pneg %p54
        %p507 = pneg %p51
        %s508 = sand.u32 %s67, 1
        %s509 = scalar_lea.sflag [#allocation5], %s508
        %s510 = sand.u32 %s67, 1
        %s511 = scalar_lea.vmem [#allocation4], %s510
        %p512 = pneg %p80
        %p513 = pneg %p77
        %p514 = pneg %p101
        %p515 = pneg %p98
        %p516 = pneg %p122
        %p517 = pneg %p119
        %p518 = pneg %p143
        %p519 = pneg %p140
        %p520 = pneg %p164
        %p521 = pneg %p161
        %p522 = pneg %p185
        %p523 = pneg %p182
        %p524 = pneg %p206
        %p525 = pneg %p203
        %p526 = pneg %p227
        %p527 = pneg %p224
        %p528 = pneg %p248
        %p529 = pneg %p245
        %p530 = pneg %p269
        %p531 = pneg %p266
        %p532 = pneg %p290
        %p533 = pneg %p287
        %p534 = pneg %p311
        %p535 = pneg %p308
        %p536 = pneg %p332
        %p537 = pneg %p329
        %p538 = pneg %p358
        %p539 = pneg %p355
        %s540 = sand.u32 %s345, 1
        %s541 = scalar_lea.sflag [#allocation6], %s540
        %s542 = sand.u32 %s345, 1
        %s543 = smul.addr %s542, 8
        %s544 = scalar_lea.vmem [#allocation13], %s543
        %p545 = scmp.lt.s32.totalorder %s33, 1
        %s546 = scalar_select %p545, %s33, 1
        %s547 = smul.addr %s546, 8
        %s548 = scalar_lea.vmem %s0, %s547
        %v550 = vld [vmem:[%s548] sm:$0xff]
        %v551 = vpack.c.bf16 %v550, %v550
        %v552 = vld [vmem:[%s2] sm:$0xf]
        %v553 = vld [vmem:[%s2 + $0x4] sm:$0xf]
        %v554 = vld [vmem:[%s2 + $0x8] sm:$0xf]
        %v555 = vld [vmem:[%s2 + $0xc] sm:$0xf]
        %v556 = vld [vmem:[%s3] sm:$0x1]
        %v558 = vlaneseq
        %v559 = vshrl.u32 %v558, 7
        %v560 = vsub.s32 0, %v559
        %v561 = vrot.slane %v556, %v560
        %v567 = vunpack.c.l.b16 %v552
        %v568 = vunpack.c.l.b16 %v553
        %v569 = vunpack.c.l.b16 %v554
        %v570 = vunpack.c.l.b16 %v555
        %v571 = vpack.c.b16 %v568, %v567
        %v572 = vpack.c.b16 %v570, %v569
        %vm575 = vcmask 261120
        %v577 = vsel %vm575, %v551, 0
        %579 = vmatprep.subr.bf16.mxu0 0
        %580 = vmatpush1.bf16.msra.mxu0 0
        %581 = vmatprep.subr.bf16.mxu0 0
        %582 = vmatpush1.bf16.msra.mxu0 0
        %583 = vmatprep.subr.bf16.mxu0 0
        %584 = vmatpush1.bf16.msra.mxu0 0
        %585 = vmatprep.subr.bf16.mxu0 0
        %586 = vmatpush1.bf16.msra.mxu0 0
        %587 = vmatprep.subr.bf16.mxu0 0
        %588 = vmatpush1.bf16.msra.mxu0 0
        %589 = vmatprep.subr.bf16.mxu0 0
        %590 = vmatpush1.bf16.msra.mxu0 0
        %591 = vmatprep.subr.bf16.mxu0 0
        %592 = vmatpush1.bf16.msra.mxu0 %v572
        %593 = vmatprep.subr.bf16.mxu0 0
        %594 = vmatpush1.bf16.msra.mxu0 %v571
        %595 = vmatprep.subr.bf16.mxu0 0
        %596 = vmatpush2.bf16.msra.mxu0 0
        %597 = vmatprep.subr.bf16.mxu0 0
        %598 = vmatpush2.bf16.msra.mxu0 0
        %599 = vmatprep.subr.bf16.mxu0 0
        %600 = vmatpush2.bf16.msra.mxu0 0
        %601 = vmatprep.subr.bf16.mxu0 0
        %602 = vmatpush2.bf16.msra.mxu0 0
        %603 = vmatprep.subr.bf16.mxu0 0
        %604 = vmatpush2.bf16.msra.mxu0 0
        %605 = vmatprep.subr.bf16.mxu0 0
        %606 = vmatpush2.bf16.msra.mxu0 0
        %607 = vmatprep.subr.bf16.mxu0 0
        %608 = vmatpush2.bf16.msra.mxu0 0
        %609 = vmatprep.subr.bf16.mxu0 0
        %610 = vmatpush2.bf16.msra.mxu0 0
        %611 = vmatprep.mubr.bf16.mxu0 0
        %612 = vmatmul.mubr.bf16.gmra.mxu0 %v577
        %v613 = vpop.f32.mrf.mxu0
        %v614 = vadd.f32 %v561, %v613
        %v615 = vpop.f32.mrf.mxu0
        %v616 = vpop.f32.mrf.mxu0
        %v617 = vpop.f32.mrf.mxu0
        %618 = vdwg.mxu0
        %v619 = vpack.c.bf16 %v614, %v614
        %vm620 = vcmask 781312
        %621 = vst.msk [vmem:[#allocation2] sm:$0xf] %vm620, %v619
        %v622 = vld [vmem:[%s481] sm:$0x1]
        %vm623 = vcmp.gt.f32.partialorder %v622, 0.0
        %v624 = vsel %vm623, 0.0, -1e+09
        %v625 = vld [vmem:[#allocation2] sm:$0xf]
        %v627 = vlaneseq
        %v628 = vshrl.u32 %v627, 7
        %v629 = vsub.s32 0, %v628
        %v630 = vrot.slane %v624, %v629
        %v633 = vunpack.c.l.b16 %v625
        %v634 = vpack.c.b16 %v633, %v633
        %635 = vrot.lane.b32.xlu0 %v634, 96
        %v636 = vpop.permute.xlu0 %635
        %vm637 = vcmask 64512
        %v639 = vsel %vm637, %v625, 0
        %v642 = vsel %vm637, %v636, 0
        %644 = vmatprep.subr.bf16.mxu0 0
        %645 = vmatpush1.bf16.xpose.msra.mxu0 0
        %646 = vmatprep.subr.bf16.mxu0 0
        %647 = vmatpush1.bf16.xpose.msra.mxu0 0
        %648 = vmatprep.subr.bf16.mxu0 0
        %649 = vmatpush1.bf16.xpose.msra.mxu0 0
        %650 = vmatprep.subr.bf16.mxu0 0
        %651 = vmatpush1.bf16.xpose.msra.mxu0 0
        %652 = vmatprep.subr.bf16.mxu0 0
        %653 = vmatpush1.bf16.xpose.msra.mxu0 0
        %654 = vmatprep.subr.bf16.mxu0 0
        %655 = vmatpush1.bf16.xpose.msra.mxu0 0
        %656 = vmatprep.subr.bf16.mxu0 0
        %657 = vmatpush1.bf16.xpose.msra.mxu0 0
        %658 = vmatprep.subr.bf16.mxu0 0
        %659 = vmatpush1.bf16.xpose.msra.mxu0 %v642
        %660 = vmatprep.subr.bf16.mxu0 0
        %661 = vmatpush2.bf16.xpose.msra.mxu0 0
        %662 = vmatprep.subr.bf16.mxu0 0
        %663 = vmatpush2.bf16.xpose.msra.mxu0 0
        %664 = vmatprep.subr.bf16.mxu0 0
        %665 = vmatpush2.bf16.xpose.msra.mxu0 0
        %666 = vmatprep.subr.bf16.mxu0 0
        %667 = vmatpush2.bf16.xpose.msra.mxu0 0
        %668 = vmatprep.subr.bf16.mxu0 0
        %669 = vmatpush2.bf16.xpose.msra.mxu0 0
        %670 = vmatprep.subr.bf16.mxu0 0
        %671 = vmatpush2.bf16.xpose.msra.mxu0 0
        %672 = vmatprep.subr.bf16.mxu0 0
        %673 = vmatpush2.bf16.xpose.msra.mxu0 0
        %674 = vmatprep.subr.bf16.mxu0 0
        %675 = vmatpush2.bf16.xpose.msra.mxu0 0
        %676 = vmatprep.mubr.bf16.mxu0 0
        %677 = vmatmul.mubr.bf16.gmra.mxu0 %v639
        %v678 = vpop.f32.mrf.mxu0
        %v679 = vadd.f32 %v630, %v678
        %v680 = vpop.f32.mrf.mxu0
        %v681 = vpop.f32.mrf.mxu0
        %v682 = vpop.f32.mrf.mxu0
        %683 = vdwg.mxu0
        %v684 = vsel %vm637, %v679, -inf
        %685 = vmax.xlane.f32.xlu0 %v684
        %v686 = vpop.xlane.xlu0 %685
        %v687 = vsub.f32 %v679, %v686
        %v688 = vmul.f32 %v687, 1.442695
        %v689 = vpow.pop %v688
        %v690 = vsel %vm637, %v689, 0.0
        %691 = vadd.xlane.f32.xlu0 %v690
        %v692 = vpop.xlane.xlu0 %691
        %v693 = vrcp.pop %v692
        %v694 = vmul.f32 %v689, %v693
        %v695 = vpack.c.bf16 %v694, %v694
        %696 = vrot.lane.b32.xlu0 %v634, 64
        %v697 = vpop.permute.xlu0 %696
        %v699 = vsel %vm637, %v695, 0
        %vm701 = vcmask 1043456
        %v703 = vsel %vm701, %v697, 0
        %705 = vmatprep.subr.bf16.mxu0 0
        %706 = vmatpush1.bf16.msra.mxu0 0
        %707 = vmatprep.subr.bf16.mxu0 0
        %708 = vmatpush1.bf16.msra.mxu0 0
        %709 = vmatprep.subr.bf16.mxu0 0
        %710 = vmatpush1.bf16.msra.mxu0 0
        %711 = vmatprep.subr.bf16.mxu0 0
        %712 = vmatpush1.bf16.msra.mxu0 0
        %713 = vmatprep.subr.bf16.mxu0 0
        %714 = vmatpush1.bf16.msra.mxu0 0
        %715 = vmatprep.subr.bf16.mxu0 0
        %716 = vmatpush1.bf16.msra.mxu0 0
        %717 = vmatprep.subr.bf16.mxu0 0
        %718 = vmatpush1.bf16.msra.mxu0 0
        %719 = vmatprep.subr.bf16.mxu0 0
        %720 = vmatpush1.bf16.msra.mxu0 %v703
        %721 = vmatprep.subr.bf16.mxu0 0
        %722 = vmatpush2.bf16.msra.mxu0 0
        %723 = vmatprep.subr.bf16.mxu0 0
        %724 = vmatpush2.bf16.msra.mxu0 0
        %725 = vmatprep.subr.bf16.mxu0 0
        %726 = vmatpush2.bf16.msra.mxu0 0
        %727 = vmatprep.subr.bf16.mxu0 0
        %728 = vmatpush2.bf16.msra.mxu0 0
        %729 = vmatprep.subr.bf16.mxu0 0
        %730 = vmatpush2.bf16.msra.mxu0 0
        %731 = vmatprep.subr.bf16.mxu0 0
        %732 = vmatpush2.bf16.msra.mxu0 0
        %733 = vmatprep.subr.bf16.mxu0 0
        %734 = vmatpush2.bf16.msra.mxu0 0
        %735 = vmatprep.subr.bf16.mxu0 0
        %736 = vmatpush2.bf16.msra.mxu0 0
        %737 = vmatprep.mubr.bf16.mxu0 0
        %738 = vmatmul.mubr.bf16.gmra.mxu0 %v699
        %v739 = vpop.f32.mrf.mxu0
        %v740 = vadd.f32 0.0, %v739
        %v741 = vpop.f32.mrf.mxu0
        %v742 = vpop.f32.mrf.mxu0
        %v743 = vpop.f32.mrf.mxu0
        %744 = vdwg.mxu0
        %v745 = vpack.c.bf16 %v740, %v740
        %vm746 = vcmask 60416
        %747 = vst.msk [vmem:[#allocation3] sm:$0xf] %vm746, %v745
        %v748 = vld [vmem:[#allocation2] sm:$0xf]
        %v750 = vunpack.c.l.b16 %v748
        %v751 = vpack.c.b16 %v750, %v750
        %752 = vrot.lane.b32.xlu0 %v751, 120
        %v753 = vpop.permute.xlu0 %752
        %754 = vrot.lane.b32.xlu0 %v751, 88
        %v755 = vpop.permute.xlu0 %754
        %v757 = vsel %vm637, %v753, 0
        %v760 = vsel %vm637, %v755, 0
        %762 = vmatprep.subr.bf16.mxu0 0
        %763 = vmatpush1.bf16.xpose.msra.mxu0 0
        %764 = vmatprep.subr.bf16.mxu0 0
        %765 = vmatpush1.bf16.xpose.msra.mxu0 0
        %766 = vmatprep.subr.bf16.mxu0 0
        %767 = vmatpush1.bf16.xpose.msra.mxu0 0
        %768 = vmatprep.subr.bf16.mxu0 0
        %769 = vmatpush1.bf16.xpose.msra.mxu0 0
        %770 = vmatprep.subr.bf16.mxu0 0
        %771 = vmatpush1.bf16.xpose.msra.mxu0 0
        %772 = vmatprep.subr.bf16.mxu0 0
        %773 = vmatpush1.bf16.xpose.msra.mxu0 0
        %774 = vmatprep.subr.bf16.mxu0 0
        %775 = vmatpush1.bf16.xpose.msra.mxu0 0
        %776 = vmatprep.subr.bf16.mxu0 0
        %777 = vmatpush1.bf16.xpose.msra.mxu0 %v760
        %778 = vmatprep.subr.bf16.mxu0 0
        %779 = vmatpush2.bf16.xpose.msra.mxu0 0
        %780 = vmatprep.subr.bf16.mxu0 0
        %781 = vmatpush2.bf16.xpose.msra.mxu0 0
        %782 = vmatprep.subr.bf16.mxu0 0
        %783 = vmatpush2.bf16.xpose.msra.mxu0 0
        %784 = vmatprep.subr.bf16.mxu0 0
        %785 = vmatpush2.bf16.xpose.msra.mxu0 0
        %786 = vmatprep.subr.bf16.mxu0 0
        %787 = vmatpush2.bf16.xpose.msra.mxu0 0
        %788 = vmatprep.subr.bf16.mxu0 0
        %789 = vmatpush2.bf16.xpose.msra.mxu0 0
        %790 = vmatprep.subr.bf16.mxu0 0
        %791 = vmatpush2.bf16.xpose.msra.mxu0 0
        %792 = vmatprep.subr.bf16.mxu0 0
        %793 = vmatpush2.bf16.xpose.msra.mxu0 0
        %794 = vmatprep.mubr.bf16.mxu0 0
        %795 = vmatmul.mubr.bf16.gmra.mxu0 %v757
        %v796 = vpop.f32.mrf.mxu0
        %v797 = vadd.f32 %v630, %v796
        %v798 = vpop.f32.mrf.mxu0
        %v799 = vpop.f32.mrf.mxu0
        %v800 = vpop.f32.mrf.mxu0
        %801 = vdwg.mxu0
        %v802 = vsel %vm637, %v797, -inf
        %803 = vmax.xlane.f32.xlu0 %v802
        %v804 = vpop.xlane.xlu0 %803
        %v805 = vsub.f32 %v797, %v804
        %v806 = vmul.f32 %v805, 1.442695
        %v807 = vpow.pop %v806
        %v808 = vsel %vm637, %v807, 0.0
        %809 = vadd.xlane.f32.xlu0 %v808
        %v810 = vpop.xlane.xlu0 %809
        %v811 = vrcp.pop %v810
        %v812 = vmul.f32 %v807, %v811
        %v813 = vpack.c.bf16 %v812, %v812
        %814 = vrot.lane.b32.xlu0 %v751, 56
        %v815 = vpop.permute.xlu0 %814
        %v817 = vsel %vm637, %v813, 0
        %v820 = vsel %vm701, %v815, 0
        %822 = vmatprep.subr.bf16.mxu0 0
        %823 = vmatpush1.bf16.msra.mxu0 0
        %824 = vmatprep.subr.bf16.mxu0 0
        %825 = vmatpush1.bf16.msra.mxu0 0
        %826 = vmatprep.subr.bf16.mxu0 0
        %827 = vmatpush1.bf16.msra.mxu0 0
        %828 = vmatprep.subr.bf16.mxu0 0
        %829 = vmatpush1.bf16.msra.mxu0 0
        %830 = vmatprep.subr.bf16.mxu0 0
        %831 = vmatpush1.bf16.msra.mxu0 0
        %832 = vmatprep.subr.bf16.mxu0 0
        %833 = vmatpush1.bf16.msra.mxu0 0
        %834 = vmatprep.subr.bf16.mxu0 0
        %835 = vmatpush1.bf16.msra.mxu0 0
        %836 = vmatprep.subr.bf16.mxu0 0
        %837 = vmatpush1.bf16.msra.mxu0 %v820
        %838 = vmatprep.subr.bf16.mxu0 0
        %839 = vmatpush2.bf16.msra.mxu0 0
        %840 = vmatprep.subr.bf16.mxu0 0
        %841 = vmatpush2.bf16.msra.mxu0 0
        %842 = vmatprep.subr.bf16.mxu0 0
        %843 = vmatpush2.bf16.msra.mxu0 0
        %844 = vmatprep.subr.bf16.mxu0 0
        %845 = vmatpush2.bf16.msra.mxu0 0
        %846 = vmatprep.subr.bf16.mxu0 0
        %847 = vmatpush2.bf16.msra.mxu0 0
        %848 = vmatprep.subr.bf16.mxu0 0
        %849 = vmatpush2.bf16.msra.mxu0 0
        %850 = vmatprep.subr.bf16.mxu0 0
        %851 = vmatpush2.bf16.msra.mxu0 0
        %852 = vmatprep.subr.bf16.mxu0 0
        %853 = vmatpush2.bf16.msra.mxu0 0
        %854 = vmatprep.mubr.bf16.mxu0 0
        %855 = vmatmul.mubr.bf16.gmra.mxu0 %v817
        %v856 = vpop.f32.mrf.mxu0
        %v857 = vadd.f32 0.0, %v856
        %v858 = vpop.f32.mrf.mxu0
        %v859 = vpop.f32.mrf.mxu0
        %v860 = vpop.f32.mrf.mxu0
        %861 = vdwg.mxu0
        %v862 = vpack.c.bf16 %v857, %v857
        %v864 = vunpack.c.l.b16 %v862
        %v865 = vpack.c.b16 %v864, %v864
        %866 = vrot.lane.b32.xlu0 %v865, 8
        %v867 = vpop.permute.xlu0 %866
        %vm869 = vcmask 126016
        %870 = vst.msk [vmem:[#allocation3] sm:$0xf] %vm869, %v867
        %v871 = vld [vmem:[#allocation2] sm:$0xf]
        %v873 = vunpack.c.l.b16 %v871
        %v874 = vpack.c.b16 %v873, %v873
        %875 = vrot.lane.b32.xlu0 %v874, 112
        %v876 = vpop.permute.xlu0 %875
        %877 = vrot.lane.b32.xlu0 %v874, 80
        %v878 = vpop.permute.xlu0 %877
        %v880 = vsel %vm637, %v876, 0
        %v883 = vsel %vm637, %v878, 0
        %885 = vmatprep.subr.bf16.mxu0 0
        %886 = vmatpush1.bf16.xpose.msra.mxu0 0
        %887 = vmatprep.subr.bf16.mxu0 0
        %888 = vmatpush1.bf16.xpose.msra.mxu0 0
        %889 = vmatprep.subr.bf16.mxu0 0
        %890 = vmatpush1.bf16.xpose.msra.mxu0 0
        %891 = vmatprep.subr.bf16.mxu0 0
        %892 = vmatpush1.bf16.xpose.msra.mxu0 0
        %893 = vmatprep.subr.bf16.mxu0 0
        %894 = vmatpush1.bf16.xpose.msra.mxu0 0
        %895 = vmatprep.subr.bf16.mxu0 0
        %896 = vmatpush1.bf16.xpose.msra.mxu0 0
        %897 = vmatprep.subr.bf16.mxu0 0
        %898 = vmatpush1.bf16.xpose.msra.mxu0 0
        %899 = vmatprep.subr.bf16.mxu0 0
        %900 = vmatpush1.bf16.xpose.msra.mxu0 %v883
        %901 = vmatprep.subr.bf16.mxu0 0
        %902 = vmatpush2.bf16.xpose.msra.mxu0 0
        %903 = vmatprep.subr.bf16.mxu0 0
        %904 = vmatpush2.bf16.xpose.msra.mxu0 0
        %905 = vmatprep.subr.bf16.mxu0 0
        %906 = vmatpush2.bf16.xpose.msra.mxu0 0
        %907 = vmatprep.subr.bf16.mxu0 0
        %908 = vmatpush2.bf16.xpose.msra.mxu0 0
        %909 = vmatprep.subr.bf16.mxu0 0
        %910 = vmatpush2.bf16.xpose.msra.mxu0 0
        %911 = vmatprep.subr.bf16.mxu0 0
        %912 = vmatpush2.bf16.xpose.msra.mxu0 0
        %913 = vmatprep.subr.bf16.mxu0 0
        %914 = vmatpush2.bf16.xpose.msra.mxu0 0
        %915 = vmatprep.subr.bf16.mxu0 0
        %916 = vmatpush2.bf16.xpose.msra.mxu0 0
        %917 = vmatprep.mubr.bf16.mxu0 0
        %918 = vmatmul.mubr.bf16.gmra.mxu0 %v880
        %v919 = vpop.f32.mrf.mxu0
        %v920 = vadd.f32 %v630, %v919
        %v921 = vpop.f32.mrf.mxu0
        %v922 = vpop.f32.mrf.mxu0
        %v923 = vpop.f32.mrf.mxu0
        %924 = vdwg.mxu0
        %v925 = vsel %vm637, %v920, -inf
        %926 = vmax.xlane.f32.xlu0 %v925
        %v927 = vpop.xlane.xlu0 %926
        %v928 = vsub.f32 %v920, %v927
        %v929 = vmul.f32 %v928, 1.442695
        %v930 = vpow.pop %v929
        %v931 = vsel %vm637, %v930, 0.0
        %932 = vadd.xlane.f32.xlu0 %v931
        %v933 = vpop.xlane.xlu0 %932
        %v934 = vrcp.pop %v933
        %v935 = vmul.f32 %v930, %v934
        %v936 = vpack.c.bf16 %v935, %v935
        %937 = vrot.lane.b32.xlu0 %v874, 48
        %v938 = vpop.permute.xlu0 %937
        %v940 = vsel %vm637, %v936, 0
        %v943 = vsel %vm701, %v938, 0
        %945 = vmatprep.subr.bf16.mxu0 0
        %946 = vmatpush1.bf16.msra.mxu0 0
        %947 = vmatprep.subr.bf16.mxu0 0
        %948 = vmatpush1.bf16.msra.mxu0 0
        %949 = vmatprep.subr.bf16.mxu0 0
        %950 = vmatpush1.bf16.msra.mxu0 0
        %951 = vmatprep.subr.bf16.mxu0 0
        %952 = vmatpush1.bf16.msra.mxu0 0
        %953 = vmatprep.subr.bf16.mxu0 0
        %954 = vmatpush1.bf16.msra.mxu0 0
        %955 = vmatprep.subr.bf16.mxu0 0
        %956 = vmatpush1.bf16.msra.mxu0 0
        %957 = vmatprep.subr.bf16.mxu0 0
        %958 = vmatpush1.bf16.msra.mxu0 0
        %959 = vmatprep.subr.bf16.mxu0 0
        %960 = vmatpush1.bf16.msra.mxu0 %v943
        %961 = vmatprep.subr.bf16.mxu0 0
        %962 = vmatpush2.bf16.msra.mxu0 0
        %963 = vmatprep.subr.bf16.mxu0 0
        %964 = vmatpush2.bf16.msra.mxu0 0
        %965 = vmatprep.subr.bf16.mxu0 0
        %966 = vmatpush2.bf16.msra.mxu0 0
        %967 = vmatprep.subr.bf16.mxu0 0
        %968 = vmatpush2.bf16.msra.mxu0 0
        %969 = vmatprep.subr.bf16.mxu0 0
        %970 = vmatpush2.bf16.msra.mxu0 0
        %971 = vmatprep.subr.bf16.mxu0 0
        %972 = vmatpush2.bf16.msra.mxu0 0
        %973 = vmatprep.subr.bf16.mxu0 0
        %974 = vmatpush2.bf16.msra.mxu0 0
        %975 = vmatprep.subr.bf16.mxu0 0
        %976 = vmatpush2.bf16.msra.mxu0 0
        %977 = vmatprep.mubr.bf16.mxu0 0
        %978 = vmatmul.mubr.bf16.gmra.mxu0 %v940
        %v979 = vpop.f32.mrf.mxu0
        %v980 = vadd.f32 0.0, %v979
        %v981 = vpop.f32.mrf.mxu0
        %v982 = vpop.f32.mrf.mxu0
        %v983 = vpop.f32.mrf.mxu0
        %984 = vdwg.mxu0
        %v985 = vpack.c.bf16 %v980, %v980
        %v987 = vunpack.c.l.b16 %v985
        %v988 = vpack.c.b16 %v987, %v987
        %989 = vrot.lane.b32.xlu0 %v988, 16
        %v990 = vpop.permute.xlu0 %989
        %vm992 = vcmask 191616
        %993 = vst.msk [vmem:[#allocation3] sm:$0xf] %vm992, %v990
        %v994 = vld [vmem:[#allocation2] sm:$0xf]
        %v996 = vunpack.c.l.b16 %v994
        %v997 = vpack.c.b16 %v996, %v996
        %998 = vrot.lane.b32.xlu0 %v997, 104
        %v999 = vpop.permute.xlu0 %998
        %1000 = vrot.lane.b32.xlu0 %v997, 72
        %v1001 = vpop.permute.xlu0 %1000
        %v1003 = vsel %vm637, %v999, 0
        %v1006 = vsel %vm637, %v1001, 0
        %1008 = vmatprep.subr.bf16.mxu0 0
        %1009 = vmatpush1.bf16.xpose.msra.mxu0 0
        %1010 = vmatprep.subr.bf16.mxu0 0
        %1011 = vmatpush1.bf16.xpose.msra.mxu0 0
        %1012 = vmatprep.subr.bf16.mxu0 0
        %1013 = vmatpush1.bf16.xpose.msra.mxu0 0
        %1014 = vmatprep.subr.bf16.mxu0 0
        %1015 = vmatpush1.bf16.xpose.msra.mxu0 0
        %1016 = vmatprep.subr.bf16.mxu0 0
        %1017 = vmatpush1.bf16.xpose.msra.mxu0 0
        %1018 = vmatprep.subr.bf16.mxu0 0
        %1019 = vmatpush1.bf16.xpose.msra.mxu0 0
        %1020 = vmatprep.subr.bf16.mxu0 0
        %1021 = vmatpush1.bf16.xpose.msra.mxu0 0
        %1022 = vmatprep.subr.bf16.mxu0 0
        %1023 = vmatpush1.bf16.xpose.msra.mxu0 %v1006
        %1024 = vmatprep.subr.bf16.mxu0 0
        %1025 = vmatpush2.bf16.xpose.msra.mxu0 0
        %1026 = vmatprep.subr.bf16.mxu0 0
        %1027 = vmatpush2.bf16.xpose.msra.mxu0 0
        %1028 = vmatprep.subr.bf16.mxu0 0
        %1029 = vmatpush2.bf16.xpose.msra.mxu0 0
        %1030 = vmatprep.subr.bf16.mxu0 0
        %1031 = vmatpush2.bf16.xpose.msra.mxu0 0
        %1032 = vmatprep.subr.bf16.mxu0 0
        %1033 = vmatpush2.bf16.xpose.msra.mxu0 0
        %1034 = vmatprep.subr.bf16.mxu0 0
        %1035 = vmatpush2.bf16.xpose.msra.mxu0 0
        %1036 = vmatprep.subr.bf16.mxu0 0
        %1037 = vmatpush2.bf16.xpose.msra.mxu0 0
        %1038 = vmatprep.subr.bf16.mxu0 0
        %1039 = vmatpush2.bf16.xpose.msra.mxu0 0
        %1040 = vmatprep.mubr.bf16.mxu0 0
        %1041 = vmatmul.mubr.bf16.gmra.mxu0 %v1003
        %v1042 = vpop.f32.mrf.mxu0
        %v1043 = vadd.f32 %v630, %v1042
        %v1044 = vpop.f32.mrf.mxu0
        %v1045 = vpop.f32.mrf.mxu0
        %v1046 = vpop.f32.mrf.mxu0
        %1047 = vdwg.mxu0
        %v1048 = vsel %vm637, %v1043, -inf
        %1049 = vmax.xlane.f32.xlu0 %v1048
        %v1050 = vpop.xlane.xlu0 %1049
        %v1051 = vsub.f32 %v1043, %v1050
        %v1052 = vmul.f32 %v1051, 1.442695
        %v1053 = vpow.pop %v1052
        %v1054 = vsel %vm637, %v1053, 0.0
        %1055 = vadd.xlane.f32.xlu0 %v1054
        %v1056 = vpop.xlane.xlu0 %1055
        %v1057 = vrcp.pop %v1056
        %v1058 = vmul.f32 %v1053, %v1057
        %v1059 = vpack.c.bf16 %v1058, %v1058
        %1060 = vrot.lane.b32.xlu0 %v997, 40
        %v1061 = vpop.permute.xlu0 %1060
        %v1063 = vsel %vm637, %v1059, 0
        %v1066 = vsel %vm701, %v1061, 0
        %1068 = vmatprep.subr.bf16.mxu0 0
        %1069 = vmatpush1.bf16.msra.mxu0 0
        %1070 = vmatprep.subr.bf16.mxu0 0
        %1071 = vmatpush1.bf16.msra.mxu0 0
        %1072 = vmatprep.subr.bf16.mxu0 0
        %1073 = vmatpush1.bf16.msra.mxu0 0
        %1074 = vmatprep.subr.bf16.mxu0 0
        %1075 = vmatpush1.bf16.msra.mxu0 0
        %1076 = vmatprep.subr.bf16.mxu0 0
        %1077 = vmatpush1.bf16.msra.mxu0 0
        %1078 = vmatprep.subr.bf16.mxu0 0
        %1079 = vmatpush1.bf16.msra.mxu0 0
        %1080 = vmatprep.subr.bf16.mxu0 0
        %1081 = vmatpush1.bf16.msra.mxu0 0
        %1082 = vmatprep.subr.bf16.mxu0 0
        %1083 = vmatpush1.bf16.msra.mxu0 %v1066
        %1084 = vmatprep.subr.bf16.mxu0 0
        %1085 = vmatpush2.bf16.msra.mxu0 0
        %1086 = vmatprep.subr.bf16.mxu0 0
        %1087 = vmatpush2.bf16.msra.mxu0 0
        %1088 = vmatprep.subr.bf16.mxu0 0
        %1089 = vmatpush2.bf16.msra.mxu0 0
        %1090 = vmatprep.subr.bf16.mxu0 0
        %1091 = vmatpush2.bf16.msra.mxu0 0
        %1092 = vmatprep.subr.bf16.mxu0 0
        %1093 = vmatpush2.bf16.msra.mxu0 0
        %1094 = vmatprep.subr.bf16.mxu0 0
        %1095 = vmatpush2.bf16.msra.mxu0 0
        %1096 = vmatprep.subr.bf16.mxu0 0
        %1097 = vmatpush2.bf16.msra.mxu0 0
        %1098 = vmatprep.subr.bf16.mxu0 0
        %1099 = vmatpush2.bf16.msra.mxu0 0
        %1100 = vmatprep.mubr.bf16.mxu0 0
        %1101 = vmatmul.mubr.bf16.gmra.mxu0 %v1063
        %v1102 = vpop.f32.mrf.mxu0
        %v1103 = vadd.f32 0.0, %v1102
        %v1104 = vpop.f32.mrf.mxu0
        %v1105 = vpop.f32.mrf.mxu0
        %v1106 = vpop.f32.mrf.mxu0
        %1107 = vdwg.mxu0
        %v1108 = vpack.c.bf16 %v1103, %v1103
        %v1110 = vunpack.c.l.b16 %v1108
        %v1111 = vpack.c.b16 %v1110, %v1110
        %1112 = vrot.lane.b32.xlu0 %v1111, 24
        %v1113 = vpop.permute.xlu0 %1112
        %vm1115 = vcmask 257216
        %1116 = vst.msk [vmem:[#allocation3] sm:$0xf] %vm1115, %v1113
        %v1117 = vld [vmem:[#allocation3] sm:$0xf]
        %v1118 = vld [vmem:[%s4] sm:$0xf]
        %v1119 = vld [vmem:[%s4 + $0x4] sm:$0xf]
        %v1120 = vld [vmem:[%s4 + $0x8] sm:$0xf]
        %v1121 = vld [vmem:[%s4 + $0xc] sm:$0xf]
        %v1122 = vld [vmem:[%s5] sm:$0x1]
        %v1124 = vlaneseq
        %v1125 = vshrl.u32 %v1124, 7
        %v1126 = vsub.s32 0, %v1125
        %v1127 = vrot.slane %v1122, %v1126
        %v1133 = vunpack.c.l.b16 %v1118
        %v1134 = vunpack.c.l.b16 %v1119
        %v1135 = vunpack.c.l.b16 %v1120
        %v1136 = vunpack.c.l.b16 %v1121
        %v1137 = vpack.c.b16 %v1134, %v1133
        %v1138 = vpack.c.b16 %v1136, %v1135
        %v1142 = vsel %vm575, %v1117, 0
        %1144 = vmatprep.subr.bf16.mxu0 0
        %1145 = vmatpush1.bf16.msra.mxu0 0
        %1146 = vmatprep.subr.bf16.mxu0 0
        %1147 = vmatpush1.bf16.msra.mxu0 0
        %1148 = vmatprep.subr.bf16.mxu0 0
        %1149 = vmatpush1.bf16.msra.mxu0 0
        %1150 = vmatprep.subr.bf16.mxu0 0
        %1151 = vmatpush1.bf16.msra.mxu0 0
        %1152 = vmatprep.subr.bf16.mxu0 0
        %1153 = vmatpush1.bf16.msra.mxu0 0
        %1154 = vmatprep.subr.bf16.mxu0 0
        %1155 = vmatpush1.bf16.msra.mxu0 0
        %1156 = vmatprep.subr.bf16.mxu0 0
        %1157 = vmatpush1.bf16.msra.mxu0 %v1138
        %1158 = vmatprep.subr.bf16.mxu0 0
        %1159 = vmatpush1.bf16.msra.mxu0 %v1137
        %1160 = vmatprep.subr.bf16.mxu0 0
        %1161 = vmatpush2.bf16.msra.mxu0 0
        %1162 = vmatprep.subr.bf16.mxu0 0
        %1163 = vmatpush2.bf16.msra.mxu0 0
        %1164 = vmatprep.subr.bf16.mxu0 0
        %1165 = vmatpush2.bf16.msra.mxu0 0
        %1166 = vmatprep.subr.bf16.mxu0 0
        %1167 = vmatpush2.bf16.msra.mxu0 0
        %1168 = vmatprep.subr.bf16.mxu0 0
        %1169 = vmatpush2.bf16.msra.mxu0 0
        %1170 = vmatprep.subr.bf16.mxu0 0
        %1171 = vmatpush2.bf16.msra.mxu0 0
        %1172 = vmatprep.subr.bf16.mxu0 0
        %1173 = vmatpush2.bf16.msra.mxu0 0
        %1174 = vmatprep.subr.bf16.mxu0 0
        %1175 = vmatpush2.bf16.msra.mxu0 0
        %1176 = vmatprep.mubr.bf16.mxu0 0
        %1177 = vmatmul.mubr.bf16.gmra.mxu0 %v1142
        %v1178 = vpop.f32.mrf.mxu0
        %v1179 = vadd.f32 %v1127, %v1178
        %v1180 = vpop.f32.mrf.mxu0
        %v1181 = vpop.f32.mrf.mxu0
        %v1182 = vpop.f32.mrf.mxu0
        %1183 = vdwg.mxu0
        %v1184 = vadd.f32 %v1179, %v550
        %v1185 = vld [vmem:[#allocation7] sm:$0x1]
        %v1186 = vld [vmem:[#allocation9] sm:$0x1]
        %v1187 = vsel %vm575, %v1184, 0.0
        %1188 = vadd.xlane.f32.xlu0 %v1187
        %v1189 = vpop.xlane.xlu0 %1188
        %v1190 = vrcp.pop 32.0
        %v1191 = vmul.f32 %v1189, %v1190
        %v1192 = vsub.f32 %v1184, %v1191
        %v1193 = vmul.f32 %v1192, %v1192
        %v1194 = vsel %vm575, %v1193, 0.0
        %1195 = vadd.xlane.f32.xlu0 %v1194
        %v1196 = vpop.xlane.xlu0 %1195
        %v1197 = vmul.f32 %v1196, %v1190
        %v1198 = vadd.f32 %v1197, 1e-05
        %v1199 = vrsqrt.pop %v1198
        %v1200 = vmul.f32 %v1192, %v1199
        %v1202 = vlaneseq
        %v1203 = vshrl.u32 %v1202, 7
        %v1204 = vsub.s32 0, %v1203
        %v1205 = vrot.slane %v1185, %v1204
        %v1207 = vmul.f32 %v1200, %v1205
        %v1209 = vlaneseq
        %v1210 = vshrl.u32 %v1209, 7
        %v1211 = vsub.s32 0, %v1210
        %v1212 = vrot.slane %v1186, %v1211
        %v1214 = vadd.f32 %v1207, %v1212
        %v1215 = vpack.c.bf16 %v1214, %v1214
        %v1216 = vld [vmem:[#allocation10] sm:$0xf]
        %v1217 = vld [vmem:[#allocation10 + $0x4] sm:$0xf]
        %v1218 = vld [vmem:[#allocation10 + $0x8] sm:$0xf]
        %v1219 = vld [vmem:[#allocation10 + $0xc] sm:$0xf]
        %v1220 = vld [vmem:[#allocation12] sm:$0x1]
        %v1222 = vlaneseq
        %v1223 = vshrl.u32 %v1222, 7
        %v1224 = vsub.s32 0, %v1223
        %v1225 = vrot.slane %v1220, %v1224
        %v1231 = vunpack.c.l.b16 %v1216
        %v1232 = vunpack.c.l.b16 %v1217
        %v1233 = vunpack.c.l.b16 %v1218
        %v1234 = vunpack.c.l.b16 %v1219
        %v1235 = vpack.c.b16 %v1232, %v1231
        %v1236 = vpack.c.b16 %v1234, %v1233
        %v1240 = vsel %vm575, %v1215, 0
        %1242 = vmatprep.subr.bf16.mxu0 0
        %1243 = vmatpush1.bf16.msra.mxu0 0
        %1244 = vmatprep.subr.bf16.mxu0 0
        %1245 = vmatpush1.bf16.msra.mxu0 0
        %1246 = vmatprep.subr.bf16.mxu0 0
        %1247 = vmatpush1.bf16.msra.mxu0 0
        %1248 = vmatprep.subr.bf16.mxu0 0
        %1249 = vmatpush1.bf16.msra.mxu0 0
        %1250 = vmatprep.subr.bf16.mxu0 0
        %1251 = vmatpush1.bf16.msra.mxu0 0
        %1252 = vmatprep.subr.bf16.mxu0 0
        %1253 = vmatpush1.bf16.msra.mxu0 0
        %1254 = vmatprep.subr.bf16.mxu0 0
        %1255 = vmatpush1.bf16.msra.mxu0 %v1236
        %1256 = vmatprep.subr.bf16.mxu0 0
        %1257 = vmatpush1.bf16.msra.mxu0 %v1235
        %1258 = vmatprep.subr.bf16.mxu0 0
        %1259 = vmatpush2.bf16.msra.mxu0 0
        %1260 = vmatprep.subr.bf16.mxu0 0
        %1261 = vmatpush2.bf16.msra.mxu0 0
        %1262 = vmatprep.subr.bf16.mxu0 0
        %1263 = vmatpush2.bf16.msra.mxu0 0
        %1264 = vmatprep.subr.bf16.mxu0 0
        %1265 = vmatpush2.bf16.msra.mxu0 0
        %1266 = vmatprep.subr.bf16.mxu0 0
        %1267 = vmatpush2.bf16.msra.mxu0 0
        %1268 = vmatprep.subr.bf16.mxu0 0
        %1269 = vmatpush2.bf16.msra.mxu0 0
        %1270 = vmatprep.subr.bf16.mxu0 0
        %1271 = vmatpush2.bf16.msra.mxu0 0
        %1272 = vmatprep.subr.bf16.mxu0 0
        %1273 = vmatpush2.bf16.msra.mxu0 0
        %1274 = vmatprep.mubr.bf16.mxu0 0
        %1275 = vmatmul.mubr.bf16.gmra.mxu0 %v1240
        %v1276 = vpop.f32.mrf.mxu0
        %v1277 = vadd.f32 %v1225, %v1276
        %v1278 = vpop.f32.mrf.mxu0
        %v1279 = vpop.f32.mrf.mxu0
        %v1280 = vpop.f32.mrf.mxu0
        %1281 = vdwg.mxu0
        %v1282 = vmax.f32 %v1277, 0.0
        %v1283 = vpack.c.bf16 %v1282, %v1282
        %v1284 = vld [vmem:[%s10] sm:$0xf]
        %v1285 = vld [vmem:[%s10 + $0x4] sm:$0xf]
        %v1286 = vld [vmem:[%s10 + $0x8] sm:$0xf]
        %v1287 = vld [vmem:[%s10 + $0xc] sm:$0xf]
        %v1288 = vld [vmem:[%s10 + $0x10] sm:$0xf]
        %v1289 = vld [vmem:[%s10 + $0x14] sm:$0xf]
        %v1290 = vld [vmem:[%s10 + $0x18] sm:$0xf]
        %v1291 = vld [vmem:[%s10 + $0x1c] sm:$0xf]
        %v1292 = vld [vmem:[%s11] sm:$0x1]
        %v1294 = vlaneseq
        %v1295 = vshrl.u32 %v1294, 7
        %v1296 = vsub.s32 0, %v1295
        %v1297 = vrot.slane %v1292, %v1296
        %v1307 = vunpack.c.l.b16 %v1284
        %v1308 = vunpack.c.l.b16 %v1285
        %v1309 = vunpack.c.l.b16 %v1286
        %v1310 = vunpack.c.l.b16 %v1287
        %v1311 = vunpack.c.l.b16 %v1288
        %v1312 = vunpack.c.l.b16 %v1289
        %v1313 = vunpack.c.l.b16 %v1290
        %v1314 = vunpack.c.l.b16 %v1291
        %v1315 = vpack.c.b16 %v1308, %v1307
        %v1316 = vpack.c.b16 %v1310, %v1309
        %v1317 = vpack.c.b16 %v1312, %v1311
        %v1318 = vpack.c.b16 %v1314, %v1313
        %vm1323 = vcmask 523264
        %v1325 = vsel %vm1323, %v1283, 0
        %1327 = vmatprep.subr.bf16.mxu0 0
        %1328 = vmatpush1.bf16.msra.mxu0 0
        %1329 = vmatprep.subr.bf16.mxu0 0
        %1330 = vmatpush1.bf16.msra.mxu0 0
        %1331 = vmatprep.subr.bf16.mxu0 0
        %1332 = vmatpush1.bf16.msra.mxu0 0
        %1333 = vmatprep.subr.bf16.mxu0 0
        %1334 = vmatpush1.bf16.msra.mxu0 0
        %1335 = vmatprep.subr.bf16.mxu0 0
        %1336 = vmatpush1.bf16.msra.mxu0 %v1318
        %1337 = vmatprep.subr.bf16.mxu0 0
        %1338 = vmatpush1.bf16.msra.mxu0 %v1317
        %1339 = vmatprep.subr.bf16.mxu0 0
        %1340 = vmatpush1.bf16.msra.mxu0 %v1316
        %1341 = vmatprep.subr.bf16.mxu0 0
        %1342 = vmatpush1.bf16.msra.mxu0 %v1315
        %1343 = vmatprep.subr.bf16.mxu0 0
        %1344 = vmatpush2.bf16.msra.mxu0 0
        %1345 = vmatprep.subr.bf16.mxu0 0
        %1346 = vmatpush2.bf16.msra.mxu0 0
        %1347 = vmatprep.subr.bf16.mxu0 0
        %1348 = vmatpush2.bf16.msra.mxu0 0
        %1349 = vmatprep.subr.bf16.mxu0 0
        %1350 = vmatpush2.bf16.msra.mxu0 0
        %1351 = vmatprep.subr.bf16.mxu0 0
        %1352 = vmatpush2.bf16.msra.mxu0 0
        %1353 = vmatprep.subr.bf16.mxu0 0
        %1354 = vmatpush2.bf16.msra.mxu0 0
        %1355 = vmatprep.subr.bf16.mxu0 0
        %1356 = vmatpush2.bf16.msra.mxu0 0
        %1357 = vmatprep.subr.bf16.mxu0 0
        %1358 = vmatpush2.bf16.msra.mxu0 0
        %1359 = vmatprep.mubr.bf16.mxu0 0
        %1360 = vmatmul.mubr.bf16.gmra.mxu0 %v1325
        %v1361 = vpop.f32.mrf.mxu0
        %v1362 = vadd.f32 %v1297, %v1361
        %v1363 = vpop.f32.mrf.mxu0
        %v1364 = vpop.f32.mrf.mxu0
        %v1365 = vpop.f32.mrf.mxu0
        %1366 = vdwg.mxu0
        %v1367 = vadd.f32 %v1362, %v1214
        %v1368 = vld [vmem:[%s12] sm:$0x1]
        %v1369 = vld [vmem:[%s13] sm:$0x1]
        %v1370 = vsel %vm575, %v1367, 0.0
        %1371 = vadd.xlane.f32.xlu0 %v1370
        %v1372 = vpop.xlane.xlu0 %1371
        %v1373 = vmul.f32 %v1372, %v1190
        %v1374 = vsub.f32 %v1367, %v1373
        %v1375 = vmul.f32 %v1374, %v1374
        %v1376 = vsel %vm575, %v1375, 0.0
        %1377 = vadd.xlane.f32.xlu0 %v1376
        %v1378 = vpop.xlane.xlu0 %1377
        %v1379 = vmul.f32 %v1378, %v1190
        %v1380 = vadd.f32 %v1379, 1e-05
        %v1381 = vrsqrt.pop %v1380
        %v1382 = vmul.f32 %v1374, %v1381
        %v1384 = vlaneseq
        %v1385 = vshrl.u32 %v1384, 7
        %v1386 = vsub.s32 0, %v1385
        %v1387 = vrot.slane %v1368, %v1386
        %v1389 = vmul.f32 %v1382, %v1387
        %v1391 = vlaneseq
        %v1392 = vshrl.u32 %v1391, 7
        %v1393 = vsub.s32 0, %v1392
        %v1394 = vrot.slane %v1369, %v1393
        %v1396 = vadd.f32 %v1389, %v1394
        %1397 = vst.msk [vmem:[%s544] sm:$0xff] %vm575, %v1396
        %s1398 = sand.u32 %s345, 1
        %s1399 = scalar_lea.sflag [#allocation6], %s1398
        %s1400 = sand.u32 %s345, 1
        %s1401 = smul.addr %s1400, 8
        %s1402 = scalar_lea.vmem [#allocation13], %s1401
        // Predicated region
        $region97: #{tpu_custom_call.1} parent=75 // pred_check
          %p1403 = pneg %p355
        $region98: #{tpu_custom_call.1} parent=75 // pred_check_branch
          %1405 = sbr.rel (%p1403) target = $region100
        $region99: #{tpu_custom_call.1} parent=75 // pred_region
          %s1407 = ssub.s32 128, 128
          %1408 = vsyncadd %s1399, %s1407
          %s1409 = smul.addr %s33, 128
          %s1410 = scalar_lea.hbm %s14, %s1409
          %s1412 = sshll.u32 %s1402, 4
          %s1413 = int_to_ptr.vmem [resolvable:$true] %s1412
          %1415 = dma.vmem_to_hbm [thread:$0]  %s1413, 128, %s1410, %s1399
        $region100: #{tpu_custom_call.1} parent=75 // pred_fallthru
          _
      $region76: #{tpu_custom_call.1} parent=5 // pred_fallthru
        _
      %p1416 = scmp.le.s32.totalorder 2, %s28
      // Predicated region
      $region101: #{tpu_custom_call.1} parent=5 // pred_check
        %p1417 = pneg %p1416
      $region102: #{tpu_custom_call.1} parent=5 // pred_check_branch
        %1419 = sbr.rel (%p1417) target = $region104
      $region103: #{tpu_custom_call.1} parent=5 // pred_region
        %s1420 = ssub.s32 %s28, 2
        // Predicated region
        $region105: #{tpu_custom_call.1} parent=103 // pred_check
          %p1421 = pneg %p361
        $region106: #{tpu_custom_call.1} parent=103 // pred_check_branch
          %1423 = sbr.rel (%p1421) target = $region108
        $region107: #{tpu_custom_call.1} parent=103 // pred_region
          %s1424 = sand.u32 %s346, 1
          %s1425 = scalar_lea.sflag [#allocation6], %s1424
          %s1426 = sand.u32 %s346, 1
          %s1427 = smul.addr %s1426, 8
          %s1428 = scalar_lea.vmem [#allocation13], %s1427
          %1429 = dma.done %s1425, 128
        $region108: #{tpu_custom_call.1} parent=103 // pred_fallthru
          _
      $region104: #{tpu_custom_call.1} parent=5 // pred_fallthru
        _
    $region6: #{tpu_custom_call.1} parent=1 // loop_footer
      %s32 = sadd.s32 1, %s28
    $region7: #{tpu_custom_call.1} parent=1 // loop_footer_branch
      %27 = sbr.rel target = $region3
    $region8: #{tpu_custom_call.1} parent=1 // loop_exit
      _
    %1430 = vsyncpa [#allocation5], 1
    %s1431 = scalar_lea.sflag [#allocation5], 1
    %1432 = vsyncpa %s1431, 1
    %1433 = vsyncpa [#allocation8], 1
    %1434 = vsyncpa [#allocation11], 1
    %1435 = vsyncpa [#allocation6], 1
    %s1436 = scalar_lea.sflag [#allocation6], 1
    %1437 = vsyncpa %s1436, 1

// kernel: tpu_custom_call.1
$region0: #{tpu_custom_call.1}
  #allocation0 [shape = 'u32[]', space=smem, size = 0x4, offset = 0x4, fixed_abs, tag = 'smem constant byte address 0x4 - core index']
  #allocation1 [shape = 'u32[144,128]{1,0:T(1,128)}', space=vmem, size = 0x12000, scoped, tag = 'internal scratch']
  #allocation2 [shape = 'bf16[1,8,96]{2,1,0:T(8,128)(2,1)}', space=vmem, size = 0x800, scoped, tag = 'scratch operand']
  #allocation3 [shape = 'bf16[1,8,32]{2,1,0:T(8,128)(2,1)}', space=vmem, size = 0x800, scoped, tag = 'scratch operand']
  %s0 = inlined_call_operand.vmem [shape: f32[2,8,32], index: 0, kind: input, shape index: {}]
  %s1 = inlined_call_operand.hbm [shape: f32[2,1,8], index: 1, kind: input, shape index: {}]
  %s2 = inlined_call_operand.vmem [shape: bf16[32,96], index: 2, kind: input, shape index: {}]
  %s3 = inlined_call_operand.vmem [shape: f32[1,96], index: 3, kind: input, shape index: {}]
  %s4 = inlined_call_operand.vmem [shape: bf16[32,32], index: 4, kind: input, shape index: {}]
  %s5 = inlined_call_operand.vmem [shape: f32[1,32], index: 5, kind: input, shape index: {}]
  %s6 = inlined_call_operand.hbm [shape: f32[1,32], index: 6, kind: input, shape index: {}]
  %s7 = inlined_call_operand.hbm [shape: f32[1,32], index: 7, kind: input, shape index: {}]
  %s8 = inlined_call_operand.hbm [shape: bf16[32,64], index: 8, kind: input, shape index: {}]
  %s9 = inlined_call_operand.hbm [shape: f32[1,64], index: 9, kind: input, shape index: {}]
  %s10 = inlined_call_operand.vmem [shape: bf16[64,32], index: 10, kind: input, shape index: {}]
  %s11 = inlined_call_operand.vmem [shape: f32[1,32], index: 11, kind: input, shape index: {}]
  %s12 = inlined_call_operand.vmem [shape: f32[1,32], index: 12, kind: input, shape index: {}]
  %s13 = inlined_call_operand.vmem [shape: f32[1,32], index: 13, kind: input, shape index: {}]
  %s14 = inlined_call_operand.hbm [shape: f32[2,8,32], index: 14, kind: output, shape index: {}]
  %s15 = sld [smem:[#allocation0]]
  $region109: #{tpu_custom_call.1} parent=0
    _
  %s17 = ssub.s32 1, %s15
  %s18 = scalar_select 0, %s17, %s15
  $region1: #{tpu_custom_call.1} parent=0
    #allocation4 [shape = 'u8[1024]{0}', space=vmem, size = 0x400, scoped, tag = 'input window, operand 1']
    #allocation5 [shape = 's32[2]{0}', space=sflag, size = 0x8, scoped, tag = 'scoped memory for tpu_custom_call.1']
    #allocation6 [shape = 's32[2]{0}', space=sflag, size = 0x8, scoped, tag = 'scoped memory for tpu_custom_call.1']
    #allocation7 [shape = 'u8[512]{0}', space=vmem, size = 0x400, scoped, tag = 'input window, operand 6, single buffered']
    #allocation8 [shape = 's32[1]{0}', space=sflag, size = 0x4, scoped, tag = 'scoped memory for tpu_custom_call.1']
    #allocation9 [shape = 'u8[512]{0}', space=vmem, size = 0x400, scoped, tag = 'input window, operand 7, single buffered']
    #allocation10 [shape = 'u8[8192]{0}', space=vmem, size = 0x2000, scoped, tag = 'input window, operand 8, single buffered']
    #allocation11 [shape = 's32[1]{0}', space=sflag, size = 0x4, scoped, tag = 'scoped memory for tpu_custom_call.1']
    #allocation12 [shape = 'u8[512]{0}', space=vmem, size = 0x400, scoped, tag = 'input window, operand 9, single buffered']
    #allocation13 [shape = 'u8[8192]{0}', space=vmem, size = 0x2000, scoped, tag = 'output window, operand 0']
    %19 = vsyncpa [#allocation5], 0
    %s20 = scalar_lea.sflag [#allocation5], 1
    %21 = vsyncpa %s20, 0
    %22 = vsyncpa [#allocation8], 0
    %23 = vsyncpa [#allocation11], 0
    %24 = vsyncpa [#allocation6], 0
    %s25 = scalar_lea.sflag [#allocation6], 1
    %26 = vsyncpa %s25, 0
    loop: start=0, step=1, limit=4
    $region2: #{tpu_custom_call.1} parent=1 // loop_pre_header
      _
    $region3: #{tpu_custom_call.1} parent=1 // loop_header
      %s28 = sphi 0, %s32
      %p29 = scmp.ge.s32.totalorder %s28, 4
      %s38 = sphi 0, %s40
      %s41 = sphi 0, %s38
      %s42 = sphi 0, %s41
      %s58 = sphi 0, %s42
      %s64 = sphi 0, %s66
      %s67 = sphi 0, %s64
      %s68 = sphi 0, %s67
      %s84 = sphi 0, %s68
      %s88 = sphi 0, %s88
      %s90 = sphi 0, %s88
      %s91 = sphi 0, %s90
      %s105 = sphi 0, %s91
      %s109 = sphi 0, %s109
      %s111 = sphi 0, %s109
      %s112 = sphi 0, %s111
      %s126 = sphi 0, %s112
      %s130 = sphi 0, %s130
      %s132 = sphi 0, %s130
      %s133 = sphi 0, %s132
      %s147 = sphi 0, %s133
      %s151 = sphi 0, %s151
      %s153 = sphi 0, %s151
      %s154 = sphi 0, %s153
      %s168 = sphi 0, %s154
      %s172 = sphi 0, %s172
      %s174 = sphi 0, %s172
      %s175 = sphi 0, %s174
      %s189 = sphi 0, %s175
      %s193 = sphi 0, %s193
      %s195 = sphi 0, %s193
      %s196 = sphi 0, %s195
      %s210 = sphi 0, %s196
      %s214 = sphi 0, %s214
      %s216 = sphi 0, %s214
      %s217 = sphi 0, %s216
      %s231 = sphi 0, %s217
      %s235 = sphi 0, %s235
      %s237 = sphi 0, %s235
      %s238 = sphi 0, %s237
      %s252 = sphi 0, %s238
      %s256 = sphi 0, %s256
      %s258 = sphi 0, %s256
      %s259 = sphi 0, %s258
      %s273 = sphi 0, %s259
      %s277 = sphi 0, %s277
      %s279 = sphi 0, %s277
      %s280 = sphi 0, %s279
      %s294 = sphi 0, %s280
      %s298 = sphi 0, %s298
      %s300 = sphi 0, %s298
      %s301 = sphi 0, %s300
      %s315 = sphi 0, %s301
      %s319 = sphi 0, %s319
      %s321 = sphi 0, %s319
      %s322 = sphi 0, %s321
      %s336 = sphi 0, %s322
      %s342 = sphi 0, %s344
      %s345 = sphi 0, %s342
      %s346 = sphi 0, %s345
      %s362 = sphi 0, %s346
    $region4: #{tpu_custom_call.1} parent=1 // loop_header_branch
      %31 = sbr.rel (%p29) target = $region8
    $region5: #{tpu_custom_call.1} parent=1 // loop_body
      %s33 = ssub.s32 %s28, 1
      %s34 = ssub.s32 %s28, 2
      %s35 = sadd.s32 %s28, 1
      %s36 = ssub.s32 %s28, %s35
      %p37 = scmp.eq.s32.totalorder %s36, 0
      %s39 = sadd.s32 %s38, 1
      %s40 = scalar_select %p37, %s38, %s39
      %p43 = pneg %p37
      %p44 = scmp.eq.s32.totalorder %s28, 1
      %p45 = por %p43, %p44
      %p46 = scmp.ne.s32.totalorder %s38, %s41
      %p47 = scmp.eq.s32.totalorder %s28, 0
      %p48 = por %p46, %p47
      %p49 = scmp.ne.s32.totalorder %s38, %s41
      %p50 = scmp.eq.s32.totalorder %s33, 1
      %p51 = por %p49, %p50
      %p52 = scmp.ne.s32.totalorder %s41, %s42
      %p53 = scmp.eq.s32.totalorder %s33, 0
      %p54 = por %p52, %p53
      %p55 = scmp.ne.s32.totalorder %s41, %s42
      %p56 = scmp.eq.s32.totalorder %s34, 1
      %p57 = por %p55, %p56
      %p59 = scmp.ne.s32.totalorder %s42, %s58
      %p60 = scmp.eq.s32.totalorder %s34, 0
      %p61 = por %p59, %p60
      %s62 = ssub.s32 %s28, %s35
      %p63 = scmp.eq.s32.totalorder %s62, 0
      %s65 = sadd.s32 %s64, 1
      %s66 = scalar_select %p63, %s64, %s65
      %p69 = pneg %p63
      %p70 = scmp.eq.s32.totalorder %s28, 1
      %p71 = por %p69, %p70
      %p72 = scmp.ne.s32.totalorder %s64, %s67
      %p73 = scmp.eq.s32.totalorder %s28, 0
      %p74 = por %p72, %p73
      %p75 = scmp.ne.s32.totalorder %s64, %s67
      %p76 = scmp.eq.s32.totalorder %s33, 1
      %p77 = por %p75, %p76
      %p78 = scmp.ne.s32.totalorder %s67, %s68
      %p79 = scmp.eq.s32.totalorder %s33, 0
      %p80 = por %p78, %p79
      %p81 = scmp.ne.s32.totalorder %s67, %s68
      %p82 = scmp.eq.s32.totalorder %s34, 1
      %p83 = por %p81, %p82
      %p85 = scmp.ne.s32.totalorder %s68, %s84
      %p86 = scmp.eq.s32.totalorder %s34, 0
      %p87 = por %p85, %p86
      %s89 = sadd.s32 %s88, 1
      %p92 = scmp.eq.s32.totalorder %s28, 1
      %p93 = scmp.ne.s32.totalorder %s88, %s90
      %p94 = scmp.eq.s32.totalorder %s28, 0
      %p95 = por %p93, %p94
      %p96 = scmp.ne.s32.totalorder %s88, %s90
      %p97 = scmp.eq.s32.totalorder %s33, 1
      %p98 = por %p96, %p97
      %p99 = scmp.ne.s32.totalorder %s90, %s91
      %p100 = scmp.eq.s32.totalorder %s33, 0
      %p101 = por %p99, %p100
      %p102 = scmp.ne.s32.totalorder %s90, %s91
      %p103 = scmp.eq.s32.totalorder %s34, 1
      %p104 = por %p102, %p103
      %p106 = scmp.ne.s32.totalorder %s91, %s105
      %p107 = scmp.eq.s32.totalorder %s34, 0
      %p108 = por %p106, %p107
      %s110 = sadd.s32 %s109, 1
      %p113 = scmp.eq.s32.totalorder %s28, 1
      %p114 = scmp.ne.s32.totalorder %s109, %s111
      %p115 = scmp.eq.s32.totalorder %s28, 0
      %p116 = por %p114, %p115
      %p117 = scmp.ne.s32.totalorder %s109, %s111
      %p118 = scmp.eq.s32.totalorder %s33, 1
      %p119 = por %p117, %p118
      %p120 = scmp.ne.s32.totalorder %s111, %s112
      %p121 = scmp.eq.s32.totalorder %s33, 0
      %p122 = por %p120, %p121
      %p123 = scmp.ne.s32.totalorder %s111, %s112
      %p124 = scmp.eq.s32.totalorder %s34, 1
      %p125 = por %p123, %p124
      %p127 = scmp.ne.s32.totalorder %s112, %s126
      %p128 = scmp.eq.s32.totalorder %s34, 0
      %p129 = por %p127, %p128
      %s131 = sadd.s32 %s130, 1
      %p134 = scmp.eq.s32.totalorder %s28, 1
      %p135 = scmp.ne.s32.totalorder %s130, %s132
      %p136 = scmp.eq.s32.totalorder %s28, 0
      %p137 = por %p135, %p136
      %p138 = scmp.ne.s32.totalorder %s130, %s132
      %p139 = scmp.eq.s32.totalorder %s33, 1
      %p140 = por %p138, %p139
      %p141 = scmp.ne.s32.totalorder %s132, %s133
      %p142 = scmp.eq.s32.totalorder %s33, 0
      %p143 = por %p141, %p142
      %p144 = scmp.ne.s32.totalorder %s132, %s133
      %p145 = scmp.eq.s32.totalorder %s34, 1
      %p146 = por %p144, %p145
      %p148 = scmp.ne.s32.totalorder %s133, %s147
      %p149 = scmp.eq.s32.totalorder %s34, 0
      %p150 = por %p148, %p149
      %s152 = sadd.s32 %s151, 1
      %p155 = scmp.eq.s32.totalorder %s28, 1
      %p156 = scmp.ne.s32.totalorder %s151, %s153
      %p157 = scmp.eq.s32.totalorder %s28, 0
      %p158 = por %p156, %p157
      %p159 = scmp.ne.s32.totalorder %s151, %s153
      %p160 = scmp.eq.s32.totalorder %s33, 1
      %p161 = por %p159, %p160
      %p162 = scmp.ne.s32.totalorder %s153, %s154
      %p163 = scmp.eq.s32.totalorder %s33, 0
      %p164 = por %p162, %p163
      %p165 = scmp.ne.s32.totalorder %s153, %s154
      %p166 = scmp.eq.s32.totalorder %s34, 1
      %p167 = por %p165, %p166
      %p169 = scmp.ne.s32.totalorder %s154, %s168
      %p170 = scmp.eq.s32.totalorder %s34, 0
      %p171 = por %p169, %p170
      %s173 = sadd.s32 %s172, 1
      %p176 = scmp.eq.s32.totalorder %s28, 1
      %p177 = scmp.ne.s32.totalorder %s172, %s174
      %p178 = scmp.eq.s32.totalorder %s28, 0
      %p179 = por %p177, %p178
      %p180 = scmp.ne.s32.totalorder %s172, %s174
      %p181 = scmp.eq.s32.totalorder %s33, 1
      %p182 = por %p180, %p181
      %p183 = scmp.ne.s32.totalorder %s174, %s175
      %p184 = scmp.eq.s32.totalorder %s33, 0
      %p185 = por %p183, %p184
      %p186 = scmp.ne.s32.totalorder %s174, %s175
      %p187 = scmp.eq.s32.totalorder %s34, 1
      %p188 = por %p186, %p187
      %p190 = scmp.ne.s32.totalorder %s175, %s189
      %p191 = scmp.eq.s32.totalorder %s34, 0
      %p192 = por %p190, %p191
      %s194 = sadd.s32 %s193, 1
      %p197 = scmp.eq.s32.totalorder %s28, 1
      %p198 = scmp.ne.s32.totalorder %s193, %s195
      %p199 = scmp.eq.s32.totalorder %s28, 0
      %p200 = por %p198, %p199
      %p201 = scmp.ne.s32.totalorder %s193, %s195
      %p202 = scmp.eq.s32.totalorder %s33, 1
      %p203 = por %p201, %p202
      %p204 = scmp.ne.s32.totalorder %s195, %s196
      %p205 = scmp.eq.s32.totalorder %s33, 0
      %p206 = por %p204, %p205
      %p207 = scmp.ne.s32.totalorder %s195, %s196
      %p208 = scmp.eq.s32.totalorder %s34, 1
      %p209 = por %p207, %p208
      %p211 = scmp.ne.s32.totalorder %s196, %s210
      %p212 = scmp.eq.s32.totalorder %s34, 0
      %p213 = por %p211, %p212
      %s215 = sadd.s32 %s214, 1
      %p218 = scmp.eq.s32.totalorder %s28, 1
      %p219 = scmp.ne.s32.totalorder %s214, %s216
      %p220 = scmp.eq.s32.totalorder %s28, 0
      %p221 = por %p219, %p220
      %p222 = scmp.ne.s32.totalorder %s214, %s216
      %p223 = scmp.eq.s32.totalorder %s33, 1
      %p224 = por %p222, %p223
      %p225 = scmp.ne.s32.totalorder %s216, %s217
      %p226 = scmp.eq.s32.totalorder %s33, 0
      %p227 = por %p225, %p226
      %p228 = scmp.ne.s32.totalorder %s216, %s217
      %p229 = scmp.eq.s32.totalorder %s34, 1
      %p230 = por %p228, %p229
      %p232 = scmp.ne.s32.totalorder %s217, %s231
      %p233 = scmp.eq.s32.totalorder %s34, 0
      %p234 = por %p232, %p233
      %s236 = sadd.s32 %s235, 1
      %p239 = scmp.eq.s32.totalorder %s28, 1
      %p240 = scmp.ne.s32.totalorder %s235, %s237
      %p241 = scmp.eq.s32.totalorder %s28, 0
      %p242 = por %p240, %p241
      %p243 = scmp.ne.s32.totalorder %s235, %s237
      %p244 = scmp.eq.s32.totalorder %s33, 1
      %p245 = por %p243, %p244
      %p246 = scmp.ne.s32.totalorder %s237, %s238
      %p247 = scmp.eq.s32.totalorder %s33, 0
      %p248 = por %p246, %p247
      %p249 = scmp.ne.s32.totalorder %s237, %s238
      %p250 = scmp.eq.s32.totalorder %s34, 1
      %p251 = por %p249, %p250
      %p253 = scmp.ne.s32.totalorder %s238, %s252
      %p254 = scmp.eq.s32.totalorder %s34, 0
      %p255 = por %p253, %p254
      %s257 = sadd.s32 %s256, 1
      %p260 = scmp.eq.s32.totalorder %s28, 1
      %p261 = scmp.ne.s32.totalorder %s256, %s258
      %p262 = scmp.eq.s32.totalorder %s28, 0
      %p263 = por %p261, %p262
      %p264 = scmp.ne.s32.totalorder %s256, %s258
      %p265 = scmp.eq.s32.totalorder %s33, 1
      %p266 = por %p264, %p265
      %p267 = scmp.ne.s32.totalorder %s258, %s259
      %p268 = scmp.eq.s32.totalorder %s33, 0
      %p269 = por %p267, %p268
      %p270 = scmp.ne.s32.totalorder %s258, %s259
      %p271 = scmp.eq.s32.totalorder %s34, 1
      %p272 = por %p270, %p271
      %p274 = scmp.ne.s32.totalorder %s259, %s273
      %p275 = scmp.eq.s32.totalorder %s34, 0
      %p276 = por %p274, %p275
      %s278 = sadd.s32 %s277, 1
      %p281 = scmp.eq.s32.totalorder %s28, 1
      %p282 = scmp.ne.s32.totalorder %s277, %s279
      %p283 = scmp.eq.s32.totalorder %s28, 0
      %p284 = por %p282, %p283
      %p285 = scmp.ne.s32.totalorder %s277, %s279
      %p286 = scmp.eq.s32.totalorder %s33, 1
      %p287 = por %p285, %p286
      %p288 = scmp.ne.s32.totalorder %s279, %s280
      %p289 = scmp.eq.s32.totalorder %s33, 0
      %p290 = por %p288, %p289
      %p291 = scmp.ne.s32.totalorder %s279, %s280
      %p292 = scmp.eq.s32.totalorder %s34, 1
      %p293 = por %p291, %p292
      %p295 = scmp.ne.s32.totalorder %s280, %s294
      %p296 = scmp.eq.s32.totalorder %s34, 0
      %p297 = por %p295, %p296
      %s299 = sadd.s32 %s298, 1
      %p302 = scmp.eq.s32.totalorder %s28, 1
      %p303 = scmp.ne.s32.totalorder %s298, %s300
      %p304 = scmp.eq.s32.totalorder %s28, 0
      %p305 = por %p303, %p304
      %p306 = scmp.ne.s32.totalorder %s298, %s300
      %p307 = scmp.eq.s32.totalorder %s33, 1
      %p308 = por %p306, %p307
      %p309 = scmp.ne.s32.totalorder %s300, %s301
      %p310 = scmp.eq.s32.totalorder %s33, 0
      %p311 = por %p309, %p310
      %p312 = scmp.ne.s32.totalorder %s300, %s301
      %p313 = scmp.eq.s32.totalorder %s34, 1
      %p314 = por %p312, %p313
      %p316 = scmp.ne.s32.totalorder %s301, %s315
      %p317 = scmp.eq.s32.totalorder %s34, 0
      %p318 = por %p316, %p317
      %s320 = sadd.s32 %s319, 1
      %p323 = scmp.eq.s32.totalorder %s28, 1
      %p324 = scmp.ne.s32.totalorder %s319, %s321
      %p325 = scmp.eq.s32.totalorder %s28, 0
      %p326 = por %p324, %p325
      %p327 = scmp.ne.s32.totalorder %s319, %s321
      %p328 = scmp.eq.s32.totalorder %s33, 1
      %p329 = por %p327, %p328
      %p330 = scmp.ne.s32.totalorder %s321, %s322
      %p331 = scmp.eq.s32.totalorder %s33, 0
      %p332 = por %p330, %p331
      %p333 = scmp.ne.s32.totalorder %s321, %s322
      %p334 = scmp.eq.s32.totalorder %s34, 1
      %p335 = por %p333, %p334
      %p337 = scmp.ne.s32.totalorder %s322, %s336
      %p338 = scmp.eq.s32.totalorder %s34, 0
      %p339 = por %p337, %p338
      %s340 = ssub.s32 %s28, %s35
      %p341 = scmp.eq.s32.totalorder %s340, 0
      %s343 = sadd.s32 %s342, 1
      %s344 = scalar_select %p341, %s342, %s343
      %p347 = pneg %p341
      %p348 = scmp.eq.s32.totalorder %s28, 1
      %p349 = por %p347, %p348
      %p350 = scmp.ne.s32.totalorder %s342, %s345
      %p351 = scmp.eq.s32.totalorder %s28, 0
      %p352 = por %p350, %p351
      %p353 = scmp.ne.s32.totalorder %s342, %s345
      %p354 = scmp.eq.s32.totalorder %s33, 1
      %p355 = por %p353, %p354
      %p356 = scmp.ne.s32.totalorder %s345, %s346
      %p357 = scmp.eq.s32.totalorder %s33, 0
      %p358 = por %p356, %p357
      %p359 = scmp.ne.s32.totalorder %s345, %s346
      %p360 = scmp.eq.s32.totalorder %s34, 1
      %p361 = por %p359, %p360
      %p363 = scmp.ne.s32.totalorder %s346, %s362
      %p364 = scmp.eq.s32.totalorder %s34, 0
      %p365 = por %p363, %p364
      %p366 = scmp.le.s32.totalorder 1, %s28
      %p367 = scmp.lt.s32.totalorder %s28, 3
      %p368 = pnand %p366, %p367
      %p369 = pneg %p368
      // Predicated region
      $region9: #{tpu_custom_call.1} parent=5 // pred_check
        _
      $region10: #{tpu_custom_call.1} parent=5 // pred_check_branch
        %371 = sbr.rel (%p368) target = $region12
      $region11: #{tpu_custom_call.1} parent=5 // pred_region
        %s372 = ssub.s32 %s28, 1
        // Predicated region
        $region13: #{tpu_custom_call.1} parent=11 // pred_check
          %p373 = pneg %p101
        $region14: #{tpu_custom_call.1} parent=11 // pred_check_branch
          %375 = sbr.rel (%p373) target = $region16
        $region15: #{tpu_custom_call.1} parent=11 // pred_region
          _
        $region16: #{tpu_custom_call.1} parent=11 // pred_fallthru
          _
        // Predicated region
        $region17: #{tpu_custom_call.1} parent=11 // pred_check
          %p376 = pneg %p122
        $region18: #{tpu_custom_call.1} parent=11 // pred_check_branch
          %378 = sbr.rel (%p376) target = $region20
        $region19: #{tpu_custom_call.1} parent=11 // pred_region
          _
        $region20: #{tpu_custom_call.1} parent=11 // pred_fallthru
          _
        // Predicated region
        $region21: #{tpu_custom_call.1} parent=11 // pred_check
          %p379 = pneg %p143
        $region22: #{tpu_custom_call.1} parent=11 // pred_check_branch
          %381 = sbr.rel (%p379) target = $region24
        $region23: #{tpu_custom_call.1} parent=11 // pred_region
          _
        $region24: #{tpu_custom_call.1} parent=11 // pred_fallthru
          _
        // Predicated region
        $region25: #{tpu_custom_call.1} parent=11 // pred_check
          %p382 = pneg %p164
        $region26: #{tpu_custom_call.1} parent=11 // pred_check_branch
          %384 = sbr.rel (%p382) target = $region28
        $region27: #{tpu_custom_call.1} parent=11 // pred_region
          _
        $region28: #{tpu_custom_call.1} parent=11 // pred_fallthru
          _
        // Predicated region
        $region29: #{tpu_custom_call.1} parent=11 // pred_check
          %p385 = pneg %p185
        $region30: #{tpu_custom_call.1} parent=11 // pred_check_branch
          %387 = sbr.rel (%p385) target = $region32
        $region31: #{tpu_custom_call.1} parent=11 // pred_region
          %s389 = ssub.s32 16, 16
          %390 = vsyncadd [#allocation8], %s389
          %s392 = sshll.u32 [#allocation7], 4
          %s393 = int_to_ptr.vmem [resolvable:$true] %s392
          %395 = dma.hbm_to_vmem [thread:$0]  %s6, 16, %s393, [#allocation8]
        $region32: #{tpu_custom_call.1} parent=11 // pred_fallthru
          _
        // Predicated region
        $region33: #{tpu_custom_call.1} parent=11 // pred_check
          %p396 = pneg %p206
        $region34: #{tpu_custom_call.1} parent=11 // pred_check_branch
          %398 = sbr.rel (%p396) target = $region36
        $region35: #{tpu_custom_call.1} parent=11 // pred_region
          %s400 = ssub.s32 16, 16
          %401 = vsyncadd [#allocation8], %s400
          %s403 = sshll.u32 [#allocation9], 4
          %s404 = int_to_ptr.vmem [resolvable:$true] %s403
          %406 = dma.hbm_to_vmem [thread:$0]  %s7, 16, %s404, [#allocation8]
        $region36: #{tpu_custom_call.1} parent=11 // pred_fallthru
          _
        // Predicated region
        $region37: #{tpu_custom_call.1} parent=11 // pred_check
          %p407 = pneg %p227
        $region38: #{tpu_custom_call.1} parent=11 // pred_check_branch
          %409 = sbr.rel (%p407) target = $region40
        $region39: #{tpu_custom_call.1} parent=11 // pred_region
          %s411 = ssub.s32 256, 256
          %412 = vsyncadd [#allocation11], %s411
          %s413 = sshll.u32 [#allocation10], 4
          %s414 = int_to_ptr.vmem [resolvable:$true] %s413
          %419 = dma.hbm_to_vmem [thread:$0]  %s8, 256, %s414, [#allocation11], 64, 64, 4
        $region40: #{tpu_custom_call.1} parent=11 // pred_fallthru
          _
        // Predicated region
        $region41: #{tpu_custom_call.1} parent=11 // pred_check
          %p420 = pneg %p248
        $region42: #{tpu_custom_call.1} parent=11 // pred_check_branch
          %422 = sbr.rel (%p420) target = $region44
        $region43: #{tpu_custom_call.1} parent=11 // pred_region
          %s424 = ssub.s32 16, 16
          %425 = vsyncadd [#allocation11], %s424
          %s427 = sshll.u32 [#allocation12], 4
          %s428 = int_to_ptr.vmem [resolvable:$true] %s427
          %430 = dma.hbm_to_vmem [thread:$0]  %s9, 16, %s428, [#allocation11]
        $region44: #{tpu_custom_call.1} parent=11 // pred_fallthru
          _
        // Predicated region
        $region45: #{tpu_custom_call.1} parent=11 // pred_check
          %p431 = pneg %p269
        $region46: #{tpu_custom_call.1} parent=11 // pred_check_branch
          %433 = sbr.rel (%p431) target = $region48
        $region47: #{tpu_custom_call.1} parent=11 // pred_region
          _
        $region48: #{tpu_custom_call.1} parent=11 // pred_fallthru
          _
        // Predicated region
        $region49: #{tpu_custom_call.1} parent=11 // pred_check
          %p434 = pneg %p290
        $region50: #{tpu_custom_call.1} parent=11 // pred_check_branch
          %436 = sbr.rel (%p434) target = $region52
        $region51: #{tpu_custom_call.1} parent=11 // pred_region
          _
        $region52: #{tpu_custom_call.1} parent=11 // pred_fallthru
          _
        // Predicated region
        $region53: #{tpu_custom_call.1} parent=11 // pred_check
          %p437 = pneg %p311
        $region54: #{tpu_custom_call.1} parent=11 // pred_check_branch
          %439 = sbr.rel (%p437) target = $region56
        $region55: #{tpu_custom_call.1} parent=11 // pred_region
          _
        $region56: #{tpu_custom_call.1} parent=11 // pred_fallthru
          _
        // Predicated region
        $region57: #{tpu_custom_call.1} parent=11 // pred_check
          %p440 = pneg %p332
        $region58: #{tpu_custom_call.1} parent=11 // pred_check_branch
          %442 = sbr.rel (%p440) target = $region60
        $region59: #{tpu_custom_call.1} parent=11 // pred_region
          _
        $region60: #{tpu_custom_call.1} parent=11 // pred_fallthru
          _
      $region12: #{tpu_custom_call.1} parent=5 // pred_fallthru
        _
      %p443 = scmp.lt.s32.totalorder %s28, 2
      // Predicated region
      $region61: #{tpu_custom_call.1} parent=5 // pred_check
        %p444 = pneg %p443
      $region62: #{tpu_custom_call.1} parent=5 // pred_check_branch
        %446 = sbr.rel (%p444) target = $region64
      $region63: #{tpu_custom_call.1} parent=5 // pred_region
        // Predicated region
        $region65: #{tpu_custom_call.1} parent=63 // pred_check
          %p447 = pneg %p48
        $region66: #{tpu_custom_call.1} parent=63 // pred_check_branch
          %449 = sbr.rel (%p447) target = $region68
        $region67: #{tpu_custom_call.1} parent=63 // pred_region
          %p450 = scmp.lt.s32.totalorder %s28, 1
          %s451 = scalar_select %p450, %s28, 1
          %s452 = smul.addr %s451, 8
          %s453 = scalar_lea.vmem %s0, %s452
        $region68: #{tpu_custom_call.1} parent=63 // pred_fallthru
          _
        // Predicated region
        $region69: #{tpu_custom_call.1} parent=63 // pred_check
          %p454 = pneg %p74
        $region70: #{tpu_custom_call.1} parent=63 // pred_check_branch
          %456 = sbr.rel (%p454) target = $region72
        $region71: #{tpu_custom_call.1} parent=63 // pred_region
          %s457 = sand.u32 %s64, 1
          %s458 = scalar_lea.sflag [#allocation5], %s457
          %s459 = sand.u32 %s64, 1
          %s460 = scalar_lea.vmem [#allocation4], %s459
          %s462 = ssub.s32 16, 16
          %463 = vsyncadd %s458, %s462
          %s464 = smul.addr %s28, 16
          %s465 = scalar_lea.hbm %s1, %s464
          %s467 = sshll.u32 %s460, 4
          %s468 = int_to_ptr.vmem [resolvable:$true] %s467
          %470 = dma.hbm_to_vmem [thread:$0]  %s465, 16, %s468, %s458
        $region72: #{tpu_custom_call.1} parent=63 // pred_fallthru
          _
      $region64: #{tpu_custom_call.1} parent=5 // pred_fallthru
        _
      %p471 = scmp.le.s32.totalorder 1, %s28
      %p472 = scmp.lt.s32.totalorder %s28, 3
      %p473 = pnand %p471, %p472
      %p474 = pneg %p473
      // Predicated region
      $region73: #{tpu_custom_call.1} parent=5 // pred_check
        _
      $region74: #{tpu_custom_call.1} parent=5 // pred_check_branch
        %476 = sbr.rel (%p473) target = $region76
      $region75: #{tpu_custom_call.1} parent=5 // pred_region
        %s477 = ssub.s32 %s28, 1
        %s478 = sand.u32 %s67, 1
        %s479 = scalar_lea.sflag [#allocation5], %s478
        %s480 = sand.u32 %s67, 1
        %s481 = scalar_lea.vmem [#allocation4], %s480
        // Predicated region
        $region77: #{tpu_custom_call.1} parent=75 // pred_check
          %p482 = pneg %p80
        $region78: #{tpu_custom_call.1} parent=75 // pred_check_branch
          %484 = sbr.rel (%p482) target = $region80
        $region79: #{tpu_custom_call.1} parent=75 // pred_region
          %485 = dma.done %s479, 16
        $region80: #{tpu_custom_call.1} parent=75 // pred_fallthru
          _
        // Predicated region
        $region81: #{tpu_custom_call.1} parent=75 // pred_check
          %p486 = pneg %p185
        $region82: #{tpu_custom_call.1} parent=75 // pred_check_branch
          %488 = sbr.rel (%p486) target = $region84
        $region83: #{tpu_custom_call.1} parent=75 // pred_region
          %489 = dma.done [#allocation8], 16
        $region84: #{tpu_custom_call.1} parent=75 // pred_fallthru
          _
        // Predicated region
        $region85: #{tpu_custom_call.1} parent=75 // pred_check
          %p490 = pneg %p206
        $region86: #{tpu_custom_call.1} parent=75 // pred_check_branch
          %492 = sbr.rel (%p490) target = $region88
        $region87: #{tpu_custom_call.1} parent=75 // pred_region
          %493 = dma.done [#allocation8], 16
        $region88: #{tpu_custom_call.1} parent=75 // pred_fallthru
          _
        // Predicated region
        $region89: #{tpu_custom_call.1} parent=75 // pred_check
          %p494 = pneg %p227
        $region90: #{tpu_custom_call.1} parent=75 // pred_check_branch
          %496 = sbr.rel (%p494) target = $region92
        $region91: #{tpu_custom_call.1} parent=75 // pred_region
          %497 = dma.done [#allocation11], 256
        $region92: #{tpu_custom_call.1} parent=75 // pred_fallthru
          _
        // Predicated region
        $region93: #{tpu_custom_call.1} parent=75 // pred_check
          %p498 = pneg %p248
        $region94: #{tpu_custom_call.1} parent=75 // pred_check_branch
          %500 = sbr.rel (%p498) target = $region96
        $region95: #{tpu_custom_call.1} parent=75 // pred_region
          %501 = dma.done [#allocation11], 16
        $region96: #{tpu_custom_call.1} parent=75 // pred_fallthru
          _
        %p502 = scmp.lt.s32.totalorder %s33, 1
        %s503 = scalar_select %p502, %s33, 1
        %s504 = smul.addr %s503, 8
        %s505 = scalar_lea.vmem %s0, %s504
        %p506 = pneg %p54
        %p507 = pneg %p51
        %s508 = sand.u32 %s67, 1
        %s509 = scalar_lea.sflag [#allocation5], %s508
        %s510 = sand.u32 %s67, 1
        %s511 = scalar_lea.vmem [#allocation4], %s510
        %p512 = pneg %p80
        %p513 = pneg %p77
        %p514 = pneg %p101
        %p515 = pneg %p98
        %p516 = pneg %p122
        %p517 = pneg %p119
        %p518 = pneg %p143
        %p519 = pneg %p140
        %p520 = pneg %p164
        %p521 = pneg %p161
        %p522 = pneg %p185
        %p523 = pneg %p182
        %p524 = pneg %p206
        %p525 = pneg %p203
        %p526 = pneg %p227
        %p527 = pneg %p224
        %p528 = pneg %p248
        %p529 = pneg %p245
        %p530 = pneg %p269
        %p531 = pneg %p266
        %p532 = pneg %p290
        %p533 = pneg %p287
        %p534 = pneg %p311
        %p535 = pneg %p308
        %p536 = pneg %p332
        %p537 = pneg %p329
        %p538 = pneg %p358
        %p539 = pneg %p355
        %s540 = sand.u32 %s345, 1
        %s541 = scalar_lea.sflag [#allocation6], %s540
        %s542 = sand.u32 %s345, 1
        %s543 = smul.addr %s542, 8
        %s544 = scalar_lea.vmem [#allocation13], %s543
        %p545 = scmp.lt.s32.totalorder %s33, 1
        %s546 = scalar_select %p545, %s33, 1
        %s547 = smul.addr %s546, 8
        %s548 = scalar_lea.vmem %s0, %s547
        %v550 = vld [vmem:[%s548] sm:$0xff]
        %v551 = vpack.c.bf16 %v550, %v550
        %v552 = vld [vmem:[%s2] sm:$0xf]
        %v553 = vld [vmem:[%s2 + $0x4] sm:$0xf]
        %v554 = vld [vmem:[%s2 + $0x8] sm:$0xf]
        %v555 = vld [vmem:[%s2 + $0xc] sm:$0xf]
        %v556 = vld [vmem:[%s3] sm:$0x1]
        %v558 = vlaneseq
        %v559 = vshrl.u32 %v558, 7
        %v560 = vsub.s32 0, %v559
        %v561 = vrot.slane %v556, %v560
        %v567 = vunpack.c.l.b16 %v552
        %v568 = vunpack.c.l.b16 %v553
        %v569 = vunpack.c.l.b16 %v554
        %v570 = vunpack.c.l.b16 %v555
        %v571 = vpack.c.b16 %v568, %v567
        %v572 = vpack.c.b16 %v570, %v569
        %vm575 = vcmask 261120
        %v577 = vsel %vm575, %v551, 0
        %579 = vmatprep.subr.bf16.mxu0 0
        %580 = vmatpush1.bf16.msra.mxu0 0
        %581 = vmatprep.subr.bf16.mxu0 0
        %582 = vmatpush1.bf16.msra.mxu0 0
        %583 = vmatprep.subr.bf16.mxu0 0
        %584 = vmatpush1.bf16.msra.mxu0 0
        %585 = vmatprep.subr.bf16.mxu0 0
        %586 = vmatpush1.bf16.msra.mxu0 0
        %587 = vmatprep.subr.bf16.mxu0 0
        %588 = vmatpush1.bf16.msra.mxu0 0
        %589 = vmatprep.subr.bf16.mxu0 0
        %590 = vmatpush1.bf16.msra.mxu0 0
        %591 = vmatprep.subr.bf16.mxu0 0
        %592 = vmatpush1.bf16.msra.mxu0 %v572
        %593 = vmatprep.subr.bf16.mxu0 0
        %594 = vmatpush1.bf16.msra.mxu0 %v571
        %595 = vmatprep.subr.bf16.mxu0 0
        %596 = vmatpush2.bf16.msra.mxu0 0
        %597 = vmatprep.subr.bf16.mxu0 0
        %598 = vmatpush2.bf16.msra.mxu0 0
        %599 = vmatprep.subr.bf16.mxu0 0
        %600 = vmatpush2.bf16.msra.mxu0 0
        %601 = vmatprep.subr.bf16.mxu0 0
        %602 = vmatpush2.bf16.msra.mxu0 0
        %603 = vmatprep.subr.bf16.mxu0 0
        %604 = vmatpush2.bf16.msra.mxu0 0
        %605 = vmatprep.subr.bf16.mxu0 0
        %606 = vmatpush2.bf16.msra.mxu0 0
        %607 = vmatprep.subr.bf16.mxu0 0
        %608 = vmatpush2.bf16.msra.mxu0 0
        %609 = vmatprep.subr.bf16.mxu0 0
        %610 = vmatpush2.bf16.msra.mxu0 0
        %611 = vmatprep.mubr.bf16.mxu0 0
        %612 = vmatmul.mubr.bf16.gmra.mxu0 %v577
        %v613 = vpop.f32.mrf.mxu0
        %v614 = vadd.f32 %v561, %v613
        %v615 = vpop.f32.mrf.mxu0
        %v616 = vpop.f32.mrf.mxu0
        %v617 = vpop.f32.mrf.mxu0
        %618 = vdwg.mxu0
        %v619 = vpack.c.bf16 %v614, %v614
        %vm620 = vcmask 781312
        %621 = vst.msk [vmem:[#allocation2] sm:$0xf] %vm620, %v619
        %v622 = vld [vmem:[%s481] sm:$0x1]
        %vm623 = vcmp.gt.f32.partialorder %v622, 0.0
        %v624 = vsel %vm623, 0.0, -1e+09
        %v625 = vld [vmem:[#allocation2] sm:$0xf]
        %v627 = vlaneseq
        %v628 = vshrl.u32 %v627, 7
        %v629 = vsub.s32 0, %v628
        %v630 = vrot.slane %v624, %v629
        %v633 = vunpack.c.l.b16 %v625
        %v634 = vpack.c.b16 %v633, %v633
        %635 = vrot.lane.b32.xlu0 %v634, 96
        %v636 = vpop.permute.xlu0 %635
        %vm637 = vcmask 64512
        %v639 = vsel %vm637, %v625, 0
        %v642 = vsel %vm637, %v636, 0
        %644 = vmatprep.subr.bf16.mxu0 0
        %645 = vmatpush1.bf16.xpose.msra.mxu0 0
        %646 = vmatprep.subr.bf16.mxu0 0
        %647 = vmatpush1.bf16.xpose.msra.mxu0 0
        %648 = vmatprep.subr.bf16.mxu0 0
        %649 = vmatpush1.bf16.xpose.msra.mxu0 0
        %650 = vmatprep.subr.bf16.mxu0 0
        %651 = vmatpush1.bf16.xpose.msra.mxu0 0
        %652 = vmatprep.subr.bf16.mxu0 0
        %653 = vmatpush1.bf16.xpose.msra.mxu0 0
        %654 = vmatprep.subr.bf16.mxu0 0
        %655 = vmatpush1.bf16.xpose.msra.mxu0 0
        %656 = vmatprep.subr.bf16.mxu0 0
        %657 = vmatpush1.bf16.xpose.msra.mxu0 0
        %658 = vmatprep.subr.bf16.mxu0 0
        %659 = vmatpush1.bf16.xpose.msra.mxu0 %v642
        %660 = vmatprep.subr.bf16.mxu0 0
        %661 = vmatpush2.bf16.xpose.msra.mxu0 0
        %662 = vmatprep.subr.bf16.mxu0 0
        %663 = vmatpush2.bf16.xpose.msra.mxu0 0
        %664 = vmatprep.subr.bf16.mxu0 0
        %665 = vmatpush2.bf16.xpose.msra.mxu0 0
        %666 = vmatprep.subr.bf16.mxu0 0
        %667 = vmatpush2.bf16.xpose.msra.mxu0 0
        %668 = vmatprep.subr.bf16.mxu0 0
        %669 = vmatpush2.bf16.xpose.msra.mxu0 0
        %670 = vmatprep.subr.bf16.mxu0 0
        %671 = vmatpush2.bf16.xpose.msra.mxu0 0
        %672 = vmatprep.subr.bf16.mxu0 0
        %673 = vmatpush2.bf16.xpose.msra.mxu0 0
        %674 = vmatprep.subr.bf16.mxu0 0
        %675 = vmatpush2.bf16.xpose.msra.mxu0 0
        %676 = vmatprep.mubr.bf16.mxu0 0
        %677 = vmatmul.mubr.bf16.gmra.mxu0 %v639
        %v678 = vpop.f32.mrf.mxu0
        %v679 = vadd.f32 %v630, %v678
        %v680 = vpop.f32.mrf.mxu0
        %v681 = vpop.f32.mrf.mxu0
        %v682 = vpop.f32.mrf.mxu0
        %683 = vdwg.mxu0
        %v684 = vsel %vm637, %v679, -inf
        %685 = vmax.xlane.f32.xlu0 %v684
        %v686 = vpop.xlane.xlu0 %685
        %v687 = vsub.f32 %v679, %v686
        %v688 = vmul.f32 %v687, 1.442695
        %v689 = vpow.pop %v688
        %v690 = vsel %vm637, %v689, 0.0
        %691 = vadd.xlane.f32.xlu0 %v690
        %v692 = vpop.xlane.xlu0 %691
        %v693 = vrcp.pop %v692
        %v694 = vmul.f32 %v689, %v693
        %v695 = vpack.c.bf16 %v694, %v694
        %696 = vrot.lane.b32.xlu0 %v634, 64
        %v697 = vpop.permute.xlu0 %696
        %v699 = vsel %vm637, %v695, 0
        %vm701 = vcmask 1043456
        %v703 = vsel %vm701, %v697, 0
        %705 = vmatprep.subr.bf16.mxu0 0
        %706 = vmatpush1.bf16.msra.mxu0 0
        %707 = vmatprep.subr.bf16.mxu0 0
        %708 = vmatpush1.bf16.msra.mxu0 0
        %709 = vmatprep.subr.bf16.mxu0 0
        %710 = vmatpush1.bf16.msra.mxu0 0
        %711 = vmatprep.subr.bf16.mxu0 0
        %712 = vmatpush1.bf16.msra.mxu0 0
        %713 = vmatprep.subr.bf16.mxu0 0
        %714 = vmatpush1.bf16.msra.mxu0 0
        %715 = vmatprep.subr.bf16.mxu0 0
        %716 = vmatpush1.bf16.msra.mxu0 0
        %717 = vmatprep.subr.bf16.mxu0 0
        %718 = vmatpush1.bf16.msra.mxu0 0
        %719 = vmatprep.subr.bf16.mxu0 0
        %720 = vmatpush1.bf16.msra.mxu0 %v703
        %721 = vmatprep.subr.bf16.mxu0 0
        %722 = vmatpush2.bf16.msra.mxu0 0
        %723 = vmatprep.subr.bf16.mxu0 0
        %724 = vmatpush2.bf16.msra.mxu0 0
        %725 = vmatprep.subr.bf16.mxu0 0
        %726 = vmatpush2.bf16.msra.mxu0 0
        %727 = vmatprep.subr.bf16.mxu0 0
        %728 = vmatpush2.bf16.msra.mxu0 0
        %729 = vmatprep.subr.bf16.mxu0 0
        %730 = vmatpush2.bf16.msra.mxu0 0
        %731 = vmatprep.subr.bf16.mxu0 0
        %732 = vmatpush2.bf16.msra.mxu0 0
        %733 = vmatprep.subr.bf16.mxu0 0
        %734 = vmatpush2.bf16.msra.mxu0 0
        %735 = vmatprep.subr.bf16.mxu0 0
        %736 = vmatpush2.bf16.msra.mxu0 0
        %737 = vmatprep.mubr.bf16.mxu0 0
        %738 = vmatmul.mubr.bf16.gmra.mxu0 %v699
        %v739 = vpop.f32.mrf.mxu0
        %v740 = vadd.f32 0.0, %v739
        %v741 = vpop.f32.mrf.mxu0
        %v742 = vpop.f32.mrf.mxu0
        %v743 = vpop.f32.mrf.mxu0
        %744 = vdwg.mxu0
        %v745 = vpack.c.bf16 %v740, %v740
        %vm746 = vcmask 60416
        %747 = vst.msk [vmem:[#allocation3] sm:$0xf] %vm746, %v745
        %v748 = vld [vmem:[#allocation2] sm:$0xf]
        %v750 = vunpack.c.l.b16 %v748
        %v751 = vpack.c.b16 %v750, %v750
        %752 = vrot.lane.b32.xlu0 %v751, 120
        %v753 = vpop.permute.xlu0 %752
        %754 = vrot.lane.b32.xlu0 %v751, 88
        %v755 = vpop.permute.xlu0 %754
        %v757 = vsel %vm637, %v753, 0
        %v760 = vsel %vm637, %v755, 0
        %762 = vmatprep.subr.bf16.mxu0 0
        %763 = vmatpush1.bf16.xpose.msra.mxu0 0
        %764 = vmatprep.subr.bf16.mxu0 0
        %765 = vmatpush1.bf16.xpose.msra.mxu0 0
        %766 = vmatprep.subr.bf16.mxu0 0
        %767 = vmatpush1.bf16.xpose.msra.mxu0 0
        %768 = vmatprep.subr.bf16.mxu0 0
        %769 = vmatpush1.bf16.xpose.msra.mxu0 0
        %770 = vmatprep.subr.bf16.mxu0 0
        %771 = vmatpush1.bf16.xpose.msra.mxu0 0
        %772 = vmatprep.subr.bf16.mxu0 0
        %773 = vmatpush1.bf16.xpose.msra.mxu0 0
        %774 = vmatprep.subr.bf16.mxu0 0
        %775 = vmatpush1.bf16.xpose.msra.mxu0 0
        %776 = vmatprep.subr.bf16.mxu0 0
        %777 = vmatpush1.bf16.xpose.msra.mxu0 %v760
        %778 = vmatprep.subr.bf16.mxu0 0
        %779 = vmatpush2.bf16.xpose.msra.mxu0 0
        %780 = vmatprep.subr.bf16.mxu0 0
        %781 = vmatpush2.bf16.xpose.msra.mxu0 0
        %782 = vmatprep.subr.bf16.mxu0 0
        %783 = vmatpush2.bf16.xpose.msra.mxu0 0
        %784 = vmatprep.subr.bf16.mxu0 0
        %785 = vmatpush2.bf16.xpose.msra.mxu0 0
        %786 = vmatprep.subr.bf16.mxu0 0
        %787 = vmatpush2.bf16.xpose.msra.mxu0 0
        %788 = vmatprep.subr.bf16.mxu0 0
        %789 = vmatpush2.bf16.xpose.msra.mxu0 0
        %790 = vmatprep.subr.bf16.mxu0 0
        %791 = vmatpush2.bf16.xpose.msra.mxu0 0
        %792 = vmatprep.subr.bf16.mxu0 0
        %793 = vmatpush2.bf16.xpose.msra.mxu0 0
        %794 = vmatprep.mubr.bf16.mxu0 0
        %795 = vmatmul.mubr.bf16.gmra.mxu0 %v757
        %v796 = vpop.f32.mrf.mxu0
        %v797 = vadd.f32 %v630, %v796
        %v798 = vpop.f32.mrf.mxu0
        %v799 = vpop.f32.mrf.mxu0
        %v800 = vpop.f32.mrf.mxu0
        %801 = vdwg.mxu0
        %v802 = vsel %vm637, %v797, -inf
        %803 = vmax.xlane.f32.xlu0 %v802
        %v804 = vpop.xlane.xlu0 %803
        %v805 = vsub.f32 %v797, %v804
        %v806 = vmul.f32 %v805, 1.442695
        %v807 = vpow.pop %v806
        %v808 = vsel %vm637, %v807, 0.0
        %809 = vadd.xlane.f32.xlu0 %v808
        %v810 = vpop.xlane.xlu0 %809
        %v811 = vrcp.pop %v810
        %v812 = vmul.f32 %v807, %v811
        %v813 = vpack.c.bf16 %v812, %v812
        %814 = vrot.lane.b32.xlu0 %v751, 56
        %v815 = vpop.permute.xlu0 %814
        %v817 = vsel %vm637, %v813, 0
        %v820 = vsel %vm701, %v815, 0
        %822 = vmatprep.subr.bf16.mxu0 0
        %823 = vmatpush1.bf16.msra.mxu0 0
        %824 = vmatprep.subr.bf16.mxu0 0
        %825 = vmatpush1.bf16.msra.mxu0 0
        %826 = vmatprep.subr.bf16.mxu0 0
        %827 = vmatpush1.bf16.msra.mxu0 0
        %828 = vmatprep.subr.bf16.mxu0 0
        %829 = vmatpush1.bf16.msra.mxu0 0
        %830 = vmatprep.subr.bf16.mxu0 0
        %831 = vmatpush1.bf16.msra.mxu0 0
        %832 = vmatprep.subr.bf16.mxu0 0
        %833 = vmatpush1.bf16.msra.mxu0 0
        %834 = vmatprep.subr.bf16.mxu0 0
        %835 = vmatpush1.bf16.msra.mxu0 0
        %836 = vmatprep.subr.bf16.mxu0 0
        %837 = vmatpush1.bf16.msra.mxu0 %v820
        %838 = vmatprep.subr.bf16.mxu0 0
        %839 = vmatpush2.bf16.msra.mxu0 0
        %840 = vmatprep.subr.bf16.mxu0 0
        %841 = vmatpush2.bf16.msra.mxu0 0
        %842 = vmatprep.subr.bf16.mxu0 0
        %843 = vmatpush2.bf16.msra.mxu0 0
        %844 = vmatprep.subr.bf16.mxu0 0
        %845 = vmatpush2.bf16.msra.mxu0 0
        %846 = vmatprep.subr.bf16.mxu0 0
        %847 = vmatpush2.bf16.msra.mxu0 0
        %848 = vmatprep.subr.bf16.mxu0 0
        %849 = vmatpush2.bf16.msra.mxu0 0
        %850 = vmatprep.subr.bf16.mxu0 0
        %851 = vmatpush2.bf16.msra.mxu0 0
        %852 = vmatprep.subr.bf16.mxu0 0
        %853 = vmatpush2.bf16.msra.mxu0 0
        %854 = vmatprep.mubr.bf16.mxu0 0
        %855 = vmatmul.mubr.bf16.gmra.mxu0 %v817
        %v856 = vpop.f32.mrf.mxu0
        %v857 = vadd.f32 0.0, %v856
        %v858 = vpop.f32.mrf.mxu0
        %v859 = vpop.f32.mrf.mxu0
        %v860 = vpop.f32.mrf.mxu0
        %861 = vdwg.mxu0
        %v862 = vpack.c.bf16 %v857, %v857
        %v864 = vunpack.c.l.b16 %v862
        %v865 = vpack.c.b16 %v864, %v864
        %866 = vrot.lane.b32.xlu0 %v865, 8
        %v867 = vpop.permute.xlu0 %866
        %vm869 = vcmask 126016
        %870 = vst.msk [vmem:[#allocation3] sm:$0xf] %vm869, %v867
        %v871 = vld [vmem:[#allocation2] sm:$0xf]
        %v873 = vunpack.c.l.b16 %v871
        %v874 = vpack.c.b16 %v873, %v873
        %875 = vrot.lane.b32.xlu0 %v874, 112
        %v876 = vpop.permute.xlu0 %875
        %877 = vrot.lane.b32.xlu0 %v874, 80
        %v878 = vpop.permute.xlu0 %877
        %v880 = vsel %vm637, %v876, 0
        %v883 = vsel %vm637, %v878, 0
        %885 = vmatprep.subr.bf16.mxu0 0
        %886 = vmatpush1.bf16.xpose.msra.mxu0 0
        %887 = vmatprep.subr.bf16.mxu0 0
        %888 = vmatpush1.bf16.xpose.msra.mxu0 0
        %889 = vmatprep.subr.bf16.mxu0 0
        %890 = vmatpush1.bf16.xpose.msra.mxu0 0
        %891 = vmatprep.subr.bf16.mxu0 0
        %892 = vmatpush1.bf16.xpose.msra.mxu0 0
        %893 = vmatprep.subr.bf16.mxu0 0
        %894 = vmatpush1.bf16.xpose.msra.mxu0 0
        %895 = vmatprep.subr.bf16.mxu0 0
        %896 = vmatpush1.bf16.xpose.msra.mxu0 0
        %897 = vmatprep.subr.bf16.mxu0 0
        %898 = vmatpush1.bf16.xpose.msra.mxu0 0
        %899 = vmatprep.subr.bf16.mxu0 0
        %900 = vmatpush1.bf16.xpose.msra.mxu0 %v883
        %901 = vmatprep.subr.bf16.mxu0 0
        %902 = vmatpush2.bf16.xpose.msra.mxu0 0
        %903 = vmatprep.subr.bf16.mxu0 0
        %904 = vmatpush2.bf16.xpose.msra.mxu0 0
        %905 = vmatprep.subr.bf16.mxu0 0
        %906 = vmatpush2.bf16.xpose.msra.mxu0 0
        %907 = vmatprep.subr.bf16.mxu0 0
        %908 = vmatpush2.bf16.xpose.msra.mxu0 0
        %909 = vmatprep.subr.bf16.mxu0 0
        %910 = vmatpush2.bf16.xpose.msra.mxu0 0
        %911 = vmatprep.subr.bf16.mxu0 0
        %912 = vmatpush2.bf16.xpose.msra.mxu0 0
        %913 = vmatprep.subr.bf16.mxu0 0
        %914 = vmatpush2.bf16.xpose.msra.mxu0 0
        %915 = vmatprep.subr.bf16.mxu0 0
        %916 = vmatpush2.bf16.xpose.msra.mxu0 0
        %917 = vmatprep.mubr.bf16.mxu0 0
        %918 = vmatmul.mubr.bf16.gmra.mxu0 %v880
        %v919 = vpop.f32.mrf.mxu0
        %v920 = vadd.f32 %v630, %v919
        %v921 = vpop.f32.mrf.mxu0
        %v922 = vpop.f32.mrf.mxu0
        %v923 = vpop.f32.mrf.mxu0
        %924 = vdwg.mxu0
        %v925 = vsel %vm637, %v920, -inf
        %926 = vmax.xlane.f32.xlu0 %v925
        %v927 = vpop.xlane.xlu0 %926
        %v928 = vsub.f32 %v920, %v927
        %v929 = vmul.f32 %v928, 1.442695
        %v930 = vpow.pop %v929
        %v931 = vsel %vm637, %v930, 0.0
        %932 = vadd.xlane.f32.xlu0 %v931
        %v933 = vpop.xlane.xlu0 %932
        %v934 = vrcp.pop %v933
        %v935 = vmul.f32 %v930, %v934
        %v936 = vpack.c.bf16 %v935, %v935
        %937 = vrot.lane.b32.xlu0 %v874, 48
        %v938 = vpop.permute.xlu0 %937
        %v940 = vsel %vm637, %v936, 0
        %v943 = vsel %vm701, %v938, 0
        %945 = vmatprep.subr.bf16.mxu0 0
        %946 = vmatpush1.bf16.msra.mxu0 0
        %947 = vmatprep.subr.bf16.mxu0 0
        %948 = vmatpush1.bf16.msra.mxu0 0
        %949 = vmatprep.subr.bf16.mxu0 0
        %950 = vmatpush1.bf16.msra.mxu0 0
        %951 = vmatprep.subr.bf16.mxu0 0
        %952 = vmatpush1.bf16.msra.mxu0 0
        %953 = vmatprep.subr.bf16.mxu0 0
        %954 = vmatpush1.bf16.msra.mxu0 0
        %955 = vmatprep.subr.bf16.mxu0 0
        %956 = vmatpush1.bf16.msra.mxu0 0
        %957 = vmatprep.subr.bf16.mxu0 0
        %958 = vmatpush1.bf16.msra.mxu0 0
        %959 = vmatprep.subr.bf16.mxu0 0
        %960 = vmatpush1.bf16.msra.mxu0 %v943
        %961 = vmatprep.subr.bf16.mxu0 0
        %962 = vmatpush2.bf16.msra.mxu0 0
        %963 = vmatprep.subr.bf16.mxu0 0
        %964 = vmatpush2.bf16.msra.mxu0 0
        %965 = vmatprep.subr.bf16.mxu0 0
        %966 = vmatpush2.bf16.msra.mxu0 0
        %967 = vmatprep.subr.bf16.mxu0 0
        %968 = vmatpush2.bf16.msra.mxu0 0
        %969 = vmatprep.subr.bf16.mxu0 0
        %970 = vmatpush2.bf16.msra.mxu0 0
        %971 = vmatprep.subr.bf16.mxu0 0
        %972 = vmatpush2.bf16.msra.mxu0 0
        %973 = vmatprep.subr.bf16.mxu0 0
        %974 = vmatpush2.bf16.msra.mxu0 0
        %975 = vmatprep.subr.bf16.mxu0 0
        %976 = vmatpush2.bf16.msra.mxu0 0
        %977 = vmatprep.mubr.bf16.mxu0 0
        %978 = vmatmul.mubr.bf16.gmra.mxu0 %v940
        %v979 = vpop.f32.mrf.mxu0
        %v980 = vadd.f32 0.0, %v979
        %v981 = vpop.f32.mrf.mxu0
        %v982 = vpop.f32.mrf.mxu0
        %v983 = vpop.f32.mrf.mxu0
        %984 = vdwg.mxu0
        %v985 = vpack.c.bf16 %v980, %v980
        %v987 = vunpack.c.l.b16 %v985
        %v988 = vpack.c.b16 %v987, %v987
        %989 = vrot.lane.b32.xlu0 %v988, 16
        %v990 = vpop.permute.xlu0 %989
        %vm992 = vcmask 191616
        %993 = vst.msk [vmem:[#allocation3] sm:$0xf] %vm992, %v990
        %v994 = vld [vmem:[#allocation2] sm:$0xf]
        %v996 = vunpack.c.l.b16 %v994
        %v997 = vpack.c.b16 %v996, %v996
        %998 = vrot.lane.b32.xlu0 %v997, 104
        %v999 = vpop.permute.xlu0 %998
        %1000 = vrot.lane.b32.xlu0 %v997, 72
        %v1001 = vpop.permute.xlu0 %1000
        %v1003 = vsel %vm637, %v999, 0
        %v1006 = vsel %vm637, %v1001, 0
        %1008 = vmatprep.subr.bf16.mxu0 0
        %1009 = vmatpush1.bf16.xpose.msra.mxu0 0
        %1010 = vmatprep.subr.bf16.mxu0 0
        %1011 = vmatpush1.bf16.xpose.msra.mxu0 0
        %1012 = vmatprep.subr.bf16.mxu0 0
        %1013 = vmatpush1.bf16.xpose.msra.mxu0 0
        %1014 = vmatprep.subr.bf16.mxu0 0
        %1015 = vmatpush1.bf16.xpose.msra.mxu0 0
        %1016 = vmatprep.subr.bf16.mxu0 0
        %1017 = vmatpush1.bf16.xpose.msra.mxu0 0
        %1018 = vmatprep.subr.bf16.mxu0 0
        %1019 = vmatpush1.bf16.xpose.msra.mxu0 0
        %1020 = vmatprep.subr.bf16.mxu0 0
        %1021 = vmatpush1.bf16.xpose.msra.mxu0 0
        %1022 = vmatprep.subr.bf16.mxu0 0
        %1023 = vmatpush1.bf16.xpose.msra.mxu0 %v1006
        %1024 = vmatprep.subr.bf16.mxu0 0
        %1025 = vmatpush2.bf16.xpose.msra.mxu0 0
        %1026 = vmatprep.subr.bf16.mxu0 0
        %1027 = vmatpush2.bf16.xpose.msra.mxu0 0
        %1028 = vmatprep.subr.bf16.mxu0 0
        %1029 = vmatpush2.bf16.xpose.msra.mxu0 0
        %1030 = vmatprep.subr.bf16.mxu0 0
        %1031 = vmatpush2.bf16.xpose.msra.mxu0 0
        %1032 = vmatprep.subr.bf16.mxu0 0
        %1033 = vmatpush2.bf16.xpose.msra.mxu0 0
        %1034 = vmatprep.subr.bf16.mxu0 0
        %1035 = vmatpush2.bf16.xpose.msra.mxu0 0
        %1036 = vmatprep.subr.bf16.mxu0 0
        %1037 = vmatpush2.bf16.xpose.msra.mxu0 0
        %1038 = vmatprep.subr.bf16.mxu0 0
        %1039 = vmatpush2.bf16.xpose.msra.mxu0 0
        %1040 = vmatprep.mubr.bf16.mxu0 0
        %1041 = vmatmul.mubr.bf16.gmra.mxu0 %v1003
        %v1042 = vpop.f32.mrf.mxu0
        %v1043 = vadd.f32 %v630, %v1042
        %v1044 = vpop.f32.mrf.mxu0
        %v1045 = vpop.f32.mrf.mxu0
        %v1046 = vpop.f32.mrf.mxu0
        %1047 = vdwg.mxu0
        %v1048 = vsel %vm637, %v1043, -inf
        %1049 = vmax.xlane.f32.xlu0 %v1048
        %v1050 = vpop.xlane.xlu0 %1049
        %v1051 = vsub.f32 %v1043, %v1050
        %v1052 = vmul.f32 %v1051, 1.442695
        %v1053 = vpow.pop %v1052
        %v1054 = vsel %vm637, %v1053, 0.0
        %1055 = vadd.xlane.f32.xlu0 %v1054
        %v1056 = vpop.xlane.xlu0 %1055
        %v1057 = vrcp.pop %v1056
        %v1058 = vmul.f32 %v1053, %v1057
        %v1059 = vpack.c.bf16 %v1058, %v1058
        %1060 = vrot.lane.b32.xlu0 %v997, 40
        %v1061 = vpop.permute.xlu0 %1060
        %v1063 = vsel %vm637, %v1059, 0
        %v1066 = vsel %vm701, %v1061, 0
        %1068 = vmatprep.subr.bf16.mxu0 0
        %1069 = vmatpush1.bf16.msra.mxu0 0
        %1070 = vmatprep.subr.bf16.mxu0 0
        %1071 = vmatpush1.bf16.msra.mxu0 0
        %1072 = vmatprep.subr.bf16.mxu0 0
        %1073 = vmatpush1.bf16.msra.mxu0 0
        %1074 = vmatprep.subr.bf16.mxu0 0
        %1075 = vmatpush1.bf16.msra.mxu0 0
        %1076 = vmatprep.subr.bf16.mxu0 0
        %1077 = vmatpush1.bf16.msra.mxu0 0
        %1078 = vmatprep.subr.bf16.mxu0 0
        %1079 = vmatpush1.bf16.msra.mxu0 0
        %1080 = vmatprep.subr.bf16.mxu0 0
        %1081 = vmatpush1.bf16.msra.mxu0 0
        %1082 = vmatprep.subr.bf16.mxu0 0
        %1083 = vmatpush1.bf16.msra.mxu0 %v1066
        %1084 = vmatprep.subr.bf16.mxu0 0
        %1085 = vmatpush2.bf16.msra.mxu0 0
        %1086 = vmatprep.subr.bf16.mxu0 0
        %1087 = vmatpush2.bf16.msra.mxu0 0
        %1088 = vmatprep.subr.bf16.mxu0 0
        %1089 = vmatpush2.bf16.msra.mxu0 0
        %1090 = vmatprep.subr.bf16.mxu0 0
        %1091 = vmatpush2.bf16.msra.mxu0 0
        %1092 = vmatprep.subr.bf16.mxu0 0
        %1093 = vmatpush2.bf16.msra.mxu0 0
        %1094 = vmatprep.subr.bf16.mxu0 0
        %1095 = vmatpush2.bf16.msra.mxu0 0
        %1096 = vmatprep.subr.bf16.mxu0 0
        %1097 = vmatpush2.bf16.msra.mxu0 0
        %1098 = vmatprep.subr.bf16.mxu0 0
        %1099 = vmatpush2.bf16.msra.mxu0 0
        %1100 = vmatprep.mubr.bf16.mxu0 0
        %1101 = vmatmul.mubr.bf16.gmra.mxu0 %v1063
        %v1102 = vpop.f32.mrf.mxu0
        %v1103 = vadd.f32 0.0, %v1102
        %v1104 = vpop.f32.mrf.mxu0
        %v1105 = vpop.f32.mrf.mxu0
        %v1106 = vpop.f32.mrf.mxu0
        %1107 = vdwg.mxu0
        %v1108 = vpack.c.bf16 %v1103, %v1103
        %v1110 = vunpack.c.l.b16 %v1108
        %v1111 = vpack.c.b16 %v1110, %v1110
        %1112 = vrot.lane.b32.xlu0 %v1111, 24
        %v1113 = vpop.permute.xlu0 %1112
        %vm1115 = vcmask 257216
        %1116 = vst.msk [vmem:[#allocation3] sm:$0xf] %vm1115, %v1113
        %v1117 = vld [vmem:[#allocation3] sm:$0xf]
        %v1118 = vld [vmem:[%s4] sm:$0xf]
        %v1119 = vld [vmem:[%s4 + $0x4] sm:$0xf]
        %v1120 = vld [vmem:[%s4 + $0x8] sm:$0xf]
        %v1121 = vld [vmem:[%s4 + $0xc] sm:$0xf]
        %v1122 = vld [vmem:[%s5] sm:$0x1]
        %v1124 = vlaneseq
        %v1125 = vshrl.u32 %v1124, 7
        %v1126 = vsub.s32 0, %v1125
        %v1127 = vrot.slane %v1122, %v1126
        %v1133 = vunpack.c.l.b16 %v1118
        %v1134 = vunpack.c.l.b16 %v1119
        %v1135 = vunpack.c.l.b16 %v1120
        %v1136 = vunpack.c.l.b16 %v1121
        %v1137 = vpack.c.b16 %v1134, %v1133
        %v1138 = vpack.c.b16 %v1136, %v1135
        %v1142 = vsel %vm575, %v1117, 0
        %1144 = vmatprep.subr.bf16.mxu0 0
        %1145 = vmatpush1.bf16.msra.mxu0 0
        %1146 = vmatprep.subr.bf16.mxu0 0
        %1147 = vmatpush1.bf16.msra.mxu0 0
        %1148 = vmatprep.subr.bf16.mxu0 0
        %1149 = vmatpush1.bf16.msra.mxu0 0
        %1150 = vmatprep.subr.bf16.mxu0 0
        %1151 = vmatpush1.bf16.msra.mxu0 0
        %1152 = vmatprep.subr.bf16.mxu0 0
        %1153 = vmatpush1.bf16.msra.mxu0 0
        %1154 = vmatprep.subr.bf16.mxu0 0
        %1155 = vmatpush1.bf16.msra.mxu0 0
        %1156 = vmatprep.subr.bf16.mxu0 0
        %1157 = vmatpush1.bf16.msra.mxu0 %v1138
        %1158 = vmatprep.subr.bf16.mxu0 0
        %1159 = vmatpush1.bf16.msra.mxu0 %v1137
        %1160 = vmatprep.subr.bf16.mxu0 0
        %1161 = vmatpush2.bf16.msra.mxu0 0
        %1162 = vmatprep.subr.bf16.mxu0 0
        %1163 = vmatpush2.bf16.msra.mxu0 0
        %1164 = vmatprep.subr.bf16.mxu0 0
        %1165 = vmatpush2.bf16.msra.mxu0 0
        %1166 = vmatprep.subr.bf16.mxu0 0
        %1167 = vmatpush2.bf16.msra.mxu0 0
        %1168 = vmatprep.subr.bf16.mxu0 0
        %1169 = vmatpush2.bf16.msra.mxu0 0
        %1170 = vmatprep.subr.bf16.mxu0 0
        %1171 = vmatpush2.bf16.msra.mxu0 0
        %1172 = vmatprep.subr.bf16.mxu0 0
        %1173 = vmatpush2.bf16.msra.mxu0 0
        %1174 = vmatprep.subr.bf16.mxu0 0
        %1175 = vmatpush2.bf16.msra.mxu0 0
        %1176 = vmatprep.mubr.bf16.mxu0 0
        %1177 = vmatmul.mubr.bf16.gmra.mxu0 %v1142
        %v1178 = vpop.f32.mrf.mxu0
        %v1179 = vadd.f32 %v1127, %v1178
        %v1180 = vpop.f32.mrf.mxu0
        %v1181 = vpop.f32.mrf.mxu0
        %v1182 = vpop.f32.mrf.mxu0
        %1183 = vdwg.mxu0
        %v1184 = vadd.f32 %v1179, %v550
        %v1185 = vld [vmem:[#allocation7] sm:$0x1]
        %v1186 = vld [vmem:[#allocation9] sm:$0x1]
        %v1187 = vsel %vm575, %v1184, 0.0
        %1188 = vadd.xlane.f32.xlu0 %v1187
        %v1189 = vpop.xlane.xlu0 %1188
        %v1190 = vrcp.pop 32.0
        %v1191 = vmul.f32 %v1189, %v1190
        %v1192 = vsub.f32 %v1184, %v1191
        %v1193 = vmul.f32 %v1192, %v1192
        %v1194 = vsel %vm575, %v1193, 0.0
        %1195 = vadd.xlane.f32.xlu0 %v1194
        %v1196 = vpop.xlane.xlu0 %1195
        %v1197 = vmul.f32 %v1196, %v1190
        %v1198 = vadd.f32 %v1197, 1e-05
        %v1199 = vrsqrt.pop %v1198
        %v1200 = vmul.f32 %v1192, %v1199
        %v1202 = vlaneseq
        %v1203 = vshrl.u32 %v1202, 7
        %v1204 = vsub.s32 0, %v1203
        %v1205 = vrot.slane %v1185, %v1204
        %v1207 = vmul.f32 %v1200, %v1205
        %v1209 = vlaneseq
        %v1210 = vshrl.u32 %v1209, 7
        %v1211 = vsub.s32 0, %v1210
        %v1212 = vrot.slane %v1186, %v1211
        %v1214 = vadd.f32 %v1207, %v1212
        %v1215 = vpack.c.bf16 %v1214, %v1214
        %v1216 = vld [vmem:[#allocation10] sm:$0xf]
        %v1217 = vld [vmem:[#allocation10 + $0x4] sm:$0xf]
        %v1218 = vld [vmem:[#allocation10 + $0x8] sm:$0xf]
        %v1219 = vld [vmem:[#allocation10 + $0xc] sm:$0xf]
        %v1220 = vld [vmem:[#allocation12] sm:$0x1]
        %v1222 = vlaneseq
        %v1223 = vshrl.u32 %v1222, 7
        %v1224 = vsub.s32 0, %v1223
        %v1225 = vrot.slane %v1220, %v1224
        %v1231 = vunpack.c.l.b16 %v1216
        %v1232 = vunpack.c.l.b16 %v1217
        %v1233 = vunpack.c.l.b16 %v1218
        %v1234 = vunpack.c.l.b16 %v1219
        %v1235 = vpack.c.b16 %v1232, %v1231
        %v1236 = vpack.c.b16 %v1234, %v1233
        %v1240 = vsel %vm575, %v1215, 0
        %1242 = vmatprep.subr.bf16.mxu0 0
        %1243 = vmatpush1.bf16.msra.mxu0 0
        %1244 = vmatprep.subr.bf16.mxu0 0
        %1245 = vmatpush1.bf16.msra.mxu0 0
        %1246 = vmatprep.subr.bf16.mxu0 0
        %1247 = vmatpush1.bf16.msra.mxu0 0
        %1248 = vmatprep.subr.bf16.mxu0 0
        %1249 = vmatpush1.bf16.msra.mxu0 0
        %1250 = vmatprep.subr.bf16.mxu0 0
        %1251 = vmatpush1.bf16.msra.mxu0 0
        %1252 = vmatprep.subr.bf16.mxu0 0
        %1253 = vmatpush1.bf16.msra.mxu0 0
        %1254 = vmatprep.subr.bf16.mxu0 0
        %1255 = vmatpush1.bf16.msra.mxu0 %v1236
        %1256 = vmatprep.subr.bf16.mxu0 0
        %1257 = vmatpush1.bf16.msra.mxu0 %v1235
        %1258 = vmatprep.subr.bf16.mxu0 0
        %1259 = vmatpush2.bf16.msra.mxu0 0
        %1260 = vmatprep.subr.bf16.mxu0 0
        %1261 = vmatpush2.bf16.msra.mxu0 0
        %1262 = vmatprep.subr.bf16.mxu0 0
        %1263 = vmatpush2.bf16.msra.mxu0 0
        %1264 = vmatprep.subr.bf16.mxu0 0
        %1265 = vmatpush2.bf16.msra.mxu0 0
        %1266 = vmatprep.subr.bf16.mxu0 0
        %1267 = vmatpush2.bf16.msra.mxu0 0
        %1268 = vmatprep.subr.bf16.mxu0 0
        %1269 = vmatpush2.bf16.msra.mxu0 0
        %1270 = vmatprep.subr.bf16.mxu0 0
        %1271 = vmatpush2.bf16.msra.mxu0 0
        %1272 = vmatprep.subr.bf16.mxu0 0
        %1273 = vmatpush2.bf16.msra.mxu0 0
        %1274 = vmatprep.mubr.bf16.mxu0 0
        %1275 = vmatmul.mubr.bf16.gmra.mxu0 %v1240
        %v1276 = vpop.f32.mrf.mxu0
        %v1277 = vadd.f32 %v1225, %v1276
        %v1278 = vpop.f32.mrf.mxu0
        %v1279 = vpop.f32.mrf.mxu0
        %v1280 = vpop.f32.mrf.mxu0
        %1281 = vdwg.mxu0
        %v1282 = vmax.f32 %v1277, 0.0
        %v1283 = vpack.c.bf16 %v1282, %v1282
        %v1284 = vld [vmem:[%s10] sm:$0xf]
        %v1285 = vld [vmem:[%s10 + $0x4] sm:$0xf]
        %v1286 = vld [vmem:[%s10 + $0x8] sm:$0xf]
        %v1287 = vld [vmem:[%s10 + $0xc] sm:$0xf]
        %v1288 = vld [vmem:[%s10 + $0x10] sm:$0xf]
        %v1289 = vld [vmem:[%s10 + $0x14] sm:$0xf]
        %v1290 = vld [vmem:[%s10 + $0x18] sm:$0xf]
        %v1291 = vld [vmem:[%s10 + $0x1c] sm:$0xf]
        %v1292 = vld [vmem:[%s11] sm:$0x1]
        %v1294 = vlaneseq
        %v1295 = vshrl.u32 %v1294, 7
        %v1296 = vsub.s32 0, %v1295
        %v1297 = vrot.slane %v1292, %v1296
        %v1307 = vunpack.c.l.b16 %v1284
        %v1308 = vunpack.c.l.b16 %v1285
        %v1309 = vunpack.c.l.b16 %v1286
        %v1310 = vunpack.c.l.b16 %v1287
        %v1311 = vunpack.c.l.b16 %v1288
        %v1312 = vunpack.c.l.b16 %v1289
        %v1313 = vunpack.c.l.b16 %v1290
        %v1314 = vunpack.c.l.b16 %v1291
        %v1315 = vpack.c.b16 %v1308, %v1307
        %v1316 = vpack.c.b16 %v1310, %v1309
        %v1317 = vpack.c.b16 %v1312, %v1311
        %v1318 = vpack.c.b16 %v1314, %v1313
        %vm1323 = vcmask 523264
        %v1325 = vsel %vm1323, %v1283, 0
        %1327 = vmatprep.subr.bf16.mxu0 0
        %1328 = vmatpush1.bf16.msra.mxu0 0
        %1329 = vmatprep.subr.bf16.mxu0 0
        %1330 = vmatpush1.bf16.msra.mxu0 0
        %1331 = vmatprep.subr.bf16.mxu0 0
        %1332 = vmatpush1.bf16.msra.mxu0 0
        %1333 = vmatprep.subr.bf16.mxu0 0
        %1334 = vmatpush1.bf16.msra.mxu0 0
        %1335 = vmatprep.subr.bf16.mxu0 0
        %1336 = vmatpush1.bf16.msra.mxu0 %v1318
        %1337 = vmatprep.subr.bf16.mxu0 0
        %1338 = vmatpush1.bf16.msra.mxu0 %v1317
        %1339 = vmatprep.subr.bf16.mxu0 0
        %1340 = vmatpush1.bf16.msra.mxu0 %v1316
        %1341 = vmatprep.subr.bf16.mxu0 0
        %1342 = vmatpush1.bf16.msra.mxu0 %v1315
        %1343 = vmatprep.subr.bf16.mxu0 0
        %1344 = vmatpush2.bf16.msra.mxu0 0
        %1345 = vmatprep.subr.bf16.mxu0 0
        %1346 = vmatpush2.bf16.msra.mxu0 0
        %1347 = vmatprep.subr.bf16.mxu0 0
        %1348 = vmatpush2.bf16.msra.mxu0 0
        %1349 = vmatprep.subr.bf16.mxu0 0
        %1350 = vmatpush2.bf16.msra.mxu0 0
        %1351 = vmatprep.subr.bf16.mxu0 0
        %1352 = vmatpush2.bf16.msra.mxu0 0
        %1353 = vmatprep.subr.bf16.mxu0 0
        %1354 = vmatpush2.bf16.msra.mxu0 0
        %1355 = vmatprep.subr.bf16.mxu0 0
        %1356 = vmatpush2.bf16.msra.mxu0 0
        %1357 = vmatprep.subr.bf16.mxu0 0
        %1358 = vmatpush2.bf16.msra.mxu0 0
        %1359 = vmatprep.mubr.bf16.mxu0 0
        %1360 = vmatmul.mubr.bf16.gmra.mxu0 %v1325
        %v1361 = vpop.f32.mrf.mxu0
        %v1362 = vadd.f32 %v1297, %v1361
        %v1363 = vpop.f32.mrf.mxu0
        %v1364 = vpop.f32.mrf.mxu0
        %v1365 = vpop.f32.mrf.mxu0
        %1366 = vdwg.mxu0
        %v1367 = vadd.f32 %v1362, %v1214
        %v1368 = vld [vmem:[%s12] sm:$0x1]
        %v1369 = vld [vmem:[%s13] sm:$0x1]
        %v1370 = vsel %vm575, %v1367, 0.0
        %1371 = vadd.xlane.f32.xlu0 %v1370
        %v1372 = vpop.xlane.xlu0 %1371
        %v1373 = vmul.f32 %v1372, %v1190
        %v1374 = vsub.f32 %v1367, %v1373
        %v1375 = vmul.f32 %v1374, %v1374
        %v1376 = vsel %vm575, %v1375, 0.0
        %1377 = vadd.xlane.f32.xlu0 %v1376
        %v1378 = vpop.xlane.xlu0 %1377
        %v1379 = vmul.f32 %v1378, %v1190
        %v1380 = vadd.f32 %v1379, 1e-05
        %v1381 = vrsqrt.pop %v1380
        %v1382 = vmul.f32 %v1374, %v1381
        %v1384 = vlaneseq
        %v1385 = vshrl.u32 %v1384, 7
        %v1386 = vsub.s32 0, %v1385
        %v1387 = vrot.slane %v1368, %v1386
        %v1389 = vmul.f32 %v1382, %v1387
        %v1391 = vlaneseq
        %v1392 = vshrl.u32 %v1391, 7
        %v1393 = vsub.s32 0, %v1392
        %v1394 = vrot.slane %v1369, %v1393
        %v1396 = vadd.f32 %v1389, %v1394
        %1397 = vst.msk [vmem:[%s544] sm:$0xff] %vm575, %v1396
        %s1398 = sand.u32 %s345, 1
        %s1399 = scalar_lea.sflag [#allocation6], %s1398
        %s1400 = sand.u32 %s345, 1
        %s1401 = smul.addr %s1400, 8
        %s1402 = scalar_lea.vmem [#allocation13], %s1401
        // Predicated region
        $region97: #{tpu_custom_call.1} parent=75 // pred_check
          %p1403 = pneg %p355
        $region98: #{tpu_custom_call.1} parent=75 // pred_check_branch
          %1405 = sbr.rel (%p1403) target = $region100
        $region99: #{tpu_custom_call.1} parent=75 // pred_region
          %s1407 = ssub.s32 128, 128
          %1408 = vsyncadd %s1399, %s1407
          %s1409 = smul.addr %s33, 128
          %s1410 = scalar_lea.hbm %s14, %s1409
          %s1412 = sshll.u32 %s1402, 4
          %s1413 = int_to_ptr.vmem [resolvable:$true] %s1412
          %1415 = dma.vmem_to_hbm [thread:$0]  %s1413, 128, %s1410, %s1399
        $region100: #{tpu_custom_call.1} parent=75 // pred_fallthru
          _
      $region76: #{tpu_custom_call.1} parent=5 // pred_fallthru
        _
      %p1416 = scmp.le.s32.totalorder 2, %s28
      // Predicated region
      $region101: #{tpu_custom_call.1} parent=5 // pred_check
        %p1417 = pneg %p1416
      $region102: #{tpu_custom_call.1} parent=5 // pred_check_branch
        %1419 = sbr.rel (%p1417) target = $region104
      $region103: #{tpu_custom_call.1} parent=5 // pred_region
        %s1420 = ssub.s32 %s28, 2
        // Predicated region
        $region105: #{tpu_custom_call.1} parent=103 // pred_check
          %p1421 = pneg %p361
        $region106: #{tpu_custom_call.1} parent=103 // pred_check_branch
          %1423 = sbr.rel (%p1421) target = $region108
        $region107: #{tpu_custom_call.1} parent=103 // pred_region
          %s1424 = sand.u32 %s346, 1
          %s1425 = scalar_lea.sflag [#allocation6], %s1424
          %s1426 = sand.u32 %s346, 1
          %s1427 = smul.addr %s1426, 8
          %s1428 = scalar_lea.vmem [#allocation13], %s1427
          %1429 = dma.done %s1425, 128
        $region108: #{tpu_custom_call.1} parent=103 // pred_fallthru
          _
      $region104: #{tpu_custom_call.1} parent=5 // pred_fallthru
        _
    $region6: #{tpu_custom_call.1} parent=1 // loop_footer
      %s32 = sadd.s32 1, %s28
    $region7: #{tpu_custom_call.1} parent=1 // loop_footer_branch
      %27 = sbr.rel target = $region3
    $region8: #{tpu_custom_call.1} parent=1 // loop_exit
      _
    %1430 = vsyncpa [#allocation5], 1
    %s1431 = scalar_lea.sflag [#allocation5], 1
    %1432 = vsyncpa %s1431, 1
    %1433 = vsyncpa [#allocation8], 1
    %1434 = vsyncpa [#allocation11], 1
    %1435 = vsyncpa [#allocation6], 1
    %s1436 = scalar_lea.sflag [#allocation6], 1
    %1437 = vsyncpa %s1436, 1

</llo_original>
